<compile_context>
chip_gen: v6e
topology: v6e:2x2x1
jax: 0.10.0
libtpu: 0.0.40
codegen_flags: <defaults>
</compile_context>

<pallas_src>
import jax
import jax.numpy as jnp
from jax.experimental import pallas as pl
from jax.experimental.pallas import tpu as pltpu

# ---------------- small, self-consistent config ----------------
INPUT_RES  = 16          # input_resolution
PATCH      = 8           # patch_size
WIDTH      = 32          # width (d_model)
LAYERS     = 2           # transformer layers
HEADS      = 4           # attention heads
OUTPUT_DIM = 16          # output_dim
BATCH      = 2

GRID_HW     = INPUT_RES // PATCH          # 2
NUM_PATCHES = GRID_HW * GRID_HW           # 4
SEQ         = NUM_PATCHES + 1             # 5  (cls token + patches)
HEAD_DIM    = WIDTH // HEADS              # 8
PATCH_FLAT  = 3 * PATCH * PATCH           # 192
N_TOK       = BATCH * SEQ                 # 10
OUT_PAD     = 128                         # lane-dense padded output width

EPS   = 1e-6            # LayerNorm eps
ETA   = 0.1             # OvercompleteISTABlock eta
LMBDA = 0.1             # OvercompleteISTABlock lambda


# ---------------- kernel helpers ----------------
def _layernorm(v, g, b):
    # LayerNorm computed in float32 (matches the torch LayerNorm subclass).
    v = v.astype(jnp.float32)
    mu = jnp.mean(v, axis=-1, keepdims=True)
    var = jnp.mean(jnp.square(v - mu), axis=-1, keepdims=True)
    return (v - mu) * jax.lax.rsqrt(var + EPS) * g + b


# ---------------- the single fused, layer-gridded kernel ----------------
def _vit_kernel(patches_ref, w_patch_t_ref, embed_ref,
                ln1_g_ref, ln1_b_ref, wqkv_t_ref, wout_h_ref,
                ln2_g_ref, ln2_b_ref, cfc_ref, cfc_t_ref, cproj_t_ref,
                lnp_g_ref, lnp_b_ref, proj_ref,
                out_ref, x_ref):
    l = pl.program_id(0)
    scale = HEAD_DIM ** -0.5

    # ---- first grid step: patch embedding + (cls + pos) broadcast add ----
    @pl.when(l == 0)
    def _init():
        pe = jnp.dot(patches_ref[...], w_patch_t_ref[...],
                     preferred_element_type=jnp.float32)            # (N, D) f32
        x0 = pe.reshape(BATCH, SEQ, WIDTH) + embed_ref[...][None]   # broadcast over batch
        x_ref[...] = x0.reshape(N_TOK, WIDTH)

    x = x_ref[...]                                                  # (N, D) f32 residual

    # Per-layer weight views (leading block dim of 1 -> cheap ref indexing).
    g1 = ln1_g_ref[0]; b1 = ln1_b_ref[0]                            # (1, D)
    g2 = ln2_g_ref[0]; b2 = ln2_b_ref[0]
    wqkv   = wqkv_t_ref[0]                                          # (D, 3D)   bf16
    wout   = wout_h_ref[0]                                          # (H, hd, D) bf16
    cfc    = cfc_ref[0]                                             # (D, 4D)   bf16
    cfct   = cfc_t_ref[0]                                           # (4D, D)   bf16
    cprojt = cproj_t_ref[0]                                         # (4D, D)   bf16

    # ---- attention branch: x = x + MHA(ln_1(x)), all heads batched ----
    xn = _layernorm(x, g1, b1)                                      # (N, D) f32
    qkv = jnp.dot(xn.astype(jnp.bfloat16), wqkv,
                  preferred_element_type=jnp.float32)               # (N, 3D), one MXU op
    qkv3 = qkv.reshape(BATCH, SEQ, 3 * WIDTH)                       # (B, L, 3D)

    # Merge heads into a single leading batch dim G = H*B (g = h*B + b).
    def _split_heads(base):
        return jnp.concatenate(
            [qkv3[:, :, base + h * HEAD_DIM: base + (h + 1) * HEAD_DIM]
             for h in range(HEADS)], axis=0)                        # (G, L, hd)

    q = _split_heads(0)
    k = _split_heads(WIDTH)
    v = _split_heads(2 * WIDTH)

    s = jnp.einsum("gqd,gkd->gqk",
                   q.astype(jnp.bfloat16), k.astype(jnp.bfloat16),
                   preferred_element_type=jnp.float32) * scale      # (G, L, L) f32
    m = jnp.max(s, axis=-1, keepdims=True)
    e = jnp.exp(s - m)
    p = e * pl.reciprocal(jnp.sum(e, axis=-1, keepdims=True), approx=True)
    o = jnp.einsum("gqk,gkd->gqd",
                   p.astype(jnp.bfloat16), v.astype(jnp.bfloat16),
                   preferred_element_type=jnp.float32)              # (G, L, hd) f32

    # Output projection: one batched per-head matmul, then a 3-add VPU tree
    # (no serial accumulating MXU chain, no concat of head results).
    o_h = o.reshape(HEADS, N_TOK, HEAD_DIM)                         # (H, N, hd)
    y_h = jnp.einsum("hnd,hdk->hnk",
                     o_h.astype(jnp.bfloat16), wout,
                     preferred_element_type=jnp.float32)            # (H, N, D)
    y = y_h[0]
    for h in range(1, HEADS):                                       # cheap VPU adds
        y = y + y_h[h]
    x = x + y

    # ---- MLP branch: x = x + OvercompleteISTABlock(ln_2(x)) ----
    xn2 = _layernorm(x, g2, b2)                                     # (N, D) f32
    xn2b = xn2.astype(jnp.bfloat16)
    ng  = jnp.dot(xn2b, cfc, preferred_element_type=jnp.float32)    # (N, 4D)
    z1  = jax.nn.relu(ETA * ng - ETA * LMBDA)
    dz1 = jnp.dot(z1.astype(jnp.bfloat16), cfct,
                  preferred_element_type=jnp.float32)               # (N, D)
    lg  = jnp.dot((dz1 - xn2).astype(jnp.bfloat16), cfc,
                  preferred_element_type=jnp.float32)               # (N, 4D)
    z2  = jax.nn.relu(z1 - ETA * lg - ETA * LMBDA)
    xhat = jnp.dot(z2.astype(jnp.bfloat16), cprojt,
                   preferred_element_type=jnp.float32)              # (N, D)
    x = x + xhat

    x_ref[...] = x                                                  # carry residual stream

    # ---- last grid step: cls readout, ln_post, lane-dense projection ----
    @pl.when(l == LAYERS - 1)
    def _final():
        cls_tok = x.reshape(BATCH, SEQ, WIDTH)[:, 0, :]             # (B, D)
        xo = _layernorm(cls_tok, lnp_g_ref[...], lnp_b_ref[...])
        out_ref[...] = jnp.dot(xo.astype(jnp.bfloat16), proj_ref[...],
                               preferred_element_type=jnp.float32
                               ).astype(out_ref.dtype)              # (B, 128) unmasked vst


# ---------------- parameters ----------------
def init_params(key):
    ks = jax.random.split(key, 5 + LAYERS)
    params = {
        "conv_w": jax.random.normal(ks[0], (WIDTH, 3, PATCH, PATCH), jnp.float32) * 0.05,
        "cls":    jax.random.normal(ks[1], (WIDTH,), jnp.float32) * 0.05,
        "pos":    jax.random.normal(ks[2], (SEQ, WIDTH), jnp.float32) * 0.05,
        "ln_post_g": jnp.ones((1, WIDTH), jnp.float32),
        "ln_post_b": jnp.zeros((1, WIDTH), jnp.float32),
        "proj":   jax.random.normal(ks[3], (WIDTH, OUTPUT_DIM), jnp.float32) * (WIDTH ** -0.5),
        "layers": [],
    }
    for l in range(LAYERS):
        lk = jax.random.split(ks[4 + l], 4)
        params["layers"].append(dict(
            ln1_g=jnp.ones((1, WIDTH), jnp.float32),
            ln1_b=jnp.zeros((1, WIDTH), jnp.float32),
            w_in=jax.random.normal(lk[0], (3 * WIDTH, WIDTH), jnp.float32) * 0.05,   # in_proj_weight
            w_out=jax.random.normal(lk[1], (WIDTH, WIDTH), jnp.float32) * 0.05,      # out_proj.weight
            ln2_g=jnp.ones((1, WIDTH), jnp.float32),
            ln2_b=jnp.zeros((1, WIDTH), jnp.float32),
            c_fc=jax.random.normal(lk[2], (WIDTH, 4 * WIDTH), jnp.float32) * 0.05,
            c_proj=jax.random.normal(lk[3], (WIDTH, 4 * WIDTH), jnp.float32) * 0.05,
        ))
    return params


# ---------------- wrapper ----------------
def vision_transformer_forward(params, x_nchw):
    B = x_nchw.shape[0]
    assert B == BATCH
    p, g = PATCH, GRID_HW
    layers = params["layers"]

    # conv1 (stride = kernel = patch, NO bias) == matmul over flattened patches.
    # The zero "cls patch" row below is only correct because conv1 has no bias.
    patches = x_nchw.reshape(B, 3, g, p, g, p).transpose(0, 2, 4, 1, 3, 5)
    patches = patches.reshape(B, NUM_PATCHES, PATCH_FLAT)
    patches_full = jnp.concatenate(
        [jnp.zeros((B, 1, PATCH_FLAT), patches.dtype), patches], axis=1
    ).reshape(N_TOK, PATCH_FLAT).astype(jnp.bfloat16)                 # (B*SEQ, 192) bf16

    w_patch_t = params["conv_w"].reshape(WIDTH, PATCH_FLAT).T.astype(jnp.bfloat16)

    # (cls + pos) table, passed un-broadcast (broadcast over batch in-kernel).
    embed = params["pos"].at[0].add(params["cls"])                    # (SEQ, D) f32

    # Stacked per-layer weights, pre-transposed/split, bf16 MXU operands.
    ln1_g  = jnp.stack([lp["ln1_g"] for lp in layers])                # (L, 1, D) f32
    ln1_b  = jnp.stack([lp["ln1_b"] for lp in layers])
    ln2_g  = jnp.stack([lp["ln2_g"] for lp in layers])
    ln2_b  = jnp.stack([lp["ln2_b"] for lp in layers])
    wqkv_t = jnp.stack([lp["w_in"].T for lp in layers]).astype(jnp.bfloat16)      # (L, D, 3D)
    wout_h = jnp.stack([lp["w_out"].T.reshape(HEADS, HEAD_DIM, WIDTH)
                        for lp in layers]).astype(jnp.bfloat16)                   # (L, H, hd, D)
    c_fc   = jnp.stack([lp["c_fc"] for lp in layers]).astype(jnp.bfloat16)        # (L, D, 4D)
    c_fc_t = jnp.stack([lp["c_fc"].T for lp in layers]).astype(jnp.bfloat16)      # (L, 4D, D)
    c_pj_t = jnp.stack([lp["c_proj"].T for lp in layers]).astype(jnp.bfloat16)    # (L, 4D, D)

    proj_pad = jnp.zeros((WIDTH, OUT_PAD), jnp.float32)
    proj_pad = proj_pad.at[:, :OUTPUT_DIM].set(params["proj"]).astype(jnp.bfloat16)

    const2d = lambda blk: pl.BlockSpec(blk, lambda l: (0, 0))         # fetched once, resident
    layer3d = lambda blk: pl.BlockSpec(blk, lambda l: (l, 0, 0))      # streamed per layer

    grid_spec = pltpu.PrefetchScalarGridSpec(
        num_scalar_prefetch=0,
        grid=(LAYERS,),
        in_specs=[
            const2d((N_TOK, PATCH_FLAT)),                             # patches_full
            const2d((PATCH_FLAT, WIDTH)),                             # w_patch_t
            const2d((SEQ, WIDTH)),                                    # embed (cls+pos)
            layer3d((1, 1, WIDTH)),                                   # ln1_g
            layer3d((1, 1, WIDTH)),                                   # ln1_b
            layer3d((1, WIDTH, 3 * WIDTH)),                           # wqkv_t
            pl.BlockSpec((1, HEADS, HEAD_DIM, WIDTH),
                         lambda l: (l, 0, 0, 0)),                     # wout_h
            layer3d((1, 1, WIDTH)),                                   # ln2_g
            layer3d((1, 1, WIDTH)),                                   # ln2_b
            layer3d((1, WIDTH, 4 * WIDTH)),                           # c_fc
            layer3d((1, 4 * WIDTH, WIDTH)),                           # c_fc_t
            layer3d((1, 4 * WIDTH, WIDTH)),                           # c_proj_t
            const2d((1, WIDTH)),                                      # ln_post_g
            const2d((1, WIDTH)),                                      # ln_post_b
            const2d((WIDTH, OUT_PAD)),                                # proj (lane-padded)
        ],
        out_specs=pl.BlockSpec((BATCH, OUT_PAD), lambda l: (0, 0)),   # resident across layers
        scratch_shapes=[pltpu.VMEM((N_TOK, WIDTH), jnp.float32)],     # residual-stream carry
    )

    out_pad = pl.pallas_call(
        _vit_kernel,
        out_shape=jax.ShapeDtypeStruct((BATCH, OUT_PAD), jnp.float32),
        grid_spec=grid_spec,
        compiler_params=pltpu.CompilerParams(
            dimension_semantics=("arbitrary",)),                      # layer axis is sequential
    )(patches_full, w_patch_t, embed,
      ln1_g, ln1_b, wqkv_t, wout_h,
      ln2_g, ln2_b, c_fc, c_fc_t, c_pj_t,
      params["ln_post_g"], params["ln_post_b"], proj_pad)

    return out_pad[:, :OUTPUT_DIM]                                    # slice off lane padding


if __name__ == "__main__":
    key = jax.random.PRNGKey(0)
    pkey, xkey = jax.random.split(key)
    params = init_params(pkey)
    x = jax.random.normal(xkey, (BATCH, 3, INPUT_RES, INPUT_RES), jnp.float32)

    fwd = jax.jit(vision_transformer_forward)
    out = jax.block_until_ready(fwd(params, x))
    assert out.shape == (BATCH, OUTPUT_DIM), out.shape
    assert bool(jnp.all(jnp.isfinite(out)))
    print("KERNEL_OK")
</pallas_src>

<mosaic_0001>
module attributes {stable_mosaic.version = 11 : i64} {
  func.func @_vit_kernel(%arg0: i32, %arg1: memref<10x192xbf16, #tpu.memory_space<vmem>>, %arg2: memref<192x32xbf16, #tpu.memory_space<vmem>>, %arg3: memref<5x32xf32, #tpu.memory_space<vmem>>, %arg4: memref<1x1x32xf32, #tpu.memory_space<vmem>>, %arg5: memref<1x1x32xf32, #tpu.memory_space<vmem>>, %arg6: memref<1x32x96xbf16, #tpu.memory_space<vmem>>, %arg7: memref<1x4x8x32xbf16, #tpu.memory_space<vmem>>, %arg8: memref<1x1x32xf32, #tpu.memory_space<vmem>>, %arg9: memref<1x1x32xf32, #tpu.memory_space<vmem>>, %arg10: memref<1x32x128xbf16, #tpu.memory_space<vmem>>, %arg11: memref<1x128x32xbf16, #tpu.memory_space<vmem>>, %arg12: memref<1x128x32xbf16, #tpu.memory_space<vmem>>, %arg13: memref<1x32xf32, #tpu.memory_space<vmem>>, %arg14: memref<1x32xf32, #tpu.memory_space<vmem>>, %arg15: memref<32x128xbf16, #tpu.memory_space<vmem>>, %arg16: memref<2x128xf32, #tpu.memory_space<vmem>>, %arg17: memref<10x32xf32, #tpu.memory_space<vmem>>) attributes {dimension_semantics = [#tpu.dimension_semantics<arbitrary>], iteration_bounds = array<i64: 2>, scalar_prefetch = 0 : i64, scratch_operands = 1 : i64, tpu.core_type = #tpu.core_type<tc>, window_params = [{pipeline_mode = #tpu.pipeline_mode<synchronous>, transform_indices = @transform_0, window_bounds = array<i64: 10, 192>}, {pipeline_mode = #tpu.pipeline_mode<synchronous>, transform_indices = @transform_1, window_bounds = array<i64: 192, 32>}, {pipeline_mode = #tpu.pipeline_mode<synchronous>, transform_indices = @transform_2, window_bounds = array<i64: 5, 32>}, {transform_indices = @transform_3, window_bounds = array<i64: 1, 1, 32>}, {transform_indices = @transform_4, window_bounds = array<i64: 1, 1, 32>}, {transform_indices = @transform_5, window_bounds = array<i64: 1, 32, 96>}, {transform_indices = @transform_6, window_bounds = array<i64: 1, 4, 8, 32>}, {transform_indices = @transform_7, window_bounds = array<i64: 1, 1, 32>}, {transform_indices = @transform_8, window_bounds = array<i64: 1, 1, 32>}, {transform_indices = @transform_9, window_bounds = array<i64: 1, 32, 128>}, {transform_indices = @transform_10, window_bounds = array<i64: 1, 128, 32>}, {transform_indices = @transform_11, window_bounds = array<i64: 1, 128, 32>}, {pipeline_mode = #tpu.pipeline_mode<synchronous>, transform_indices = @transform_12, window_bounds = array<i64: 1, 32>}, {pipeline_mode = #tpu.pipeline_mode<synchronous>, transform_indices = @transform_13, window_bounds = array<i64: 1, 32>}, {pipeline_mode = #tpu.pipeline_mode<synchronous>, transform_indices = @transform_14, window_bounds = array<i64: 32, 128>}, {pipeline_mode = #tpu.pipeline_mode<synchronous>, transform_indices = @transform_15, window_bounds = array<i64: 2, 128>}]} {
    %c0_i32 = arith.constant 0 : i32
    %0 = arith.cmpi eq, %arg0, %c0_i32 : i32
    %1 = arith.extui %0 : i1 to i32
    %c0_i32_0 = arith.constant 0 : i32
    %2 = arith.cmpi ne, %1, %c0_i32_0 : i32
    scf.if %2 {
      %c0_59 = arith.constant 0 : index
      %c0_60 = arith.constant 0 : index
      %144 = vector.load %arg1[%c0_59, %c0_60] : memref<10x192xbf16, #tpu.memory_space<vmem>>, vector<10x192xbf16>
      %c0_61 = arith.constant 0 : index
      %c0_62 = arith.constant 0 : index
      %145 = vector.load %arg2[%c0_61, %c0_62] : memref<192x32xbf16, #tpu.memory_space<vmem>>, vector<192x32xbf16>
      %cst_63 = arith.constant dense<0.000000e+00> : vector<10x32xf32>
      %146 = tpu.matmul %144, %145, %cst_63 {dimension_numbers = #tpu.dot_dimension_numbers<[1], [0], [0], [1], [0, 0, 1, 1], [], []>} : vector<10x192xbf16>, vector<192x32xbf16>, vector<10x32xf32> -> vector<10x32xf32>
      %147 = vector.shape_cast %146 : vector<10x32xf32> to vector<2x5x32xf32>
      %c0_64 = arith.constant 0 : index
      %c0_65 = arith.constant 0 : index
      %148 = vector.load %arg3[%c0_64, %c0_65] : memref<5x32xf32, #tpu.memory_space<vmem>>, vector<5x32xf32>
      %149 = vector.shape_cast %148 : vector<5x32xf32> to vector<1x5x32xf32>
      %150 = vector.broadcast %149 : vector<1x5x32xf32> to vector<2x5x32xf32>
      %151 = arith.addf %147, %150 : vector<2x5x32xf32>
      %152 = vector.shape_cast %151 : vector<2x5x32xf32> to vector<10x32xf32>
      %c0_66 = arith.constant 0 : index
      %c0_67 = arith.constant 0 : index
      %153 = vector.load %arg17[%c0_66, %c0_67] : memref<10x32xf32, #tpu.memory_space<vmem>>, vector<10x32xf32>
      tpu.vector_store %arg17[%c0_66, %c0_67], %152 {strides = array<i32>} : memref<10x32xf32, #tpu.memory_space<vmem>>, vector<10x32xf32>,
    } else {
    }
    %c0 = arith.constant 0 : index
    %c0_1 = arith.constant 0 : index
    %3 = vector.load %arg17[%c0, %c0_1] : memref<10x32xf32, #tpu.memory_space<vmem>>, vector<10x32xf32>
    %c0_2 = arith.constant 0 : index
    %c0_3 = arith.constant 0 : index
    %c0_4 = arith.constant 0 : index
    %4 = vector.load %arg4[%c0_2, %c0_3, %c0_4] : memref<1x1x32xf32, #tpu.memory_space<vmem>>, vector<1x1x32xf32>
    %5 = vector.shape_cast %4 : vector<1x1x32xf32> to vector<1x32xf32>
    %c0_5 = arith.constant 0 : index
    %c0_6 = arith.constant 0 : index
    %c0_7 = arith.constant 0 : index
    %6 = vector.load %arg5[%c0_5, %c0_6, %c0_7] : memref<1x1x32xf32, #tpu.memory_space<vmem>>, vector<1x1x32xf32>
    %7 = vector.shape_cast %6 : vector<1x1x32xf32> to vector<1x32xf32>
    %c0_8 = arith.constant 0 : index
    %c0_9 = arith.constant 0 : index
    %c0_10 = arith.constant 0 : index
    %8 = vector.load %arg8[%c0_8, %c0_9, %c0_10] : memref<1x1x32xf32, #tpu.memory_space<vmem>>, vector<1x1x32xf32>
    %9 = vector.shape_cast %8 : vector<1x1x32xf32> to vector<1x32xf32>
    %c0_11 = arith.constant 0 : index
    %c0_12 = arith.constant 0 : index
    %c0_13 = arith.constant 0 : index
    %10 = vector.load %arg9[%c0_11, %c0_12, %c0_13] : memref<1x1x32xf32, #tpu.memory_space<vmem>>, vector<1x1x32xf32>
    %11 = vector.shape_cast %10 : vector<1x1x32xf32> to vector<1x32xf32>
    %c0_14 = arith.constant 0 : index
    %c0_15 = arith.constant 0 : index
    %c0_16 = arith.constant 0 : index
    %12 = vector.load %arg6[%c0_14, %c0_15, %c0_16] : memref<1x32x96xbf16, #tpu.memory_space<vmem>>, vector<1x32x96xbf16>
    %13 = vector.shape_cast %12 : vector<1x32x96xbf16> to vector<32x96xbf16>
    %c0_17 = arith.constant 0 : index
    %c0_18 = arith.constant 0 : index
    %c0_19 = arith.constant 0 : index
    %c0_20 = arith.constant 0 : index
    %14 = vector.load %arg7[%c0_17, %c0_18, %c0_19, %c0_20] : memref<1x4x8x32xbf16, #tpu.memory_space<vmem>>, vector<1x4x8x32xbf16>
    %15 = vector.shape_cast %14 : vector<1x4x8x32xbf16> to vector<4x8x32xbf16>
    %c0_21 = arith.constant 0 : index
    %c0_22 = arith.constant 0 : index
    %c0_23 = arith.constant 0 : index
    %16 = vector.load %arg10[%c0_21, %c0_22, %c0_23] : memref<1x32x128xbf16, #tpu.memory_space<vmem>>, vector<1x32x128xbf16>
    %17 = vector.shape_cast %16 : vector<1x32x128xbf16> to vector<32x128xbf16>
    %c0_24 = arith.constant 0 : index
    %c0_25 = arith.constant 0 : index
    %c0_26 = arith.constant 0 : index
    %18 = vector.load %arg11[%c0_24, %c0_25, %c0_26] : memref<1x128x32xbf16, #tpu.memory_space<vmem>>, vector<1x128x32xbf16>
    %19 = vector.shape_cast %18 : vector<1x128x32xbf16> to vector<128x32xbf16>
    %c0_27 = arith.constant 0 : index
    %c0_28 = arith.constant 0 : index
    %c0_29 = arith.constant 0 : index
    %20 = vector.load %arg12[%c0_27, %c0_28, %c0_29] : memref<1x128x32xbf16, #tpu.memory_space<vmem>>, vector<1x128x32xbf16>
    %21 = vector.shape_cast %20 : vector<1x128x32xbf16> to vector<128x32xbf16>
    %cst = arith.constant dense<0.000000e+00> : vector<10xf32>
    %22 = vector.multi_reduction <add>, %3, %cst [1] : vector<10x32xf32> to vector<10xf32>
    %23 = vector.shape_cast %22 : vector<10xf32> to vector<10x1xf32>
    %cst_30 = arith.constant 3.200000e+01 : f32
    %24 = vector.broadcast %cst_30 : f32 to vector<10x1xf32>
    %25 = arith.divf %23, %24 : vector<10x1xf32>
    %26 = vector.broadcast %25 : vector<10x1xf32> to vector<10x32xf32>
    %27 = arith.subf %3, %26 : vector<10x32xf32>
    %28 = arith.mulf %27, %27 : vector<10x32xf32>
    %cst_31 = arith.constant dense<0.000000e+00> : vector<10xf32>
    %29 = vector.multi_reduction <add>, %28, %cst_31 [1] : vector<10x32xf32> to vector<10xf32>
    %30 = vector.shape_cast %29 : vector<10xf32> to vector<10x1xf32>
    %cst_32 = arith.constant 3.200000e+01 : f32
    %31 = vector.broadcast %cst_32 : f32 to vector<10x1xf32>
    %32 = arith.divf %30, %31 : vector<10x1xf32>
    %33 = vector.broadcast %25 : vector<10x1xf32> to vector<10x32xf32>
    %34 = arith.subf %3, %33 : vector<10x32xf32>
    %cst_33 = arith.constant 9.99999997E-7 : f32
    %35 = vector.broadcast %cst_33 : f32 to vector<10x1xf32>
    %36 = arith.addf %32, %35 : vector<10x1xf32>
    %37 = math.rsqrt %36 : vector<10x1xf32>
    %38 = vector.broadcast %37 : vector<10x1xf32> to vector<10x32xf32>
    %39 = arith.mulf %34, %38 : vector<10x32xf32>
    %40 = vector.broadcast %5 : vector<1x32xf32> to vector<10x32xf32>
    %41 = arith.mulf %39, %40 : vector<10x32xf32>
    %42 = vector.broadcast %7 : vector<1x32xf32> to vector<10x32xf32>
    %43 = arith.addf %41, %42 : vector<10x32xf32>
    %44 = arith.truncf %43 : vector<10x32xf32> to vector<10x32xbf16>
    %cst_34 = arith.constant dense<0.000000e+00> : vector<10x96xf32>
    %45 = tpu.matmul %44, %13, %cst_34 {dimension_numbers = #tpu.dot_dimension_numbers<[1], [0], [0], [1], [0, 0, 1, 1], [], []>} : vector<10x32xbf16>, vector<32x96xbf16>, vector<10x96xf32> -> vector<10x96xf32>
    %46 = vector.shape_cast %45 : vector<10x96xf32> to vector<2x5x96xf32>
    %47 = vector.extract_strided_slice %46 {offsets = [0, 0, 0], sizes = [2, 5, 8], strides = [1, 1, 1]} : vector<2x5x96xf32> to vector<2x5x8xf32>
    %48 = vector.extract_strided_slice %46 {offsets = [0, 0, 8], sizes = [2, 5, 8], strides = [1, 1, 1]} : vector<2x5x96xf32> to vector<2x5x8xf32>
    %49 = vector.extract_strided_slice %46 {offsets = [0, 0, 16], sizes = [2, 5, 8], strides = [1, 1, 1]} : vector<2x5x96xf32> to vector<2x5x8xf32>
    %50 = vector.extract_strided_slice %46 {offsets = [0, 0, 24], sizes = [2, 5, 8], strides = [1, 1, 1]} : vector<2x5x96xf32> to vector<2x5x8xf32>
    %51 = tpu.concatenate %47, %48, %49, %50 in 0 : vector<2x5x8xf32>, vector<2x5x8xf32>, vector<2x5x8xf32>, vector<2x5x8xf32> -> vector<8x5x8xf32>
    %52 = vector.extract_strided_slice %46 {offsets = [0, 0, 32], sizes = [2, 5, 8], strides = [1, 1, 1]} : vector<2x5x96xf32> to vector<2x5x8xf32>
    %53 = vector.extract_strided_slice %46 {offsets = [0, 0, 40], sizes = [2, 5, 8], strides = [1, 1, 1]} : vector<2x5x96xf32> to vector<2x5x8xf32>
    %54 = vector.extract_strided_slice %46 {offsets = [0, 0, 48], sizes = [2, 5, 8], strides = [1, 1, 1]} : vector<2x5x96xf32> to vector<2x5x8xf32>
    %55 = vector.extract_strided_slice %46 {offsets = [0, 0, 56], sizes = [2, 5, 8], strides = [1, 1, 1]} : vector<2x5x96xf32> to vector<2x5x8xf32>
    %56 = tpu.concatenate %52, %53, %54, %55 in 0 : vector<2x5x8xf32>, vector<2x5x8xf32>, vector<2x5x8xf32>, vector<2x5x8xf32> -> vector<8x5x8xf32>
    %57 = vector.extract_strided_slice %46 {offsets = [0, 0, 64], sizes = [2, 5, 8], strides = [1, 1, 1]} : vector<2x5x96xf32> to vector<2x5x8xf32>
    %58 = vector.extract_strided_slice %46 {offsets = [0, 0, 72], sizes = [2, 5, 8], strides = [1, 1, 1]} : vector<2x5x96xf32> to vector<2x5x8xf32>
    %59 = vector.extract_strided_slice %46 {offsets = [0, 0, 80], sizes = [2, 5, 8], strides = [1, 1, 1]} : vector<2x5x96xf32> to vector<2x5x8xf32>
    %60 = vector.extract_strided_slice %46 {offsets = [0, 0, 88], sizes = [2, 5, 8], strides = [1, 1, 1]} : vector<2x5x96xf32> to vector<2x5x8xf32>
    %61 = tpu.concatenate %57, %58, %59, %60 in 0 : vector<2x5x8xf32>, vector<2x5x8xf32>, vector<2x5x8xf32>, vector<2x5x8xf32> -> vector<8x5x8xf32>
    %62 = arith.truncf %51 : vector<8x5x8xf32> to vector<8x5x8xbf16>
    %63 = arith.truncf %56 : vector<8x5x8xf32> to vector<8x5x8xbf16>
    "tpu.trace_start"() <{level = 10 : i32, message = "gqd,gkd->gqk"}> : () -> ()
    %cst_35 = arith.constant dense<0.000000e+00> : vector<8x5x5xf32>
    %64 = tpu.matmul %62, %63, %cst_35 {dimension_numbers = #tpu.dot_dimension_numbers<[2], [2], [1], [1], [0, 0, 0, 1, 1, 1], [0], [0]>} : vector<8x5x8xbf16>, vector<8x5x8xbf16>, vector<8x5x5xf32> -> vector<8x5x5xf32>
    "tpu.trace_stop"() : () -> ()
    %cst_36 = arith.constant 0.353553385 : f32
    %65 = vector.broadcast %cst_36 : f32 to vector<8x5x5xf32>
    %66 = arith.mulf %64, %65 : vector<8x5x5xf32>
    %cst_37 = arith.constant dense<0xFF800000> : vector<8x5xf32>
    %67 = vector.multi_reduction <maximumf>, %66, %cst_37 [2] : vector<8x5x5xf32> to vector<8x5xf32>
    %68 = vector.shape_cast %67 : vector<8x5xf32> to vector<8x5x1xf32>
    %69 = vector.broadcast %68 : vector<8x5x1xf32> to vector<8x5x5xf32>
    %70 = arith.subf %66, %69 : vector<8x5x5xf32>
    %71 = math.exp %70 : vector<8x5x5xf32>
    %cst_38 = arith.constant dense<0.000000e+00> : vector<8x5xf32>
    %72 = vector.multi_reduction <add>, %71, %cst_38 [2] : vector<8x5x5xf32> to vector<8x5xf32>
    %73 = vector.shape_cast %72 : vector<8x5xf32> to vector<8x5x1xf32>
    %74 = tpu.reciprocal %73 {approx = true} : vector<8x5x1xf32> -> vector<8x5x1xf32>
    %75 = vector.broadcast %74 : vector<8x5x1xf32> to vector<8x5x5xf32>
    %76 = arith.mulf %71, %75 : vector<8x5x5xf32>
    %77 = arith.truncf %76 : vector<8x5x5xf32> to vector<8x5x5xbf16>
    %78 = arith.truncf %61 : vector<8x5x8xf32> to vector<8x5x8xbf16>
    "tpu.trace_start"() <{level = 10 : i32, message = "gqk,gkd->gqd"}> : () -> ()
    %cst_39 = arith.constant dense<0.000000e+00> : vector<8x5x8xf32>
    %79 = tpu.matmul %77, %78, %cst_39 {dimension_numbers = #tpu.dot_dimension_numbers<[2], [1], [1], [2], [0, 0, 0, 1, 1, 2], [0], [0]>} : vector<8x5x5xbf16>, vector<8x5x8xbf16>, vector<8x5x8xf32> -> vector<8x5x8xf32>
    "tpu.trace_stop"() : () -> ()
    %80 = vector.shape_cast %79 : vector<8x5x8xf32> to vector<4x10x8xf32>
    %81 = arith.truncf %80 : vector<4x10x8xf32> to vector<4x10x8xbf16>
    "tpu.trace_start"() <{level = 10 : i32, message = "hnd,hdk->hnk"}> : () -> ()
    %cst_40 = arith.constant dense<0.000000e+00> : vector<4x10x32xf32>
    %82 = tpu.matmul %81, %15, %cst_40 {dimension_numbers = #tpu.dot_dimension_numbers<[2], [1], [1], [2], [0, 0, 0, 1, 1, 2], [0], [0]>} : vector<4x10x8xbf16>, vector<4x8x32xbf16>, vector<4x10x32xf32> -> vector<4x10x32xf32>
    "tpu.trace_stop"() : () -> ()
    %83 = vector.extract_strided_slice %82 {offsets = [0, 0, 0], sizes = [1, 10, 32], strides = [1, 1, 1]} : vector<4x10x32xf32> to vector<1x10x32xf32>
    %84 = vector.shape_cast %83 : vector<1x10x32xf32> to vector<10x32xf32>
    %85 = vector.extract_strided_slice %82 {offsets = [1, 0, 0], sizes = [1, 10, 32], strides = [1, 1, 1]} : vector<4x10x32xf32> to vector<1x10x32xf32>
    %86 = vector.shape_cast %85 : vector<1x10x32xf32> to vector<10x32xf32>
    %87 = arith.addf %84, %86 : vector<10x32xf32>
    %88 = vector.extract_strided_slice %82 {offsets = [2, 0, 0], sizes = [1, 10, 32], strides = [1, 1, 1]} : vector<4x10x32xf32> to vector<1x10x32xf32>
    %89 = vector.shape_cast %88 : vector<1x10x32xf32> to vector<10x32xf32>
    %90 = arith.addf %87, %89 : vector<10x32xf32>
    %91 = vector.extract_strided_slice %82 {offsets = [3, 0, 0], sizes = [1, 10, 32], strides = [1, 1, 1]} : vector<4x10x32xf32> to vector<1x10x32xf32>
    %92 = vector.shape_cast %91 : vector<1x10x32xf32> to vector<10x32xf32>
    %93 = arith.addf %90, %92 : vector<10x32xf32>
    %94 = arith.addf %3, %93 : vector<10x32xf32>
    %cst_41 = arith.constant dense<0.000000e+00> : vector<10xf32>
    %95 = vector.multi_reduction <add>, %94, %cst_41 [1] : vector<10x32xf32> to vector<10xf32>
    %96 = vector.shape_cast %95 : vector<10xf32> to vector<10x1xf32>
    %cst_42 = arith.constant 3.200000e+01 : f32
    %97 = vector.broadcast %cst_42 : f32 to vector<10x1xf32>
    %98 = arith.divf %96, %97 : vector<10x1xf32>
    %99 = vector.broadcast %98 : vector<10x1xf32> to vector<10x32xf32>
    %100 = arith.subf %94, %99 : vector<10x32xf32>
    %101 = arith.mulf %100, %100 : vector<10x32xf32>
    %cst_43 = arith.constant dense<0.000000e+00> : vector<10xf32>
    %102 = vector.multi_reduction <add>, %101, %cst_43 [1] : vector<10x32xf32> to vector<10xf32>
    %103 = vector.shape_cast %102 : vector<10xf32> to vector<10x1xf32>
    %cst_44 = arith.constant 3.200000e+01 : f32
    %104 = vector.broadcast %cst_44 : f32 to vector<10x1xf32>
    %105 = arith.divf %103, %104 : vector<10x1xf32>
    %106 = vector.broadcast %98 : vector<10x1xf32> to vector<10x32xf32>
    %107 = arith.subf %94, %106 : vector<10x32xf32>
    %cst_45 = arith.constant 9.99999997E-7 : f32
    %108 = vector.broadcast %cst_45 : f32 to vector<10x1xf32>
    %109 = arith.addf %105, %108 : vector<10x1xf32>
    %110 = math.rsqrt %109 : vector<10x1xf32>
    %111 = vector.broadcast %110 : vector<10x1xf32> to vector<10x32xf32>
    %112 = arith.mulf %107, %111 : vector<10x32xf32>
    %113 = vector.broadcast %9 : vector<1x32xf32> to vector<10x32xf32>
    %114 = arith.mulf %112, %113 : vector<10x32xf32>
    %115 = vector.broadcast %11 : vector<1x32xf32> to vector<10x32xf32>
    %116 = arith.addf %114, %115 : vector<10x32xf32>
    %117 = arith.truncf %116 : vector<10x32xf32> to vector<10x32xbf16>
    %cst_46 = arith.constant dense<0.000000e+00> : vector<10x128xf32>
    %118 = tpu.matmul %117, %17, %cst_46 {dimension_numbers = #tpu.dot_dimension_numbers<[1], [0], [0], [1], [0, 0, 1, 1], [], []>} : vector<10x32xbf16>, vector<32x128xbf16>, vector<10x128xf32> -> vector<10x128xf32>
    %cst_47 = arith.constant 1.000000e-01 : f32
    %119 = vector.broadcast %cst_47 : f32 to vector<10x128xf32>
    %120 = arith.mulf %119, %118 : vector<10x128xf32>
    %cst_48 = arith.constant 0.00999999977 : f32
    %121 = vector.broadcast %cst_48 : f32 to vector<10x128xf32>
    %122 = arith.subf %120, %121 : vector<10x128xf32>
    %cst_49 = arith.constant 0.000000e+00 : f32
    %123 = vector.broadcast %cst_49 : f32 to vector<10x128xf32>
    %124 = arith.maximumf %122, %123 : vector<10x128xf32>
    %125 = arith.truncf %124 : vector<10x128xf32> to vector<10x128xbf16>
    %cst_50 = arith.constant dense<0.000000e+00> : vector<10x32xf32>
    %126 = tpu.matmul %125, %19, %cst_50 {dimension_numbers = #tpu.dot_dimension_numbers<[1], [0], [0], [1], [0, 0, 1, 1], [], []>} : vector<10x128xbf16>, vector<128x32xbf16>, vector<10x32xf32> -> vector<10x32xf32>
    %127 = arith.subf %126, %116 : vector<10x32xf32>
    %128 = arith.truncf %127 : vector<10x32xf32> to vector<10x32xbf16>
    %cst_51 = arith.constant dense<0.000000e+00> : vector<10x128xf32>
    %129 = tpu.matmul %128, %17, %cst_51 {dimension_numbers = #tpu.dot_dimension_numbers<[1], [0], [0], [1], [0, 0, 1, 1], [], []>} : vector<10x32xbf16>, vector<32x128xbf16>, vector<10x128xf32> -> vector<10x128xf32>
    %cst_52 = arith.constant 1.000000e-01 : f32
    %130 = vector.broadcast %cst_52 : f32 to vector<10x128xf32>
    %131 = arith.mulf %130, %129 : vector<10x128xf32>
    %132 = arith.subf %124, %131 : vector<10x128xf32>
    %cst_53 = arith.constant 0.00999999977 : f32
    %133 = vector.broadcast %cst_53 : f32 to vector<10x128xf32>
    %134 = arith.subf %132, %133 : vector<10x128xf32>
    %cst_54 = arith.constant 0.000000e+00 : f32
    %135 = vector.broadcast %cst_54 : f32 to vector<10x128xf32>
    %136 = arith.maximumf %134, %135 : vector<10x128xf32>
    %137 = arith.truncf %136 : vector<10x128xf32> to vector<10x128xbf16>
    %cst_55 = arith.constant dense<0.000000e+00> : vector<10x32xf32>
    %138 = tpu.matmul %137, %21, %cst_55 {dimension_numbers = #tpu.dot_dimension_numbers<[1], [0], [0], [1], [0, 0, 1, 1], [], []>} : vector<10x128xbf16>, vector<128x32xbf16>, vector<10x32xf32> -> vector<10x32xf32>
    %139 = arith.addf %94, %138 : vector<10x32xf32>
    %c0_56 = arith.constant 0 : index
    %c0_57 = arith.constant 0 : index
    %140 = vector.load %arg17[%c0_56, %c0_57] : memref<10x32xf32, #tpu.memory_space<vmem>>, vector<10x32xf32>
    tpu.vector_store %arg17[%c0_56, %c0_57], %139 {strides = array<i32>} : memref<10x32xf32, #tpu.memory_space<vmem>>, vector<10x32xf32>,
    %c1_i32 = arith.constant 1 : i32
    %141 = arith.cmpi eq, %arg0, %c1_i32 : i32
    %142 = arith.extui %141 : i1 to i32
    %c0_i32_58 = arith.constant 0 : i32
    %143 = arith.cmpi ne, %142, %c0_i32_58 : i32
    scf.if %143 {
      %144 = vector.shape_cast %139 : vector<10x32xf32> to vector<2x5x32xf32>
      %145 = vector.extract_strided_slice %144 {offsets = [0, 0, 0], sizes = [2, 1, 32], strides = [1, 1, 1]} : vector<2x5x32xf32> to vector<2x1x32xf32>
      %146 = vector.shape_cast %145 : vector<2x1x32xf32> to vector<2x32xf32>
      %c0_59 = arith.constant 0 : index
      %c0_60 = arith.constant 0 : index
      %147 = vector.load %arg13[%c0_59, %c0_60] : memref<1x32xf32, #tpu.memory_space<vmem>>, vector<1x32xf32>
      %c0_61 = arith.constant 0 : index
      %c0_62 = arith.constant 0 : index
      %148 = vector.load %arg14[%c0_61, %c0_62] : memref<1x32xf32, #tpu.memory_space<vmem>>, vector<1x32xf32>
      %cst_63 = arith.constant dense<0.000000e+00> : vector<2xf32>
      %149 = vector.multi_reduction <add>, %146, %cst_63 [1] : vector<2x32xf32> to vector<2xf32>
      %150 = vector.shape_cast %149 : vector<2xf32> to vector<2x1xf32>
      %cst_64 = arith.constant 3.200000e+01 : f32
      %151 = vector.broadcast %cst_64 : f32 to vector<2x1xf32>
      %152 = arith.divf %150, %151 : vector<2x1xf32>
      %153 = vector.broadcast %152 : vector<2x1xf32> to vector<2x32xf32>
      %154 = arith.subf %146, %153 : vector<2x32xf32>
      %155 = arith.mulf %154, %154 : vector<2x32xf32>
      %cst_65 = arith.constant dense<0.000000e+00> : vector<2xf32>
      %156 = vector.multi_reduction <add>, %155, %cst_65 [1] : vector<2x32xf32> to vector<2xf32>
      %157 = vector.shape_cast %156 : vector<2xf32> to vector<2x1xf32>
      %cst_66 = arith.constant 3.200000e+01 : f32
      %158 = vector.broadcast %cst_66 : f32 to vector<2x1xf32>
      %159 = arith.divf %157, %158 : vector<2x1xf32>
      %160 = vector.broadcast %152 : vector<2x1xf32> to vector<2x32xf32>
      %161 = arith.subf %146, %160 : vector<2x32xf32>
      %cst_67 = arith.constant 9.99999997E-7 : f32
      %162 = vector.broadcast %cst_67 : f32 to vector<2x1xf32>
      %163 = arith.addf %159, %162 : vector<2x1xf32>
      %164 = math.rsqrt %163 : vector<2x1xf32>
      %165 = vector.broadcast %164 : vector<2x1xf32> to vector<2x32xf32>
      %166 = arith.mulf %161, %165 : vector<2x32xf32>
      %167 = vector.broadcast %147 : vector<1x32xf32> to vector<2x32xf32>
      %168 = arith.mulf %166, %167 : vector<2x32xf32>
      %169 = vector.broadcast %148 : vector<1x32xf32> to vector<2x32xf32>
      %170 = arith.addf %168, %169 : vector<2x32xf32>
      %171 = arith.truncf %170 : vector<2x32xf32> to vector<2x32xbf16>
      %c0_68 = arith.constant 0 : index
      %c0_69 = arith.constant 0 : index
      %172 = vector.load %arg15[%c0_68, %c0_69] : memref<32x128xbf16, #tpu.memory_space<vmem>>, vector<32x128xbf16>
      %cst_70 = arith.constant dense<0.000000e+00> : vector<2x128xf32>
      %173 = tpu.matmul %171, %172, %cst_70 {dimension_numbers = #tpu.dot_dimension_numbers<[1], [0], [0], [1], [0, 0, 1, 1], [], []>} : vector<2x32xbf16>, vector<32x128xbf16>, vector<2x128xf32> -> vector<2x128xf32>
      %c0_71 = arith.constant 0 : index
      %c0_72 = arith.constant 0 : index
      %174 = vector.load %arg16[%c0_71, %c0_72] : memref<2x128xf32, #tpu.memory_space<vmem>>, vector<2x128xf32>
      tpu.vector_store %arg16[%c0_71, %c0_72], %173 {strides = array<i32>} : memref<2x128xf32, #tpu.memory_space<vmem>>, vector<2x128xf32>,
    } else {
    }
    return
  }
  func.func @transform_0(%arg0: i32) -> (i32, i32) {
    %c0_i32 = arith.constant 0 : i32
    %c0_i32_0 = arith.constant 0 : i32
    %c0_i32_1 = arith.constant 0 : i32
    return %c0_i32, %c0_i32_0 : i32, i32
  }
  func.func @transform_1(%arg0: i32) -> (i32, i32) {
    %c0_i32 = arith.constant 0 : i32
    %c0_i32_0 = arith.constant 0 : i32
    %c0_i32_1 = arith.constant 0 : i32
    return %c0_i32, %c0_i32_0 : i32, i32
  }
  func.func @transform_2(%arg0: i32) -> (i32, i32) {
    %c0_i32 = arith.constant 0 : i32
    %c0_i32_0 = arith.constant 0 : i32
    %c0_i32_1 = arith.constant 0 : i32
    return %c0_i32, %c0_i32_0 : i32, i32
  }
  func.func @transform_3(%arg0: i32) -> (i32, i32, i32) {
    %c0_i32 = arith.constant 0 : i32
    %c0_i32_0 = arith.constant 0 : i32
    %c0_i32_1 = arith.constant 0 : i32
    return %arg0, %c0_i32, %c0_i32_0 : i32, i32, i32
  }
  func.func @transform_4(%arg0: i32) -> (i32, i32, i32) {
    %c0_i32 = arith.constant 0 : i32
    %c0_i32_0 = arith.constant 0 : i32
    %c0_i32_1 = arith.constant 0 : i32
    return %arg0, %c0_i32, %c0_i32_0 : i32, i32, i32
  }
  func.func @transform_5(%arg0: i32) -> (i32, i32, i32) {
    %c0_i32 = arith.constant 0 : i32
    %c0_i32_0 = arith.constant 0 : i32
    %c0_i32_1 = arith.constant 0 : i32
    return %arg0, %c0_i32, %c0_i32_0 : i32, i32, i32
  }
  func.func @transform_6(%arg0: i32) -> (i32, i32, i32, i32) {
    %c0_i32 = arith.constant 0 : i32
    %c0_i32_0 = arith.constant 0 : i32
    %c0_i32_1 = arith.constant 0 : i32
    %c0_i32_2 = arith.constant 0 : i32
    return %arg0, %c0_i32, %c0_i32_0, %c0_i32_1 : i32, i32, i32, i32
  }
  func.func @transform_7(%arg0: i32) -> (i32, i32, i32) {
    %c0_i32 = arith.constant 0 : i32
    %c0_i32_0 = arith.constant 0 : i32
    %c0_i32_1 = arith.constant 0 : i32
    return %arg0, %c0_i32, %c0_i32_0 : i32, i32, i32
  }
  func.func @transform_8(%arg0: i32) -> (i32, i32, i32) {
    %c0_i32 = arith.constant 0 : i32
    %c0_i32_0 = arith.constant 0 : i32
    %c0_i32_1 = arith.constant 0 : i32
    return %arg0, %c0_i32, %c0_i32_0 : i32, i32, i32
  }
  func.func @transform_9(%arg0: i32) -> (i32, i32, i32) {
    %c0_i32 = arith.constant 0 : i32
    %c0_i32_0 = arith.constant 0 : i32
    %c0_i32_1 = arith.constant 0 : i32
    return %arg0, %c0_i32, %c0_i32_0 : i32, i32, i32
  }
  func.func @transform_10(%arg0: i32) -> (i32, i32, i32) {
    %c0_i32 = arith.constant 0 : i32
    %c0_i32_0 = arith.constant 0 : i32
    %c0_i32_1 = arith.constant 0 : i32
    return %arg0, %c0_i32, %c0_i32_0 : i32, i32, i32
  }
  func.func @transform_11(%arg0: i32) -> (i32, i32, i32) {
    %c0_i32 = arith.constant 0 : i32
    %c0_i32_0 = arith.constant 0 : i32
    %c0_i32_1 = arith.constant 0 : i32
    return %arg0, %c0_i32, %c0_i32_0 : i32, i32, i32
  }
  func.func @transform_12(%arg0: i32) -> (i32, i32) {
    %c0_i32 = arith.constant 0 : i32
    %c0_i32_0 = arith.constant 0 : i32
    %c0_i32_1 = arith.constant 0 : i32
    return %c0_i32, %c0_i32_0 : i32, i32
  }
  func.func @transform_13(%arg0: i32) -> (i32, i32) {
    %c0_i32 = arith.constant 0 : i32
    %c0_i32_0 = arith.constant 0 : i32
    %c0_i32_1 = arith.constant 0 : i32
    return %c0_i32, %c0_i32_0 : i32, i32
  }
  func.func @transform_14(%arg0: i32) -> (i32, i32) {
    %c0_i32 = arith.constant 0 : i32
    %c0_i32_0 = arith.constant 0 : i32
    %c0_i32_1 = arith.constant 0 : i32
    return %c0_i32, %c0_i32_0 : i32, i32
  }
  func.func @transform_15(%arg0: i32) -> (i32, i32) {
    %c0_i32 = arith.constant 0 : i32
    %c0_i32_0 = arith.constant 0 : i32
    %c0_i32_1 = arith.constant 0 : i32
    return %c0_i32, %c0_i32_0 : i32, i32
  }
}

</mosaic_0001>

<llo_original>
// kernel: vision_transformer_forward.1
$region0: #{vision_transformer_forward.1}
  #allocation0 [shape = 'u32[]', space=smem, size = 0x4, offset = 0x4, fixed_abs, tag = 'smem constant byte address 0x4 - core index']
  #allocation1 [shape = 'u32[144,128]{1,0:T(1,128)}', space=vmem, size = 0x12000, scoped, tag = 'internal scratch']
  #allocation2 [shape = 'f32[10,32]{1,0:T(8,128)}', space=vmem, size = 0x2000, scoped, tag = 'scratch operand']
  %s0 = inlined_call_operand.vmem [shape: bf16[10,192], index: 0, kind: input, shape index: {}]
  %s1 = inlined_call_operand.vmem [shape: bf16[192,32], index: 1, kind: input, shape index: {}]
  %s2 = inlined_call_operand.vmem [shape: f32[5,32], index: 2, kind: input, shape index: {}]
  %s3 = inlined_call_operand.vmem [shape: f32[2,1,32], index: 3, kind: input, shape index: {}]
  %s4 = inlined_call_operand.vmem [shape: f32[2,1,32], index: 4, kind: input, shape index: {}]
  %s5 = inlined_call_operand.vmem [shape: bf16[2,32,96], index: 5, kind: input, shape index: {}]
  %s6 = inlined_call_operand.vmem [shape: bf16[2,4,8,32], index: 6, kind: input, shape index: {}]
  %s7 = inlined_call_operand.vmem [shape: f32[2,1,32], index: 7, kind: input, shape index: {}]
  %s8 = inlined_call_operand.vmem [shape: f32[2,1,32], index: 8, kind: input, shape index: {}]
  %s9 = inlined_call_operand.vmem [shape: bf16[2,32,128], index: 9, kind: input, shape index: {}]
  %s10 = inlined_call_operand.vmem [shape: bf16[2,128,32], index: 10, kind: input, shape index: {}]
  %s11 = inlined_call_operand.vmem [shape: bf16[2,128,32], index: 11, kind: input, shape index: {}]
  %s12 = inlined_call_operand.vmem [shape: f32[1,32], index: 12, kind: input, shape index: {}]
  %s13 = inlined_call_operand.vmem [shape: f32[1,32], index: 13, kind: input, shape index: {}]
  %s14 = inlined_call_operand.vmem [shape: bf16[32,128], index: 14, kind: input, shape index: {}]
  %s15 = inlined_call_operand.hbm [shape: f32[2,128], index: 15, kind: output, shape index: {}]
  %s16 = sld [smem:[#allocation0]]
  $region101: #{vision_transformer_forward.1} parent=0
    _
  %s18 = ssub.s32 1, %s16
  %s19 = scalar_select 0, %s18, %s16
  $region1: #{vision_transformer_forward.1} parent=0
    #allocation3 [shape = 'u8[1024]{0}', space=vmem, size = 0x400, scoped, tag = 'output window, operand 0, single buffered']
    #allocation4 [shape = 's32[2]{0}', space=sflag, size = 0x8, scoped, tag = 'scoped memory for vision_transformer_forward.1']
    %20 = vsyncpa [#allocation4], 0
    loop: start=0, step=1, limit=4
    $region2: #{vision_transformer_forward.1} parent=1 // loop_pre_header
      _
    $region3: #{vision_transformer_forward.1} parent=1 // loop_header
      %s22 = sphi 0, %s26
      %p23 = scmp.ge.s32.totalorder %s22, 4
      %s30 = sphi 0, %s30
      %s32 = sphi 0, %s30
      %s33 = sphi 0, %s32
      %s47 = sphi 0, %s33
      %s51 = sphi 0, %s51
      %s53 = sphi 0, %s51
      %s54 = sphi 0, %s53
      %s68 = sphi 0, %s54
      %s72 = sphi 0, %s72
      %s74 = sphi 0, %s72
      %s75 = sphi 0, %s74
      %s89 = sphi 0, %s75
      %s95 = sphi 0, %s97
      %s98 = sphi 0, %s95
      %s99 = sphi 0, %s98
      %s115 = sphi 0, %s99
      %s121 = sphi 0, %s123
      %s124 = sphi 0, %s121
      %s125 = sphi 0, %s124
      %s141 = sphi 0, %s125
      %s147 = sphi 0, %s149
      %s150 = sphi 0, %s147
      %s151 = sphi 0, %s150
      %s167 = sphi 0, %s151
      %s173 = sphi 0, %s175
      %s176 = sphi 0, %s173
      %s177 = sphi 0, %s176
      %s193 = sphi 0, %s177
      %s199 = sphi 0, %s201
      %s202 = sphi 0, %s199
      %s203 = sphi 0, %s202
      %s219 = sphi 0, %s203
      %s225 = sphi 0, %s227
      %s228 = sphi 0, %s225
      %s229 = sphi 0, %s228
      %s245 = sphi 0, %s229
      %s251 = sphi 0, %s253
      %s254 = sphi 0, %s251
      %s255 = sphi 0, %s254
      %s271 = sphi 0, %s255
      %s277 = sphi 0, %s279
      %s280 = sphi 0, %s277
      %s281 = sphi 0, %s280
      %s297 = sphi 0, %s281
      %s303 = sphi 0, %s305
      %s306 = sphi 0, %s303
      %s307 = sphi 0, %s306
      %s323 = sphi 0, %s307
      %s327 = sphi 0, %s327
      %s329 = sphi 0, %s327
      %s330 = sphi 0, %s329
      %s344 = sphi 0, %s330
      %s348 = sphi 0, %s348
      %s350 = sphi 0, %s348
      %s351 = sphi 0, %s350
      %s365 = sphi 0, %s351
      %s369 = sphi 0, %s369
      %s371 = sphi 0, %s369
      %s372 = sphi 0, %s371
      %s386 = sphi 0, %s372
      %s390 = sphi 0, %s390
      %s392 = sphi 0, %s390
      %s393 = sphi 0, %s392
      %s407 = sphi 0, %s393
    $region4: #{vision_transformer_forward.1} parent=1 // loop_header_branch
      %25 = sbr.rel (%p23) target = $region8
    $region5: #{vision_transformer_forward.1} parent=1 // loop_body
      %s27 = ssub.s32 %s22, 1
      %s28 = ssub.s32 %s22, 2
      %s29 = sadd.s32 %s22, 1
      %s31 = sadd.s32 %s30, 1
      %p34 = scmp.eq.s32.totalorder %s22, 1
      %p35 = scmp.ne.s32.totalorder %s30, %s32
      %p36 = scmp.eq.s32.totalorder %s22, 0
      %p37 = por %p35, %p36
      %p38 = scmp.ne.s32.totalorder %s30, %s32
      %p39 = scmp.eq.s32.totalorder %s27, 1
      %p40 = por %p38, %p39
      %p41 = scmp.ne.s32.totalorder %s32, %s33
      %p42 = scmp.eq.s32.totalorder %s27, 0
      %p43 = por %p41, %p42
      %p44 = scmp.ne.s32.totalorder %s32, %s33
      %p45 = scmp.eq.s32.totalorder %s28, 1
      %p46 = por %p44, %p45
      %p48 = scmp.ne.s32.totalorder %s33, %s47
      %p49 = scmp.eq.s32.totalorder %s28, 0
      %p50 = por %p48, %p49
      %s52 = sadd.s32 %s51, 1
      %p55 = scmp.eq.s32.totalorder %s22, 1
      %p56 = scmp.ne.s32.totalorder %s51, %s53
      %p57 = scmp.eq.s32.totalorder %s22, 0
      %p58 = por %p56, %p57
      %p59 = scmp.ne.s32.totalorder %s51, %s53
      %p60 = scmp.eq.s32.totalorder %s27, 1
      %p61 = por %p59, %p60
      %p62 = scmp.ne.s32.totalorder %s53, %s54
      %p63 = scmp.eq.s32.totalorder %s27, 0
      %p64 = por %p62, %p63
      %p65 = scmp.ne.s32.totalorder %s53, %s54
      %p66 = scmp.eq.s32.totalorder %s28, 1
      %p67 = por %p65, %p66
      %p69 = scmp.ne.s32.totalorder %s54, %s68
      %p70 = scmp.eq.s32.totalorder %s28, 0
      %p71 = por %p69, %p70
      %s73 = sadd.s32 %s72, 1
      %p76 = scmp.eq.s32.totalorder %s22, 1
      %p77 = scmp.ne.s32.totalorder %s72, %s74
      %p78 = scmp.eq.s32.totalorder %s22, 0
      %p79 = por %p77, %p78
      %p80 = scmp.ne.s32.totalorder %s72, %s74
      %p81 = scmp.eq.s32.totalorder %s27, 1
      %p82 = por %p80, %p81
      %p83 = scmp.ne.s32.totalorder %s74, %s75
      %p84 = scmp.eq.s32.totalorder %s27, 0
      %p85 = por %p83, %p84
      %p86 = scmp.ne.s32.totalorder %s74, %s75
      %p87 = scmp.eq.s32.totalorder %s28, 1
      %p88 = por %p86, %p87
      %p90 = scmp.ne.s32.totalorder %s75, %s89
      %p91 = scmp.eq.s32.totalorder %s28, 0
      %p92 = por %p90, %p91
      %s93 = ssub.s32 %s22, %s29
      %p94 = scmp.eq.s32.totalorder %s93, 0
      %s96 = sadd.s32 %s95, 1
      %s97 = scalar_select %p94, %s95, %s96
      %p100 = pneg %p94
      %p101 = scmp.eq.s32.totalorder %s22, 1
      %p102 = por %p100, %p101
      %p103 = scmp.ne.s32.totalorder %s95, %s98
      %p104 = scmp.eq.s32.totalorder %s22, 0
      %p105 = por %p103, %p104
      %p106 = scmp.ne.s32.totalorder %s95, %s98
      %p107 = scmp.eq.s32.totalorder %s27, 1
      %p108 = por %p106, %p107
      %p109 = scmp.ne.s32.totalorder %s98, %s99
      %p110 = scmp.eq.s32.totalorder %s27, 0
      %p111 = por %p109, %p110
      %p112 = scmp.ne.s32.totalorder %s98, %s99
      %p113 = scmp.eq.s32.totalorder %s28, 1
      %p114 = por %p112, %p113
      %p116 = scmp.ne.s32.totalorder %s99, %s115
      %p117 = scmp.eq.s32.totalorder %s28, 0
      %p118 = por %p116, %p117
      %s119 = ssub.s32 %s22, %s29
      %p120 = scmp.eq.s32.totalorder %s119, 0
      %s122 = sadd.s32 %s121, 1
      %s123 = scalar_select %p120, %s121, %s122
      %p126 = pneg %p120
      %p127 = scmp.eq.s32.totalorder %s22, 1
      %p128 = por %p126, %p127
      %p129 = scmp.ne.s32.totalorder %s121, %s124
      %p130 = scmp.eq.s32.totalorder %s22, 0
      %p131 = por %p129, %p130
      %p132 = scmp.ne.s32.totalorder %s121, %s124
      %p133 = scmp.eq.s32.totalorder %s27, 1
      %p134 = por %p132, %p133
      %p135 = scmp.ne.s32.totalorder %s124, %s125
      %p136 = scmp.eq.s32.totalorder %s27, 0
      %p137 = por %p135, %p136
      %p138 = scmp.ne.s32.totalorder %s124, %s125
      %p139 = scmp.eq.s32.totalorder %s28, 1
      %p140 = por %p138, %p139
      %p142 = scmp.ne.s32.totalorder %s125, %s141
      %p143 = scmp.eq.s32.totalorder %s28, 0
      %p144 = por %p142, %p143
      %s145 = ssub.s32 %s22, %s29
      %p146 = scmp.eq.s32.totalorder %s145, 0
      %s148 = sadd.s32 %s147, 1
      %s149 = scalar_select %p146, %s147, %s148
      %p152 = pneg %p146
      %p153 = scmp.eq.s32.totalorder %s22, 1
      %p154 = por %p152, %p153
      %p155 = scmp.ne.s32.totalorder %s147, %s150
      %p156 = scmp.eq.s32.totalorder %s22, 0
      %p157 = por %p155, %p156
      %p158 = scmp.ne.s32.totalorder %s147, %s150
      %p159 = scmp.eq.s32.totalorder %s27, 1
      %p160 = por %p158, %p159
      %p161 = scmp.ne.s32.totalorder %s150, %s151
      %p162 = scmp.eq.s32.totalorder %s27, 0
      %p163 = por %p161, %p162
      %p164 = scmp.ne.s32.totalorder %s150, %s151
      %p165 = scmp.eq.s32.totalorder %s28, 1
      %p166 = por %p164, %p165
      %p168 = scmp.ne.s32.totalorder %s151, %s167
      %p169 = scmp.eq.s32.totalorder %s28, 0
      %p170 = por %p168, %p169
      %s171 = ssub.s32 %s22, %s29
      %p172 = scmp.eq.s32.totalorder %s171, 0
      %s174 = sadd.s32 %s173, 1
      %s175 = scalar_select %p172, %s173, %s174
      %p178 = pneg %p172
      %p179 = scmp.eq.s32.totalorder %s22, 1
      %p180 = por %p178, %p179
      %p181 = scmp.ne.s32.totalorder %s173, %s176
      %p182 = scmp.eq.s32.totalorder %s22, 0
      %p183 = por %p181, %p182
      %p184 = scmp.ne.s32.totalorder %s173, %s176
      %p185 = scmp.eq.s32.totalorder %s27, 1
      %p186 = por %p184, %p185
      %p187 = scmp.ne.s32.totalorder %s176, %s177
      %p188 = scmp.eq.s32.totalorder %s27, 0
      %p189 = por %p187, %p188
      %p190 = scmp.ne.s32.totalorder %s176, %s177
      %p191 = scmp.eq.s32.totalorder %s28, 1
      %p192 = por %p190, %p191
      %p194 = scmp.ne.s32.totalorder %s177, %s193
      %p195 = scmp.eq.s32.totalorder %s28, 0
      %p196 = por %p194, %p195
      %s197 = ssub.s32 %s22, %s29
      %p198 = scmp.eq.s32.totalorder %s197, 0
      %s200 = sadd.s32 %s199, 1
      %s201 = scalar_select %p198, %s199, %s200
      %p204 = pneg %p198
      %p205 = scmp.eq.s32.totalorder %s22, 1
      %p206 = por %p204, %p205
      %p207 = scmp.ne.s32.totalorder %s199, %s202
      %p208 = scmp.eq.s32.totalorder %s22, 0
      %p209 = por %p207, %p208
      %p210 = scmp.ne.s32.totalorder %s199, %s202
      %p211 = scmp.eq.s32.totalorder %s27, 1
      %p212 = por %p210, %p211
      %p213 = scmp.ne.s32.totalorder %s202, %s203
      %p214 = scmp.eq.s32.totalorder %s27, 0
      %p215 = por %p213, %p214
      %p216 = scmp.ne.s32.totalorder %s202, %s203
      %p217 = scmp.eq.s32.totalorder %s28, 1
      %p218 = por %p216, %p217
      %p220 = scmp.ne.s32.totalorder %s203, %s219
      %p221 = scmp.eq.s32.totalorder %s28, 0
      %p222 = por %p220, %p221
      %s223 = ssub.s32 %s22, %s29
      %p224 = scmp.eq.s32.totalorder %s223, 0
      %s226 = sadd.s32 %s225, 1
      %s227 = scalar_select %p224, %s225, %s226
      %p230 = pneg %p224
      %p231 = scmp.eq.s32.totalorder %s22, 1
      %p232 = por %p230, %p231
      %p233 = scmp.ne.s32.totalorder %s225, %s228
      %p234 = scmp.eq.s32.totalorder %s22, 0
      %p235 = por %p233, %p234
      %p236 = scmp.ne.s32.totalorder %s225, %s228
      %p237 = scmp.eq.s32.totalorder %s27, 1
      %p238 = por %p236, %p237
      %p239 = scmp.ne.s32.totalorder %s228, %s229
      %p240 = scmp.eq.s32.totalorder %s27, 0
      %p241 = por %p239, %p240
      %p242 = scmp.ne.s32.totalorder %s228, %s229
      %p243 = scmp.eq.s32.totalorder %s28, 1
      %p244 = por %p242, %p243
      %p246 = scmp.ne.s32.totalorder %s229, %s245
      %p247 = scmp.eq.s32.totalorder %s28, 0
      %p248 = por %p246, %p247
      %s249 = ssub.s32 %s22, %s29
      %p250 = scmp.eq.s32.totalorder %s249, 0
      %s252 = sadd.s32 %s251, 1
      %s253 = scalar_select %p250, %s251, %s252
      %p256 = pneg %p250
      %p257 = scmp.eq.s32.totalorder %s22, 1
      %p258 = por %p256, %p257
      %p259 = scmp.ne.s32.totalorder %s251, %s254
      %p260 = scmp.eq.s32.totalorder %s22, 0
      %p261 = por %p259, %p260
      %p262 = scmp.ne.s32.totalorder %s251, %s254
      %p263 = scmp.eq.s32.totalorder %s27, 1
      %p264 = por %p262, %p263
      %p265 = scmp.ne.s32.totalorder %s254, %s255
      %p266 = scmp.eq.s32.totalorder %s27, 0
      %p267 = por %p265, %p266
      %p268 = scmp.ne.s32.totalorder %s254, %s255
      %p269 = scmp.eq.s32.totalorder %s28, 1
      %p270 = por %p268, %p269
      %p272 = scmp.ne.s32.totalorder %s255, %s271
      %p273 = scmp.eq.s32.totalorder %s28, 0
      %p274 = por %p272, %p273
      %s275 = ssub.s32 %s22, %s29
      %p276 = scmp.eq.s32.totalorder %s275, 0
      %s278 = sadd.s32 %s277, 1
      %s279 = scalar_select %p276, %s277, %s278
      %p282 = pneg %p276
      %p283 = scmp.eq.s32.totalorder %s22, 1
      %p284 = por %p282, %p283
      %p285 = scmp.ne.s32.totalorder %s277, %s280
      %p286 = scmp.eq.s32.totalorder %s22, 0
      %p287 = por %p285, %p286
      %p288 = scmp.ne.s32.totalorder %s277, %s280
      %p289 = scmp.eq.s32.totalorder %s27, 1
      %p290 = por %p288, %p289
      %p291 = scmp.ne.s32.totalorder %s280, %s281
      %p292 = scmp.eq.s32.totalorder %s27, 0
      %p293 = por %p291, %p292
      %p294 = scmp.ne.s32.totalorder %s280, %s281
      %p295 = scmp.eq.s32.totalorder %s28, 1
      %p296 = por %p294, %p295
      %p298 = scmp.ne.s32.totalorder %s281, %s297
      %p299 = scmp.eq.s32.totalorder %s28, 0
      %p300 = por %p298, %p299
      %s301 = ssub.s32 %s22, %s29
      %p302 = scmp.eq.s32.totalorder %s301, 0
      %s304 = sadd.s32 %s303, 1
      %s305 = scalar_select %p302, %s303, %s304
      %p308 = pneg %p302
      %p309 = scmp.eq.s32.totalorder %s22, 1
      %p310 = por %p308, %p309
      %p311 = scmp.ne.s32.totalorder %s303, %s306
      %p312 = scmp.eq.s32.totalorder %s22, 0
      %p313 = por %p311, %p312
      %p314 = scmp.ne.s32.totalorder %s303, %s306
      %p315 = scmp.eq.s32.totalorder %s27, 1
      %p316 = por %p314, %p315
      %p317 = scmp.ne.s32.totalorder %s306, %s307
      %p318 = scmp.eq.s32.totalorder %s27, 0
      %p319 = por %p317, %p318
      %p320 = scmp.ne.s32.totalorder %s306, %s307
      %p321 = scmp.eq.s32.totalorder %s28, 1
      %p322 = por %p320, %p321
      %p324 = scmp.ne.s32.totalorder %s307, %s323
      %p325 = scmp.eq.s32.totalorder %s28, 0
      %p326 = por %p324, %p325
      %s328 = sadd.s32 %s327, 1
      %p331 = scmp.eq.s32.totalorder %s22, 1
      %p332 = scmp.ne.s32.totalorder %s327, %s329
      %p333 = scmp.eq.s32.totalorder %s22, 0
      %p334 = por %p332, %p333
      %p335 = scmp.ne.s32.totalorder %s327, %s329
      %p336 = scmp.eq.s32.totalorder %s27, 1
      %p337 = por %p335, %p336
      %p338 = scmp.ne.s32.totalorder %s329, %s330
      %p339 = scmp.eq.s32.totalorder %s27, 0
      %p340 = por %p338, %p339
      %p341 = scmp.ne.s32.totalorder %s329, %s330
      %p342 = scmp.eq.s32.totalorder %s28, 1
      %p343 = por %p341, %p342
      %p345 = scmp.ne.s32.totalorder %s330, %s344
      %p346 = scmp.eq.s32.totalorder %s28, 0
      %p347 = por %p345, %p346
      %s349 = sadd.s32 %s348, 1
      %p352 = scmp.eq.s32.totalorder %s22, 1
      %p353 = scmp.ne.s32.totalorder %s348, %s350
      %p354 = scmp.eq.s32.totalorder %s22, 0
      %p355 = por %p353, %p354
      %p356 = scmp.ne.s32.totalorder %s348, %s350
      %p357 = scmp.eq.s32.totalorder %s27, 1
      %p358 = por %p356, %p357
      %p359 = scmp.ne.s32.totalorder %s350, %s351
      %p360 = scmp.eq.s32.totalorder %s27, 0
      %p361 = por %p359, %p360
      %p362 = scmp.ne.s32.totalorder %s350, %s351
      %p363 = scmp.eq.s32.totalorder %s28, 1
      %p364 = por %p362, %p363
      %p366 = scmp.ne.s32.totalorder %s351, %s365
      %p367 = scmp.eq.s32.totalorder %s28, 0
      %p368 = por %p366, %p367
      %s370 = sadd.s32 %s369, 1
      %p373 = scmp.eq.s32.totalorder %s22, 1
      %p374 = scmp.ne.s32.totalorder %s369, %s371
      %p375 = scmp.eq.s32.totalorder %s22, 0
      %p376 = por %p374, %p375
      %p377 = scmp.ne.s32.totalorder %s369, %s371
      %p378 = scmp.eq.s32.totalorder %s27, 1
      %p379 = por %p377, %p378
      %p380 = scmp.ne.s32.totalorder %s371, %s372
      %p381 = scmp.eq.s32.totalorder %s27, 0
      %p382 = por %p380, %p381
      %p383 = scmp.ne.s32.totalorder %s371, %s372
      %p384 = scmp.eq.s32.totalorder %s28, 1
      %p385 = por %p383, %p384
      %p387 = scmp.ne.s32.totalorder %s372, %s386
      %p388 = scmp.eq.s32.totalorder %s28, 0
      %p389 = por %p387, %p388
      %s391 = sadd.s32 %s390, 1
      %p394 = scmp.eq.s32.totalorder %s22, 1
      %p395 = scmp.ne.s32.totalorder %s390, %s392
      %p396 = scmp.eq.s32.totalorder %s22, 0
      %p397 = por %p395, %p396
      %p398 = scmp.ne.s32.totalorder %s390, %s392
      %p399 = scmp.eq.s32.totalorder %s27, 1
      %p400 = por %p398, %p399
      %p401 = scmp.ne.s32.totalorder %s392, %s393
      %p402 = scmp.eq.s32.totalorder %s27, 0
      %p403 = por %p401, %p402
      %p404 = scmp.ne.s32.totalorder %s392, %s393
      %p405 = scmp.eq.s32.totalorder %s28, 1
      %p406 = por %p404, %p405
      %p408 = scmp.ne.s32.totalorder %s393, %s407
      %p409 = scmp.eq.s32.totalorder %s28, 0
      %p410 = por %p408, %p409
      %p411 = scmp.le.s32.totalorder 1, %s22
      %p412 = scmp.lt.s32.totalorder %s22, 3
      %p413 = pnand %p411, %p412
      %p414 = pneg %p413
      // Predicated region
      $region9: #{vision_transformer_forward.1} parent=5 // pred_check
        _
      $region10: #{vision_transformer_forward.1} parent=5 // pred_check_branch
        %416 = sbr.rel (%p413) target = $region12
      $region11: #{vision_transformer_forward.1} parent=5 // pred_region
        %s417 = ssub.s32 %s22, 1
        // Predicated region
        $region13: #{vision_transformer_forward.1} parent=11 // pred_check
          %p418 = pneg %p43
        $region14: #{vision_transformer_forward.1} parent=11 // pred_check_branch
          %420 = sbr.rel (%p418) target = $region16
        $region15: #{vision_transformer_forward.1} parent=11 // pred_region
          _
        $region16: #{vision_transformer_forward.1} parent=11 // pred_fallthru
          _
        // Predicated region
        $region17: #{vision_transformer_forward.1} parent=11 // pred_check
          %p421 = pneg %p64
        $region18: #{vision_transformer_forward.1} parent=11 // pred_check_branch
          %423 = sbr.rel (%p421) target = $region20
        $region19: #{vision_transformer_forward.1} parent=11 // pred_region
          _
        $region20: #{vision_transformer_forward.1} parent=11 // pred_fallthru
          _
        // Predicated region
        $region21: #{vision_transformer_forward.1} parent=11 // pred_check
          %p424 = pneg %p85
        $region22: #{vision_transformer_forward.1} parent=11 // pred_check_branch
          %426 = sbr.rel (%p424) target = $region24
        $region23: #{vision_transformer_forward.1} parent=11 // pred_region
          _
        $region24: #{vision_transformer_forward.1} parent=11 // pred_fallthru
          _
        // Predicated region
        $region25: #{vision_transformer_forward.1} parent=11 // pred_check
          %p427 = pneg %p340
        $region26: #{vision_transformer_forward.1} parent=11 // pred_check_branch
          %429 = sbr.rel (%p427) target = $region28
        $region27: #{vision_transformer_forward.1} parent=11 // pred_region
          _
        $region28: #{vision_transformer_forward.1} parent=11 // pred_fallthru
          _
        // Predicated region
        $region29: #{vision_transformer_forward.1} parent=11 // pred_check
          %p430 = pneg %p361
        $region30: #{vision_transformer_forward.1} parent=11 // pred_check_branch
          %432 = sbr.rel (%p430) target = $region32
        $region31: #{vision_transformer_forward.1} parent=11 // pred_region
          _
        $region32: #{vision_transformer_forward.1} parent=11 // pred_fallthru
          _
        // Predicated region
        $region33: #{vision_transformer_forward.1} parent=11 // pred_check
          %p433 = pneg %p382
        $region34: #{vision_transformer_forward.1} parent=11 // pred_check_branch
          %435 = sbr.rel (%p433) target = $region36
        $region35: #{vision_transformer_forward.1} parent=11 // pred_region
          _
        $region36: #{vision_transformer_forward.1} parent=11 // pred_fallthru
          _
      $region12: #{vision_transformer_forward.1} parent=5 // pred_fallthru
        _
      %p436 = scmp.lt.s32.totalorder %s22, 2
      // Predicated region
      $region37: #{vision_transformer_forward.1} parent=5 // pred_check
        %p437 = pneg %p436
      $region38: #{vision_transformer_forward.1} parent=5 // pred_check_branch
        %439 = sbr.rel (%p437) target = $region40
      $region39: #{vision_transformer_forward.1} parent=5 // pred_region
        // Predicated region
        $region41: #{vision_transformer_forward.1} parent=39 // pred_check
          %p440 = pneg %p105
        $region42: #{vision_transformer_forward.1} parent=39 // pred_check_branch
          %442 = sbr.rel (%p440) target = $region44
        $region43: #{vision_transformer_forward.1} parent=39 // pred_region
          %p443 = scmp.lt.s32.totalorder %s22, 1
          %s444 = scalar_select %p443, %s22, 1
          %s445 = scalar_lea.vmem %s3, %s444
        $region44: #{vision_transformer_forward.1} parent=39 // pred_fallthru
          _
        // Predicated region
        $region45: #{vision_transformer_forward.1} parent=39 // pred_check
          %p446 = pneg %p131
        $region46: #{vision_transformer_forward.1} parent=39 // pred_check_branch
          %448 = sbr.rel (%p446) target = $region48
        $region47: #{vision_transformer_forward.1} parent=39 // pred_region
          %p449 = scmp.lt.s32.totalorder %s22, 1
          %s450 = scalar_select %p449, %s22, 1
          %s451 = scalar_lea.vmem %s4, %s450
        $region48: #{vision_transformer_forward.1} parent=39 // pred_fallthru
          _
        // Predicated region
        $region49: #{vision_transformer_forward.1} parent=39 // pred_check
          %p452 = pneg %p157
        $region50: #{vision_transformer_forward.1} parent=39 // pred_check_branch
          %454 = sbr.rel (%p452) target = $region52
        $region51: #{vision_transformer_forward.1} parent=39 // pred_region
          %p455 = scmp.lt.s32.totalorder %s22, 1
          %s456 = scalar_select %p455, %s22, 1
          %s457 = smul.addr %s456, 4
          %s458 = smul.addr %s457, 4
          %s459 = scalar_lea.vmem %s5, %s458
        $region52: #{vision_transformer_forward.1} parent=39 // pred_fallthru
          _
        // Predicated region
        $region53: #{vision_transformer_forward.1} parent=39 // pred_check
          %p460 = pneg %p183
        $region54: #{vision_transformer_forward.1} parent=39 // pred_check_branch
          %462 = sbr.rel (%p460) target = $region56
        $region55: #{vision_transformer_forward.1} parent=39 // pred_region
          %p463 = scmp.lt.s32.totalorder %s22, 1
          %s464 = scalar_select %p463, %s22, 1
          %s465 = smul.addr %s464, 4
          %s466 = smul.addr %s465, 4
          %s467 = scalar_lea.vmem %s6, %s466
        $region56: #{vision_transformer_forward.1} parent=39 // pred_fallthru
          _
        // Predicated region
        $region57: #{vision_transformer_forward.1} parent=39 // pred_check
          %p468 = pneg %p209
        $region58: #{vision_transformer_forward.1} parent=39 // pred_check_branch
          %470 = sbr.rel (%p468) target = $region60
        $region59: #{vision_transformer_forward.1} parent=39 // pred_region
          %p471 = scmp.lt.s32.totalorder %s22, 1
          %s472 = scalar_select %p471, %s22, 1
          %s473 = scalar_lea.vmem %s7, %s472
        $region60: #{vision_transformer_forward.1} parent=39 // pred_fallthru
          _
        // Predicated region
        $region61: #{vision_transformer_forward.1} parent=39 // pred_check
          %p474 = pneg %p235
        $region62: #{vision_transformer_forward.1} parent=39 // pred_check_branch
          %476 = sbr.rel (%p474) target = $region64
        $region63: #{vision_transformer_forward.1} parent=39 // pred_region
          %p477 = scmp.lt.s32.totalorder %s22, 1
          %s478 = scalar_select %p477, %s22, 1
          %s479 = scalar_lea.vmem %s8, %s478
        $region64: #{vision_transformer_forward.1} parent=39 // pred_fallthru
          _
        // Predicated region
        $region65: #{vision_transformer_forward.1} parent=39 // pred_check
          %p480 = pneg %p261
        $region66: #{vision_transformer_forward.1} parent=39 // pred_check_branch
          %482 = sbr.rel (%p480) target = $region68
        $region67: #{vision_transformer_forward.1} parent=39 // pred_region
          %p483 = scmp.lt.s32.totalorder %s22, 1
          %s484 = scalar_select %p483, %s22, 1
          %s485 = smul.addr %s484, 4
          %s486 = smul.addr %s485, 4
          %s487 = scalar_lea.vmem %s9, %s486
        $region68: #{vision_transformer_forward.1} parent=39 // pred_fallthru
          _
        // Predicated region
        $region69: #{vision_transformer_forward.1} parent=39 // pred_check
          %p488 = pneg %p287
        $region70: #{vision_transformer_forward.1} parent=39 // pred_check_branch
          %490 = sbr.rel (%p488) target = $region72
        $region71: #{vision_transformer_forward.1} parent=39 // pred_region
          %p491 = scmp.lt.s32.totalorder %s22, 1
          %s492 = scalar_select %p491, %s22, 1
          %s493 = smul.addr %s492, 16
          %s494 = smul.addr %s493, 4
          %s495 = scalar_lea.vmem %s10, %s494
        $region72: #{vision_transformer_forward.1} parent=39 // pred_fallthru
          _
        // Predicated region
        $region73: #{vision_transformer_forward.1} parent=39 // pred_check
          %p496 = pneg %p313
        $region74: #{vision_transformer_forward.1} parent=39 // pred_check_branch
          %498 = sbr.rel (%p496) target = $region76
        $region75: #{vision_transformer_forward.1} parent=39 // pred_region
          %p499 = scmp.lt.s32.totalorder %s22, 1
          %s500 = scalar_select %p499, %s22, 1
          %s501 = smul.addr %s500, 16
          %s502 = smul.addr %s501, 4
          %s503 = scalar_lea.vmem %s11, %s502
        $region76: #{vision_transformer_forward.1} parent=39 // pred_fallthru
          _
      $region40: #{vision_transformer_forward.1} parent=5 // pred_fallthru
        _
      %p504 = scmp.le.s32.totalorder 1, %s22
      %p505 = scmp.lt.s32.totalorder %s22, 3
      %p506 = pnand %p504, %p505
      %p507 = pneg %p506
      // Predicated region
      $region77: #{vision_transformer_forward.1} parent=5 // pred_check
        _
      $region78: #{vision_transformer_forward.1} parent=5 // pred_check_branch
        %509 = sbr.rel (%p506) target = $region80
      $region79: #{vision_transformer_forward.1} parent=5 // pred_region
        %s510 = ssub.s32 %s22, 1
        %p511 = pneg %p43
        %p512 = pneg %p40
        %p513 = pneg %p64
        %p514 = pneg %p61
        %p515 = pneg %p85
        %p516 = pneg %p82
        %p517 = scmp.lt.s32.totalorder %s27, 1
        %s518 = scalar_select %p517, %s27, 1
        %s519 = scalar_lea.vmem %s3, %s518
        %p520 = pneg %p111
        %p521 = pneg %p108
        %p522 = scmp.lt.s32.totalorder %s27, 1
        %s523 = scalar_select %p522, %s27, 1
        %s524 = scalar_lea.vmem %s4, %s523
        %p525 = pneg %p137
        %p526 = pneg %p134
        %p527 = scmp.lt.s32.totalorder %s27, 1
        %s528 = scalar_select %p527, %s27, 1
        %s529 = smul.addr %s528, 4
        %s530 = smul.addr %s529, 4
        %s531 = scalar_lea.vmem %s5, %s530
        %p532 = pneg %p163
        %p533 = pneg %p160
        %p534 = scmp.lt.s32.totalorder %s27, 1
        %s535 = scalar_select %p534, %s27, 1
        %s536 = smul.addr %s535, 4
        %s537 = smul.addr %s536, 4
        %s538 = scalar_lea.vmem %s6, %s537
        %p539 = pneg %p189
        %p540 = pneg %p186
        %p541 = scmp.lt.s32.totalorder %s27, 1
        %s542 = scalar_select %p541, %s27, 1
        %s543 = scalar_lea.vmem %s7, %s542
        %p544 = pneg %p215
        %p545 = pneg %p212
        %p546 = scmp.lt.s32.totalorder %s27, 1
        %s547 = scalar_select %p546, %s27, 1
        %s548 = scalar_lea.vmem %s8, %s547
        %p549 = pneg %p241
        %p550 = pneg %p238
        %p551 = scmp.lt.s32.totalorder %s27, 1
        %s552 = scalar_select %p551, %s27, 1
        %s553 = smul.addr %s552, 4
        %s554 = smul.addr %s553, 4
        %s555 = scalar_lea.vmem %s9, %s554
        %p556 = pneg %p267
        %p557 = pneg %p264
        %p558 = scmp.lt.s32.totalorder %s27, 1
        %s559 = scalar_select %p558, %s27, 1
        %s560 = smul.addr %s559, 16
        %s561 = smul.addr %s560, 4
        %s562 = scalar_lea.vmem %s10, %s561
        %p563 = pneg %p293
        %p564 = pneg %p290
        %p565 = scmp.lt.s32.totalorder %s27, 1
        %s566 = scalar_select %p565, %s27, 1
        %s567 = smul.addr %s566, 16
        %s568 = smul.addr %s567, 4
        %s569 = scalar_lea.vmem %s11, %s568
        %p570 = pneg %p319
        %p571 = pneg %p316
        %p572 = pneg %p340
        %p573 = pneg %p337
        %p574 = pneg %p361
        %p575 = pneg %p358
        %p576 = pneg %p382
        %p577 = pneg %p379
        %p578 = pneg %p403
        %p579 = pneg %p400
        %p580 = scmp.lt.s32.totalorder %s27, 1
        %s581 = scalar_select %p580, %s27, 1
        %s582 = scalar_lea.vmem %s3, %s581
        %p583 = scmp.lt.s32.totalorder %s27, 1
        %s584 = scalar_select %p583, %s27, 1
        %s585 = scalar_lea.vmem %s4, %s584
        %p586 = scmp.lt.s32.totalorder %s27, 1
        %s587 = scalar_select %p586, %s27, 1
        %s588 = smul.addr %s587, 4
        %s589 = smul.addr %s588, 4
        %s590 = scalar_lea.vmem %s5, %s589
        %p591 = scmp.lt.s32.totalorder %s27, 1
        %s592 = scalar_select %p591, %s27, 1
        %s593 = smul.addr %s592, 4
        %s594 = smul.addr %s593, 4
        %s595 = scalar_lea.vmem %s6, %s594
        %p596 = scmp.lt.s32.totalorder %s27, 1
        %s597 = scalar_select %p596, %s27, 1
        %s598 = scalar_lea.vmem %s7, %s597
        %p599 = scmp.lt.s32.totalorder %s27, 1
        %s600 = scalar_select %p599, %s27, 1
        %s601 = scalar_lea.vmem %s8, %s600
        %p602 = scmp.lt.s32.totalorder %s27, 1
        %s603 = scalar_select %p602, %s27, 1
        %s604 = smul.addr %s603, 4
        %s605 = smul.addr %s604, 4
        %s606 = scalar_lea.vmem %s9, %s605
        %p607 = scmp.lt.s32.totalorder %s27, 1
        %s608 = scalar_select %p607, %s27, 1
        %s609 = smul.addr %s608, 16
        %s610 = smul.addr %s609, 4
        %s611 = scalar_lea.vmem %s10, %s610
        %p612 = scmp.lt.s32.totalorder %s27, 1
        %s613 = scalar_select %p612, %s27, 1
        %s614 = smul.addr %s613, 16
        %s615 = smul.addr %s614, 4
        %s616 = scalar_lea.vmem %s11, %s615
        %p618 = scmp.eq.s32.totalorder %s27, 0
        // Predicated region
        $region81: #{vision_transformer_forward.1} parent=79 // pred_check
          %p619 = pneg %p618
        $region82: #{vision_transformer_forward.1} parent=79 // pred_check_branch
          %621 = sbr.rel (%p619) target = $region84
        $region83: #{vision_transformer_forward.1} parent=79 // pred_region
          %v622 = vld [vmem:[%s0] sm:$0xff]
          %v623 = vld [vmem:[%s0 + $0x8] sm:$0x11]
          %v624 = vld [vmem:[%s1] sm:$0xf]
          %v625 = vld [vmem:[%s1 + $0x4] sm:$0xf]
          %v626 = vld [vmem:[%s1 + $0x8] sm:$0xf]
          %v627 = vld [vmem:[%s1 + $0xc] sm:$0xf]
          %v628 = vld [vmem:[%s1 + $0x10] sm:$0xf]
          %v629 = vld [vmem:[%s1 + $0x14] sm:$0xf]
          %v630 = vld [vmem:[%s1 + $0x18] sm:$0xf]
          %v631 = vld [vmem:[%s1 + $0x1c] sm:$0xf]
          %v632 = vld [vmem:[%s1 + $0x20] sm:$0xf]
          %v633 = vld [vmem:[%s1 + $0x24] sm:$0xf]
          %v634 = vld [vmem:[%s1 + $0x28] sm:$0xf]
          %v635 = vld [vmem:[%s1 + $0x2c] sm:$0xf]
          %v636 = vld [vmem:[%s1 + $0x30] sm:$0xf]
          %v637 = vld [vmem:[%s1 + $0x34] sm:$0xf]
          %v638 = vld [vmem:[%s1 + $0x38] sm:$0xf]
          %v639 = vld [vmem:[%s1 + $0x3c] sm:$0xf]
          %v640 = vld [vmem:[%s1 + $0x40] sm:$0xf]
          %v641 = vld [vmem:[%s1 + $0x44] sm:$0xf]
          %v642 = vld [vmem:[%s1 + $0x48] sm:$0xf]
          %v643 = vld [vmem:[%s1 + $0x4c] sm:$0xf]
          %v644 = vld [vmem:[%s1 + $0x50] sm:$0xf]
          %v645 = vld [vmem:[%s1 + $0x54] sm:$0xf]
          %v646 = vld [vmem:[%s1 + $0x58] sm:$0xf]
          %v647 = vld [vmem:[%s1 + $0x5c] sm:$0xf]
          %v650 = vunpack.c.l.b16 %v622
          %v651 = vunpack.c.h.b16 %v622
          %v652 = vunpack.c.l.b16 %v623
          %v653 = vunpack.c.h.b16 %v623
          %v654 = vpack.c.b16 %v652, %v650
          %v655 = vpack.c.b16 %v653, %v651
          %v681 = vunpack.c.l.b16 %v624
          %v682 = vunpack.c.l.b16 %v625
          %v683 = vunpack.c.l.b16 %v626
          %v684 = vunpack.c.l.b16 %v627
          %v685 = vunpack.c.l.b16 %v628
          %v686 = vunpack.c.l.b16 %v629
          %v687 = vunpack.c.l.b16 %v630
          %v688 = vunpack.c.l.b16 %v631
          %v689 = vunpack.c.l.b16 %v632
          %v690 = vunpack.c.l.b16 %v633
          %v691 = vunpack.c.l.b16 %v634
          %v692 = vunpack.c.l.b16 %v635
          %v693 = vunpack.c.l.b16 %v636
          %v694 = vunpack.c.l.b16 %v637
          %v695 = vunpack.c.l.b16 %v638
          %v696 = vunpack.c.l.b16 %v639
          %v697 = vunpack.c.l.b16 %v640
          %v698 = vunpack.c.l.b16 %v641
          %v699 = vunpack.c.l.b16 %v642
          %v700 = vunpack.c.l.b16 %v643
          %v701 = vunpack.c.l.b16 %v644
          %v702 = vunpack.c.l.b16 %v645
          %v703 = vunpack.c.l.b16 %v646
          %v704 = vunpack.c.l.b16 %v647
          %v705 = vpack.c.b16 %v682, %v681
          %v706 = vpack.c.b16 %v684, %v683
          %v707 = vpack.c.b16 %v686, %v685
          %v708 = vpack.c.b16 %v688, %v687
          %v709 = vpack.c.b16 %v690, %v689
          %v710 = vpack.c.b16 %v692, %v691
          %v711 = vpack.c.b16 %v694, %v693
          %v712 = vpack.c.b16 %v696, %v695
          %v713 = vpack.c.b16 %v698, %v697
          %v714 = vpack.c.b16 %v700, %v699
          %v715 = vpack.c.b16 %v702, %v701
          %v716 = vpack.c.b16 %v704, %v703
          %vm729 = vcmask 523264
          %v731 = vsel %vm729, %v655, 0
          %733 = vmatprep.subr.bf16.mxu0 0
          %734 = vmatpush1.bf16.msra.mxu0 %v712
          %735 = vmatprep.subr.bf16.mxu0 0
          %736 = vmatpush1.bf16.msra.mxu0 %v711
          %737 = vmatprep.subr.bf16.mxu0 0
          %738 = vmatpush1.bf16.msra.mxu0 %v710
          %739 = vmatprep.subr.bf16.mxu0 0
          %740 = vmatpush1.bf16.msra.mxu0 %v709
          %741 = vmatprep.subr.bf16.mxu0 0
          %742 = vmatpush1.bf16.msra.mxu0 %v708
          %743 = vmatprep.subr.bf16.mxu0 0
          %744 = vmatpush1.bf16.msra.mxu0 %v707
          %745 = vmatprep.subr.bf16.mxu0 0
          %746 = vmatpush1.bf16.msra.mxu0 %v706
          %747 = vmatprep.subr.bf16.mxu0 0
          %748 = vmatpush1.bf16.msra.mxu0 %v705
          %749 = vmatprep.subr.bf16.mxu0 0
          %750 = vmatpush2.bf16.msra.mxu0 0
          %751 = vmatprep.subr.bf16.mxu0 0
          %752 = vmatpush2.bf16.msra.mxu0 0
          %753 = vmatprep.subr.bf16.mxu0 0
          %754 = vmatpush2.bf16.msra.mxu0 0
          %755 = vmatprep.subr.bf16.mxu0 0
          %756 = vmatpush2.bf16.msra.mxu0 0
          %757 = vmatprep.subr.bf16.mxu0 0
          %758 = vmatpush2.bf16.msra.mxu0 %v716
          %759 = vmatprep.subr.bf16.mxu0 0
          %760 = vmatpush2.bf16.msra.mxu0 %v715
          %761 = vmatprep.subr.bf16.mxu0 0
          %762 = vmatpush2.bf16.msra.mxu0 %v714
          %763 = vmatprep.subr.bf16.mxu0 0
          %764 = vmatpush2.bf16.msra.mxu0 %v713
          %765 = vmatprep.mubr.bf16.mxu0 %v731
          %766 = vmatmul.mubr.bf16.gmra.mxu0 %v654
          %v767 = vpop.f32.mrf.mxu0
          %v768 = vadd.f32 0.0, %v767
          %v769 = vpop.f32.mrf.mxu0
          %v770 = vpop.f32.mrf.mxu0
          %v771 = vadd.f32 0.0, %v770
          %v772 = vpop.f32.mrf.mxu0
          %773 = vdwg.mxu0
          %v776 = vcombine.high %v768, %v768
          %v778 = vunpack.c.l.s4 1966171168
          %v779 = vunpack.c.0.s8 %v778
          %v780 = vlaneseq
          %v781 = vshrl.u32 %v780, 7
          %v782 = vsub.s32 %v779, %v781
          %v783 = vrot.slane %v768, %v782
          %v785 = vunpack.c.l.s4 1966171168
          %v786 = vunpack.c.0.s8 %v785
          %v787 = vlaneseq
          %v788 = vshrl.u32 %v787, 7
          %v789 = vsub.s32 %v786, %v788
          %v790 = vrot.slane %v776, %v789
          %v791 = vcombine.high %v783, %v783
          %v792 = vcombine.high %v790, %v790
          %v794 = vunpack.c.l.s4 1966171168
          %v795 = vunpack.c.0.s8 %v794
          %v796 = vlaneseq
          %v797 = vshrl.u32 %v796, 7
          %v798 = vsub.s32 %v795, %v797
          %v799 = vrot.slane %v783, %v798
          %v801 = vunpack.c.l.s4 1966171168
          %v802 = vunpack.c.0.s8 %v801
          %v803 = vlaneseq
          %v804 = vshrl.u32 %v803, 7
          %v805 = vsub.s32 %v802, %v804
          %v806 = vrot.slane %v790, %v805
          %v808 = vunpack.c.l.s4 1966171168
          %v809 = vunpack.c.0.s8 %v808
          %v810 = vlaneseq
          %v811 = vshrl.u32 %v810, 7
          %v812 = vsub.s32 %v809, %v811
          %v813 = vrot.slane %v791, %v812
          %v815 = vunpack.c.l.s4 1966171168
          %v816 = vunpack.c.0.s8 %v815
          %v817 = vlaneseq
          %v818 = vshrl.u32 %v817, 7
          %v819 = vsub.s32 %v816, %v818
          %v820 = vrot.slane %v792, %v819
          %v821 = vcombine.high %v799, %v799
          %v822 = vcombine.high %v806, %v806
          %v823 = vcombine.high %v813, %v813
          %v824 = vcombine.high %v820, %v820
          %v826 = vunpack.c.l.s4 1966171168
          %v827 = vunpack.c.0.s8 %v826
          %v828 = vlaneseq
          %v829 = vshrl.u32 %v828, 7
          %v830 = vsub.s32 %v827, %v829
          %v831 = vrot.slane %v771, %v830
          %v832 = vcombine.high %v831, %v831
          %v834 = vunpack.c.l.s4 1966171168
          %v835 = vunpack.c.0.s8 %v834
          %v836 = vlaneseq
          %v837 = vshrl.u32 %v836, 7
          %v838 = vsub.s32 %v835, %v837
          %v839 = vrot.slane %v831, %v838
          %v841 = vunpack.c.l.s4 1966171168
          %v842 = vunpack.c.0.s8 %v841
          %v843 = vlaneseq
          %v844 = vshrl.u32 %v843, 7
          %v845 = vsub.s32 %v842, %v844
          %v846 = vrot.slane %v832, %v845
          %v857 = vld [vmem:[%s2] sm:$0x1f]
          %v859 = vcombine.high %v857, %v857
          %v861 = vunpack.c.l.s4 1966171168
          %v862 = vunpack.c.0.s8 %v861
          %v863 = vlaneseq
          %v864 = vshrl.u32 %v863, 7
          %v865 = vsub.s32 %v862, %v864
          %v866 = vrot.slane %v857, %v865
          %v868 = vunpack.c.l.s4 1966171168
          %v869 = vunpack.c.0.s8 %v868
          %v870 = vlaneseq
          %v871 = vshrl.u32 %v870, 7
          %v872 = vsub.s32 %v869, %v871
          %v873 = vrot.slane %v859, %v872
          %v874 = vcombine.high %v866, %v866
          %v876 = vunpack.c.l.s4 1966171168
          %v877 = vunpack.c.0.s8 %v876
          %v878 = vlaneseq
          %v879 = vshrl.u32 %v878, 7
          %v880 = vsub.s32 %v877, %v879
          %v881 = vrot.slane %v866, %v880
          %v883 = vunpack.c.l.s4 1966171168
          %v884 = vunpack.c.0.s8 %v883
          %v885 = vlaneseq
          %v886 = vshrl.u32 %v885, 7
          %v887 = vsub.s32 %v884, %v886
          %v888 = vrot.slane %v873, %v887
          %v890 = vunpack.c.l.s4 1966171168
          %v891 = vunpack.c.0.s8 %v890
          %v892 = vlaneseq
          %v893 = vshrl.u32 %v892, 7
          %v894 = vsub.s32 %v891, %v893
          %v895 = vrot.slane %v874, %v894
          %v896 = vcombine.high %v881, %v881
          %v897 = vcombine.high %v895, %v895
          %v903 = vadd.f32 %v799, %v881
          %v904 = vadd.f32 %v813, %v895
          %v905 = vadd.f32 %v821, %v896
          %v906 = vadd.f32 %v823, %v897
          %v907 = vadd.f32 %v806, %v888
          %v908 = vadd.f32 %v820, %v881
          %v909 = vadd.f32 %v822, %v895
          %v910 = vadd.f32 %v824, %v896
          %v911 = vadd.f32 %v839, %v897
          %v912 = vadd.f32 %v846, %v888
          %v923 = vcombine.low %v903, %v904
          %v924 = vcombine.low %v905, %v906
          %v925 = vcombine.low %v907, %v908
          %v926 = vcombine.low %v909, %v910
          %v928 = vunpack.c.l.s4 1966171168
          %v929 = vunpack.c.0.s8 %v928
          %v930 = vlaneseq
          %v931 = vshrl.u32 %v930, 7
          %v932 = vsub.s32 %v929, %v931
          %v933 = vrot.slane %v923, %v932
          %v935 = vunpack.c.l.s4 1966171168
          %v936 = vunpack.c.0.s8 %v935
          %v937 = vlaneseq
          %v938 = vshrl.u32 %v937, 7
          %v939 = vsub.s32 %v936, %v938
          %v940 = vrot.slane %v924, %v939
          %v942 = vunpack.c.l.s4 1966171168
          %v943 = vunpack.c.0.s8 %v942
          %v944 = vlaneseq
          %v945 = vshrl.u32 %v944, 7
          %v946 = vsub.s32 %v943, %v945
          %v947 = vrot.slane %v925, %v946
          %v949 = vunpack.c.l.s4 1966171168
          %v950 = vunpack.c.0.s8 %v949
          %v951 = vlaneseq
          %v952 = vshrl.u32 %v951, 7
          %v953 = vsub.s32 %v950, %v952
          %v954 = vrot.slane %v926, %v953
          %v955 = vcombine.low %v933, %v940
          %v956 = vcombine.low %v947, %v954
          %v958 = vunpack.c.l.s4 1966171168
          %v959 = vunpack.c.0.s8 %v958
          %v960 = vlaneseq
          %v961 = vshrl.u32 %v960, 7
          %v962 = vsub.s32 %v959, %v961
          %v963 = vrot.slane %v955, %v962
          %v965 = vunpack.c.l.s4 1966171168
          %v966 = vunpack.c.0.s8 %v965
          %v967 = vlaneseq
          %v968 = vshrl.u32 %v967, 7
          %v969 = vsub.s32 %v966, %v968
          %v970 = vrot.slane %v956, %v969
          %v971 = vcombine.low %v963, %v970
          %v972 = vcombine.low %v911, %v912
          %v974 = vunpack.c.l.s4 1966171168
          %v975 = vunpack.c.0.s8 %v974
          %v976 = vlaneseq
          %v977 = vshrl.u32 %v976, 7
          %v978 = vsub.s32 %v975, %v977
          %v979 = vrot.slane %v972, %v978
          %v981 = vunpack.c.l.s4 1966171168
          %v982 = vunpack.c.0.s8 %v981
          %v983 = vlaneseq
          %v984 = vshrl.u32 %v983, 7
          %v985 = vsub.s32 %v982, %v984
          %v986 = vrot.slane %v979, %v985
          %vm989 = vcmask 261120
          %990 = vst.msk [vmem:[#allocation2] sm:$0xff] %vm989, %v971
          %vm991 = vcmask 254976
          %992 = vst.msk [vmem:[#allocation2 + $0x8] sm:$0x3] %vm991, %v986
        $region84: #{vision_transformer_forward.1} parent=79 // pred_fallthru
          _
        %v993 = vld [vmem:[#allocation2] sm:$0xff]
        %v994 = vld [vmem:[#allocation2 + $0x8] sm:$0x3]
        %v995 = vld [vmem:[%s582] sm:$0x1]
        %v996 = vld [vmem:[%s585] sm:$0x1]
        %v997 = vld [vmem:[%s598] sm:$0x1]
        %v998 = vld [vmem:[%s601] sm:$0x1]
        %v999 = vld [vmem:[%s590] sm:$0xf]
        %v1000 = vld [vmem:[%s590 + $0x4] sm:$0xf]
        %v1001 = vld [vmem:[%s590 + $0x8] sm:$0xf]
        %v1002 = vld [vmem:[%s590 + $0xc] sm:$0xf]
        %v1003 = vld [vmem:[%s595] sm:$0xf]
        %v1004 = vld [vmem:[%s595 + $0x4] sm:$0xf]
        %v1005 = vld [vmem:[%s595 + $0x8] sm:$0xf]
        %v1006 = vld [vmem:[%s595 + $0xc] sm:$0xf]
        %v1007 = vld [vmem:[%s606] sm:$0xf]
        %v1008 = vld [vmem:[%s606 + $0x4] sm:$0xf]
        %v1009 = vld [vmem:[%s606 + $0x8] sm:$0xf]
        %v1010 = vld [vmem:[%s606 + $0xc] sm:$0xf]
        %v1011 = vld [vmem:[%s611] sm:$0xf]
        %v1012 = vld [vmem:[%s611 + $0x4] sm:$0xf]
        %v1013 = vld [vmem:[%s611 + $0x8] sm:$0xf]
        %v1014 = vld [vmem:[%s611 + $0xc] sm:$0xf]
        %v1015 = vld [vmem:[%s611 + $0x10] sm:$0xf]
        %v1016 = vld [vmem:[%s611 + $0x14] sm:$0xf]
        %v1017 = vld [vmem:[%s611 + $0x18] sm:$0xf]
        %v1018 = vld [vmem:[%s611 + $0x1c] sm:$0xf]
        %v1019 = vld [vmem:[%s611 + $0x20] sm:$0xf]
        %v1020 = vld [vmem:[%s611 + $0x24] sm:$0xf]
        %v1021 = vld [vmem:[%s611 + $0x28] sm:$0xf]
        %v1022 = vld [vmem:[%s611 + $0x2c] sm:$0xf]
        %v1023 = vld [vmem:[%s611 + $0x30] sm:$0xf]
        %v1024 = vld [vmem:[%s611 + $0x34] sm:$0xf]
        %v1025 = vld [vmem:[%s611 + $0x38] sm:$0xf]
        %v1026 = vld [vmem:[%s611 + $0x3c] sm:$0xf]
        %v1027 = vld [vmem:[%s616] sm:$0xf]
        %v1028 = vld [vmem:[%s616 + $0x4] sm:$0xf]
        %v1029 = vld [vmem:[%s616 + $0x8] sm:$0xf]
        %v1030 = vld [vmem:[%s616 + $0xc] sm:$0xf]
        %v1031 = vld [vmem:[%s616 + $0x10] sm:$0xf]
        %v1032 = vld [vmem:[%s616 + $0x14] sm:$0xf]
        %v1033 = vld [vmem:[%s616 + $0x18] sm:$0xf]
        %v1034 = vld [vmem:[%s616 + $0x1c] sm:$0xf]
        %v1035 = vld [vmem:[%s616 + $0x20] sm:$0xf]
        %v1036 = vld [vmem:[%s616 + $0x24] sm:$0xf]
        %v1037 = vld [vmem:[%s616 + $0x28] sm:$0xf]
        %v1038 = vld [vmem:[%s616 + $0x2c] sm:$0xf]
        %v1039 = vld [vmem:[%s616 + $0x30] sm:$0xf]
        %v1040 = vld [vmem:[%s616 + $0x34] sm:$0xf]
        %v1041 = vld [vmem:[%s616 + $0x38] sm:$0xf]
        %v1042 = vld [vmem:[%s616 + $0x3c] sm:$0xf]
        %vm1043 = vcmask 261120
        %v1044 = vsel %vm1043, %v993, 0.0
        %1045 = vadd.xlane.f32.xlu0 %v1044
        %v1046 = vpop.xlane.xlu0 %1045
        %vm1047 = vcmask 254976
        %v1048 = vsel %vm1047, %v994, 0.0
        %1049 = vadd.xlane.f32.xlu0 %v1048
        %v1050 = vpop.xlane.xlu0 %1049
        %v1051 = vrcp.pop 32.0
        %v1052 = vmul.f32 %v1046, %v1051
        %v1053 = vmul.f32 %v1050, %v1051
        %v1054 = vsub.f32 %v993, %v1052
        %v1055 = vsub.f32 %v994, %v1053
        %v1056 = vmul.f32 %v1054, %v1054
        %v1057 = vmul.f32 %v1055, %v1055
        %v1058 = vsel %vm1043, %v1056, 0.0
        %1059 = vadd.xlane.f32.xlu0 %v1058
        %v1060 = vpop.xlane.xlu0 %1059
        %v1061 = vsel %vm1047, %v1057, 0.0
        %1062 = vadd.xlane.f32.xlu0 %v1061
        %v1063 = vpop.xlane.xlu0 %1062
        %v1064 = vmul.f32 %v1060, %v1051
        %v1065 = vmul.f32 %v1063, %v1051
        %v1066 = vadd.f32 %v1064, 1e-06
        %v1067 = vadd.f32 %v1065, 1e-06
        %v1068 = vrsqrt.pop %v1066
        %v1069 = vrsqrt.pop %v1067
        %v1070 = vmul.f32 %v1054, %v1068
        %v1071 = vmul.f32 %v1055, %v1069
        %v1073 = vlaneseq
        %v1074 = vshrl.u32 %v1073, 7
        %v1075 = vsub.s32 0, %v1074
        %v1076 = vrot.slane %v995, %v1075
        %v1078 = vmul.f32 %v1070, %v1076
        %v1079 = vmul.f32 %v1071, %v1076
        %v1081 = vlaneseq
        %v1082 = vshrl.u32 %v1081, 7
        %v1083 = vsub.s32 0, %v1082
        %v1084 = vrot.slane %v996, %v1083
        %v1086 = vadd.f32 %v1078, %v1084
        %v1087 = vadd.f32 %v1079, %v1084
        %v1088 = vpack.c.bf16 %v1087, %v1086
        %v1093 = vunpack.c.l.b16 %v999
        %v1094 = vunpack.c.l.b16 %v1000
        %v1095 = vunpack.c.l.b16 %v1001
        %v1096 = vunpack.c.l.b16 %v1002
        %v1097 = vpack.c.b16 %v1094, %v1093
        %v1098 = vpack.c.b16 %v1096, %v1095
        %v1102 = vsel %vm1043, %v1088, 0
        %1104 = vmatprep.subr.bf16.mxu0 0
        %1105 = vmatpush1.bf16.msra.mxu0 0
        %1106 = vmatprep.subr.bf16.mxu0 0
        %1107 = vmatpush1.bf16.msra.mxu0 0
        %1108 = vmatprep.subr.bf16.mxu0 0
        %1109 = vmatpush1.bf16.msra.mxu0 0
        %1110 = vmatprep.subr.bf16.mxu0 0
        %1111 = vmatpush1.bf16.msra.mxu0 0
        %1112 = vmatprep.subr.bf16.mxu0 0
        %1113 = vmatpush1.bf16.msra.mxu0 0
        %1114 = vmatprep.subr.bf16.mxu0 0
        %1115 = vmatpush1.bf16.msra.mxu0 0
        %1116 = vmatprep.subr.bf16.mxu0 0
        %1117 = vmatpush1.bf16.msra.mxu0 %v1098
        %1118 = vmatprep.subr.bf16.mxu0 0
        %1119 = vmatpush1.bf16.msra.mxu0 %v1097
        %1120 = vmatprep.subr.bf16.mxu0 0
        %1121 = vmatpush2.bf16.msra.mxu0 0
        %1122 = vmatprep.subr.bf16.mxu0 0
        %1123 = vmatpush2.bf16.msra.mxu0 0
        %1124 = vmatprep.subr.bf16.mxu0 0
        %1125 = vmatpush2.bf16.msra.mxu0 0
        %1126 = vmatprep.subr.bf16.mxu0 0
        %1127 = vmatpush2.bf16.msra.mxu0 0
        %1128 = vmatprep.subr.bf16.mxu0 0
        %1129 = vmatpush2.bf16.msra.mxu0 0
        %1130 = vmatprep.subr.bf16.mxu0 0
        %1131 = vmatpush2.bf16.msra.mxu0 0
        %1132 = vmatprep.subr.bf16.mxu0 0
        %1133 = vmatpush2.bf16.msra.mxu0 0
        %1134 = vmatprep.subr.bf16.mxu0 0
        %1135 = vmatpush2.bf16.msra.mxu0 0
        %1136 = vmatprep.mubr.bf16.mxu0 0
        %1137 = vmatmul.mubr.bf16.gmra.mxu0 %v1102
        %v1138 = vpop.f32.mrf.mxu0
        %v1139 = vadd.f32 0.0, %v1138
        %v1140 = vpop.f32.mrf.mxu0
        %v1141 = vpop.f32.mrf.mxu0
        %v1142 = vadd.f32 0.0, %v1141
        %v1143 = vpop.f32.mrf.mxu0
        %1144 = vdwg.mxu0
        %v1147 = vcombine.high %v1139, %v1139
        %v1149 = vunpack.c.l.s4 1966171168
        %v1150 = vunpack.c.0.s8 %v1149
        %v1151 = vlaneseq
        %v1152 = vshrl.u32 %v1151, 7
        %v1153 = vsub.s32 %v1150, %v1152
        %v1154 = vrot.slane %v1139, %v1153
        %v1156 = vunpack.c.l.s4 1966171168
        %v1157 = vunpack.c.0.s8 %v1156
        %v1158 = vlaneseq
        %v1159 = vshrl.u32 %v1158, 7
        %v1160 = vsub.s32 %v1157, %v1159
        %v1161 = vrot.slane %v1147, %v1160
        %v1162 = vcombine.high %v1154, %v1154
        %v1163 = vcombine.high %v1161, %v1161
        %v1165 = vunpack.c.l.s4 1966171168
        %v1166 = vunpack.c.0.s8 %v1165
        %v1167 = vlaneseq
        %v1168 = vshrl.u32 %v1167, 7
        %v1169 = vsub.s32 %v1166, %v1168
        %v1170 = vrot.slane %v1154, %v1169
        %v1172 = vunpack.c.l.s4 1966171168
        %v1173 = vunpack.c.0.s8 %v1172
        %v1174 = vlaneseq
        %v1175 = vshrl.u32 %v1174, 7
        %v1176 = vsub.s32 %v1173, %v1175
        %v1177 = vrot.slane %v1161, %v1176
        %v1179 = vunpack.c.l.s4 1966171168
        %v1180 = vunpack.c.0.s8 %v1179
        %v1181 = vlaneseq
        %v1182 = vshrl.u32 %v1181, 7
        %v1183 = vsub.s32 %v1180, %v1182
        %v1184 = vrot.slane %v1162, %v1183
        %v1186 = vunpack.c.l.s4 1966171168
        %v1187 = vunpack.c.0.s8 %v1186
        %v1188 = vlaneseq
        %v1189 = vshrl.u32 %v1188, 7
        %v1190 = vsub.s32 %v1187, %v1189
        %v1191 = vrot.slane %v1163, %v1190
        %v1192 = vcombine.high %v1170, %v1170
        %v1193 = vcombine.high %v1177, %v1177
        %v1194 = vcombine.high %v1184, %v1184
        %v1195 = vcombine.high %v1191, %v1191
        %v1197 = vunpack.c.l.s4 1966171168
        %v1198 = vunpack.c.0.s8 %v1197
        %v1199 = vlaneseq
        %v1200 = vshrl.u32 %v1199, 7
        %v1201 = vsub.s32 %v1198, %v1200
        %v1202 = vrot.slane %v1142, %v1201
        %v1203 = vcombine.high %v1202, %v1202
        %v1205 = vunpack.c.l.s4 1966171168
        %v1206 = vunpack.c.0.s8 %v1205
        %v1207 = vlaneseq
        %v1208 = vshrl.u32 %v1207, 7
        %v1209 = vsub.s32 %v1206, %v1208
        %v1210 = vrot.slane %v1202, %v1209
        %v1212 = vunpack.c.l.s4 1966171168
        %v1213 = vunpack.c.0.s8 %v1212
        %v1214 = vlaneseq
        %v1215 = vshrl.u32 %v1214, 7
        %v1216 = vsub.s32 %v1213, %v1215
        %v1217 = vrot.slane %v1203, %v1216
        %1218 = vrot.lane.b32.xlu0 %v1170, 120
        %v1219 = vpop.permute.xlu0 %1218
        %1220 = vrot.lane.b32.xlu0 %v1184, 120
        %v1221 = vpop.permute.xlu0 %1220
        %1222 = vrot.lane.b32.xlu0 %v1192, 120
        %v1223 = vpop.permute.xlu0 %1222
        %1224 = vrot.lane.b32.xlu0 %v1194, 120
        %v1225 = vpop.permute.xlu0 %1224
        %1226 = vrot.lane.b32.xlu0 %v1177, 120
        %v1227 = vpop.permute.xlu0 %1226
        %1228 = vrot.lane.b32.xlu0 %v1191, 120
        %v1229 = vpop.permute.xlu0 %1228
        %1230 = vrot.lane.b32.xlu0 %v1193, 120
        %v1231 = vpop.permute.xlu0 %1230
        %1232 = vrot.lane.b32.xlu0 %v1195, 120
        %v1233 = vpop.permute.xlu0 %1232
        %1234 = vrot.lane.b32.xlu0 %v1210, 120
        %v1235 = vpop.permute.xlu0 %1234
        %1236 = vrot.lane.b32.xlu0 %v1217, 120
        %v1237 = vpop.permute.xlu0 %1236
        %1238 = vrot.lane.b32.xlu0 %v1170, 112
        %v1239 = vpop.permute.xlu0 %1238
        %1240 = vrot.lane.b32.xlu0 %v1184, 112
        %v1241 = vpop.permute.xlu0 %1240
        %1242 = vrot.lane.b32.xlu0 %v1192, 112
        %v1243 = vpop.permute.xlu0 %1242
        %1244 = vrot.lane.b32.xlu0 %v1194, 112
        %v1245 = vpop.permute.xlu0 %1244
        %1246 = vrot.lane.b32.xlu0 %v1177, 112
        %v1247 = vpop.permute.xlu0 %1246
        %1248 = vrot.lane.b32.xlu0 %v1191, 112
        %v1249 = vpop.permute.xlu0 %1248
        %1250 = vrot.lane.b32.xlu0 %v1193, 112
        %v1251 = vpop.permute.xlu0 %1250
        %1252 = vrot.lane.b32.xlu0 %v1195, 112
        %v1253 = vpop.permute.xlu0 %1252
        %1254 = vrot.lane.b32.xlu0 %v1210, 112
        %v1255 = vpop.permute.xlu0 %1254
        %1256 = vrot.lane.b32.xlu0 %v1217, 112
        %v1257 = vpop.permute.xlu0 %1256
        %1258 = vrot.lane.b32.xlu0 %v1170, 104
        %v1259 = vpop.permute.xlu0 %1258
        %1260 = vrot.lane.b32.xlu0 %v1184, 104
        %v1261 = vpop.permute.xlu0 %1260
        %1262 = vrot.lane.b32.xlu0 %v1192, 104
        %v1263 = vpop.permute.xlu0 %1262
        %1264 = vrot.lane.b32.xlu0 %v1194, 104
        %v1265 = vpop.permute.xlu0 %1264
        %1266 = vrot.lane.b32.xlu0 %v1177, 104
        %v1267 = vpop.permute.xlu0 %1266
        %1268 = vrot.lane.b32.xlu0 %v1191, 104
        %v1269 = vpop.permute.xlu0 %1268
        %1270 = vrot.lane.b32.xlu0 %v1193, 104
        %v1271 = vpop.permute.xlu0 %1270
        %1272 = vrot.lane.b32.xlu0 %v1195, 104
        %v1273 = vpop.permute.xlu0 %1272
        %1274 = vrot.lane.b32.xlu0 %v1210, 104
        %v1275 = vpop.permute.xlu0 %1274
        %1276 = vrot.lane.b32.xlu0 %v1217, 104
        %v1277 = vpop.permute.xlu0 %1276
        %v1278 = vcombine.low %v1170, %v1184
        %v1279 = vcombine.low %v1192, %v1194
        %v1281 = vunpack.c.l.s4 1966171168
        %v1282 = vunpack.c.0.s8 %v1281
        %v1283 = vlaneseq
        %v1284 = vshrl.u32 %v1283, 7
        %v1285 = vsub.s32 %v1282, %v1284
        %v1286 = vrot.slane %v1278, %v1285
        %v1288 = vunpack.c.l.s4 1966171168
        %v1289 = vunpack.c.0.s8 %v1288
        %v1290 = vlaneseq
        %v1291 = vshrl.u32 %v1290, 7
        %v1292 = vsub.s32 %v1289, %v1291
        %v1293 = vrot.slane %v1279, %v1292
        %v1295 = vunpack.c.l.s4 1966171168
        %v1296 = vunpack.c.0.s8 %v1295
        %v1297 = vlaneseq
        %v1298 = vshrl.u32 %v1297, 7
        %v1299 = vsub.s32 %v1296, %v1298
        %v1300 = vrot.slane %v1177, %v1299
        %v1301 = vcombine.low %v1286, %v1293
        %v1303 = vunpack.c.l.s4 1966171168
        %v1304 = vunpack.c.0.s8 %v1303
        %v1305 = vlaneseq
        %v1306 = vshrl.u32 %v1305, 7
        %v1307 = vsub.s32 %v1304, %v1306
        %v1308 = vrot.slane %v1301, %v1307
        %v1310 = vunpack.c.l.s4 1966171168
        %v1311 = vunpack.c.0.s8 %v1310
        %v1312 = vlaneseq
        %v1313 = vshrl.u32 %v1312, 7
        %v1314 = vsub.s32 %v1311, %v1313
        %v1315 = vrot.slane %v1300, %v1314
        %v1316 = vcombine.low %v1308, %v1315
        %v1317 = vcombine.low %v1191, %v1193
        %v1318 = vcombine.low %v1195, %v1210
        %v1320 = vunpack.c.l.s4 1966171168
        %v1321 = vunpack.c.0.s8 %v1320
        %v1322 = vlaneseq
        %v1323 = vshrl.u32 %v1322, 7
        %v1324 = vsub.s32 %v1321, %v1323
        %v1325 = vrot.slane %v1317, %v1324
        %v1327 = vunpack.c.l.s4 1966171168
        %v1328 = vunpack.c.0.s8 %v1327
        %v1329 = vlaneseq
        %v1330 = vshrl.u32 %v1329, 7
        %v1331 = vsub.s32 %v1328, %v1330
        %v1332 = vrot.slane %v1318, %v1331
        %v1334 = vunpack.c.l.s4 1966171168
        %v1335 = vunpack.c.0.s8 %v1334
        %v1336 = vlaneseq
        %v1337 = vshrl.u32 %v1336, 7
        %v1338 = vsub.s32 %v1335, %v1337
        %v1339 = vrot.slane %v1217, %v1338
        %v1340 = vcombine.low %v1325, %v1332
        %v1342 = vunpack.c.l.s4 1966171168
        %v1343 = vunpack.c.0.s8 %v1342
        %v1344 = vlaneseq
        %v1345 = vshrl.u32 %v1344, 7
        %v1346 = vsub.s32 %v1343, %v1345
        %v1347 = vrot.slane %v1340, %v1346
        %v1349 = vunpack.c.l.s4 1966171168
        %v1350 = vunpack.c.0.s8 %v1349
        %v1351 = vlaneseq
        %v1352 = vshrl.u32 %v1351, 7
        %v1353 = vsub.s32 %v1350, %v1352
        %v1354 = vrot.slane %v1339, %v1353
        %v1355 = vcombine.low %v1347, %v1354
        %v1356 = vcombine.low %v1219, %v1221
        %v1357 = vcombine.low %v1223, %v1225
        %v1359 = vunpack.c.l.s4 1966171168
        %v1360 = vunpack.c.0.s8 %v1359
        %v1361 = vlaneseq
        %v1362 = vshrl.u32 %v1361, 7
        %v1363 = vsub.s32 %v1360, %v1362
        %v1364 = vrot.slane %v1356, %v1363
        %v1366 = vunpack.c.l.s4 1966171168
        %v1367 = vunpack.c.0.s8 %v1366
        %v1368 = vlaneseq
        %v1369 = vshrl.u32 %v1368, 7
        %v1370 = vsub.s32 %v1367, %v1369
        %v1371 = vrot.slane %v1357, %v1370
        %v1373 = vunpack.c.l.s4 1966171168
        %v1374 = vunpack.c.0.s8 %v1373
        %v1375 = vlaneseq
        %v1376 = vshrl.u32 %v1375, 7
        %v1377 = vsub.s32 %v1374, %v1376
        %v1378 = vrot.slane %v1227, %v1377
        %v1379 = vcombine.low %v1364, %v1371
        %v1381 = vunpack.c.l.s4 1966171168
        %v1382 = vunpack.c.0.s8 %v1381
        %v1383 = vlaneseq
        %v1384 = vshrl.u32 %v1383, 7
        %v1385 = vsub.s32 %v1382, %v1384
        %v1386 = vrot.slane %v1379, %v1385
        %v1388 = vunpack.c.l.s4 1966171168
        %v1389 = vunpack.c.0.s8 %v1388
        %v1390 = vlaneseq
        %v1391 = vshrl.u32 %v1390, 7
        %v1392 = vsub.s32 %v1389, %v1391
        %v1393 = vrot.slane %v1378, %v1392
        %v1394 = vcombine.low %v1386, %v1393
        %v1395 = vcombine.low %v1229, %v1231
        %v1396 = vcombine.low %v1233, %v1235
        %v1398 = vunpack.c.l.s4 1966171168
        %v1399 = vunpack.c.0.s8 %v1398
        %v1400 = vlaneseq
        %v1401 = vshrl.u32 %v1400, 7
        %v1402 = vsub.s32 %v1399, %v1401
        %v1403 = vrot.slane %v1395, %v1402
        %v1405 = vunpack.c.l.s4 1966171168
        %v1406 = vunpack.c.0.s8 %v1405
        %v1407 = vlaneseq
        %v1408 = vshrl.u32 %v1407, 7
        %v1409 = vsub.s32 %v1406, %v1408
        %v1410 = vrot.slane %v1396, %v1409
        %v1412 = vunpack.c.l.s4 1966171168
        %v1413 = vunpack.c.0.s8 %v1412
        %v1414 = vlaneseq
        %v1415 = vshrl.u32 %v1414, 7
        %v1416 = vsub.s32 %v1413, %v1415
        %v1417 = vrot.slane %v1237, %v1416
        %v1418 = vcombine.low %v1403, %v1410
        %v1420 = vunpack.c.l.s4 1966171168
        %v1421 = vunpack.c.0.s8 %v1420
        %v1422 = vlaneseq
        %v1423 = vshrl.u32 %v1422, 7
        %v1424 = vsub.s32 %v1421, %v1423
        %v1425 = vrot.slane %v1418, %v1424
        %v1427 = vunpack.c.l.s4 1966171168
        %v1428 = vunpack.c.0.s8 %v1427
        %v1429 = vlaneseq
        %v1430 = vshrl.u32 %v1429, 7
        %v1431 = vsub.s32 %v1428, %v1430
        %v1432 = vrot.slane %v1417, %v1431
        %v1433 = vcombine.low %v1425, %v1432
        %v1434 = vcombine.low %v1239, %v1241
        %v1435 = vcombine.low %v1243, %v1245
        %v1437 = vunpack.c.l.s4 1966171168
        %v1438 = vunpack.c.0.s8 %v1437
        %v1439 = vlaneseq
        %v1440 = vshrl.u32 %v1439, 7
        %v1441 = vsub.s32 %v1438, %v1440
        %v1442 = vrot.slane %v1434, %v1441
        %v1444 = vunpack.c.l.s4 1966171168
        %v1445 = vunpack.c.0.s8 %v1444
        %v1446 = vlaneseq
        %v1447 = vshrl.u32 %v1446, 7
        %v1448 = vsub.s32 %v1445, %v1447
        %v1449 = vrot.slane %v1435, %v1448
        %v1451 = vunpack.c.l.s4 1966171168
        %v1452 = vunpack.c.0.s8 %v1451
        %v1453 = vlaneseq
        %v1454 = vshrl.u32 %v1453, 7
        %v1455 = vsub.s32 %v1452, %v1454
        %v1456 = vrot.slane %v1247, %v1455
        %v1457 = vcombine.low %v1442, %v1449
        %v1459 = vunpack.c.l.s4 1966171168
        %v1460 = vunpack.c.0.s8 %v1459
        %v1461 = vlaneseq
        %v1462 = vshrl.u32 %v1461, 7
        %v1463 = vsub.s32 %v1460, %v1462
        %v1464 = vrot.slane %v1457, %v1463
        %v1466 = vunpack.c.l.s4 1966171168
        %v1467 = vunpack.c.0.s8 %v1466
        %v1468 = vlaneseq
        %v1469 = vshrl.u32 %v1468, 7
        %v1470 = vsub.s32 %v1467, %v1469
        %v1471 = vrot.slane %v1456, %v1470
        %v1472 = vcombine.low %v1464, %v1471
        %v1473 = vcombine.low %v1249, %v1251
        %v1474 = vcombine.low %v1253, %v1255
        %v1476 = vunpack.c.l.s4 1966171168
        %v1477 = vunpack.c.0.s8 %v1476
        %v1478 = vlaneseq
        %v1479 = vshrl.u32 %v1478, 7
        %v1480 = vsub.s32 %v1477, %v1479
        %v1481 = vrot.slane %v1473, %v1480
        %v1483 = vunpack.c.l.s4 1966171168
        %v1484 = vunpack.c.0.s8 %v1483
        %v1485 = vlaneseq
        %v1486 = vshrl.u32 %v1485, 7
        %v1487 = vsub.s32 %v1484, %v1486
        %v1488 = vrot.slane %v1474, %v1487
        %v1490 = vunpack.c.l.s4 1966171168
        %v1491 = vunpack.c.0.s8 %v1490
        %v1492 = vlaneseq
        %v1493 = vshrl.u32 %v1492, 7
        %v1494 = vsub.s32 %v1491, %v1493
        %v1495 = vrot.slane %v1257, %v1494
        %v1496 = vcombine.low %v1481, %v1488
        %v1498 = vunpack.c.l.s4 1966171168
        %v1499 = vunpack.c.0.s8 %v1498
        %v1500 = vlaneseq
        %v1501 = vshrl.u32 %v1500, 7
        %v1502 = vsub.s32 %v1499, %v1501
        %v1503 = vrot.slane %v1496, %v1502
        %v1505 = vunpack.c.l.s4 1966171168
        %v1506 = vunpack.c.0.s8 %v1505
        %v1507 = vlaneseq
        %v1508 = vshrl.u32 %v1507, 7
        %v1509 = vsub.s32 %v1506, %v1508
        %v1510 = vrot.slane %v1495, %v1509
        %v1511 = vcombine.low %v1503, %v1510
        %v1512 = vcombine.low %v1259, %v1261
        %v1513 = vcombine.low %v1263, %v1265
        %v1515 = vunpack.c.l.s4 1966171168
        %v1516 = vunpack.c.0.s8 %v1515
        %v1517 = vlaneseq
        %v1518 = vshrl.u32 %v1517, 7
        %v1519 = vsub.s32 %v1516, %v1518
        %v1520 = vrot.slane %v1512, %v1519
        %v1522 = vunpack.c.l.s4 1966171168
        %v1523 = vunpack.c.0.s8 %v1522
        %v1524 = vlaneseq
        %v1525 = vshrl.u32 %v1524, 7
        %v1526 = vsub.s32 %v1523, %v1525
        %v1527 = vrot.slane %v1513, %v1526
        %v1529 = vunpack.c.l.s4 1966171168
        %v1530 = vunpack.c.0.s8 %v1529
        %v1531 = vlaneseq
        %v1532 = vshrl.u32 %v1531, 7
        %v1533 = vsub.s32 %v1530, %v1532
        %v1534 = vrot.slane %v1267, %v1533
        %v1535 = vcombine.low %v1520, %v1527
        %v1537 = vunpack.c.l.s4 1966171168
        %v1538 = vunpack.c.0.s8 %v1537
        %v1539 = vlaneseq
        %v1540 = vshrl.u32 %v1539, 7
        %v1541 = vsub.s32 %v1538, %v1540
        %v1542 = vrot.slane %v1535, %v1541
        %v1544 = vunpack.c.l.s4 1966171168
        %v1545 = vunpack.c.0.s8 %v1544
        %v1546 = vlaneseq
        %v1547 = vshrl.u32 %v1546, 7
        %v1548 = vsub.s32 %v1545, %v1547
        %v1549 = vrot.slane %v1534, %v1548
        %v1550 = vcombine.low %v1542, %v1549
        %v1551 = vcombine.low %v1269, %v1271
        %v1552 = vcombine.low %v1273, %v1275
        %v1554 = vunpack.c.l.s4 1966171168
        %v1555 = vunpack.c.0.s8 %v1554
        %v1556 = vlaneseq
        %v1557 = vshrl.u32 %v1556, 7
        %v1558 = vsub.s32 %v1555, %v1557
        %v1559 = vrot.slane %v1551, %v1558
        %v1561 = vunpack.c.l.s4 1966171168
        %v1562 = vunpack.c.0.s8 %v1561
        %v1563 = vlaneseq
        %v1564 = vshrl.u32 %v1563, 7
        %v1565 = vsub.s32 %v1562, %v1564
        %v1566 = vrot.slane %v1552, %v1565
        %v1568 = vunpack.c.l.s4 1966171168
        %v1569 = vunpack.c.0.s8 %v1568
        %v1570 = vlaneseq
        %v1571 = vshrl.u32 %v1570, 7
        %v1572 = vsub.s32 %v1569, %v1571
        %v1573 = vrot.slane %v1277, %v1572
        %v1574 = vcombine.low %v1559, %v1566
        %v1576 = vunpack.c.l.s4 1966171168
        %v1577 = vunpack.c.0.s8 %v1576
        %v1578 = vlaneseq
        %v1579 = vshrl.u32 %v1578, 7
        %v1580 = vsub.s32 %v1577, %v1579
        %v1581 = vrot.slane %v1574, %v1580
        %v1583 = vunpack.c.l.s4 1966171168
        %v1584 = vunpack.c.0.s8 %v1583
        %v1585 = vlaneseq
        %v1586 = vshrl.u32 %v1585, 7
        %v1587 = vsub.s32 %v1584, %v1586
        %v1588 = vrot.slane %v1573, %v1587
        %v1589 = vcombine.low %v1581, %v1588
        %v1598 = vpack.c.bf16 %v1316, %v1316
        %v1599 = vpack.c.bf16 %v1355, %v1355
        %v1600 = vpack.c.bf16 %v1394, %v1394
        %v1601 = vpack.c.bf16 %v1433, %v1433
        %v1602 = vpack.c.bf16 %v1472, %v1472
        %v1603 = vpack.c.bf16 %v1511, %v1511
        %v1604 = vpack.c.bf16 %v1550, %v1550
        %v1605 = vpack.c.bf16 %v1589, %v1589
        %1607 = vrot.lane.b32.xlu0 %v1598, 96
        %v1608 = vpop.permute.xlu0 %1607
        %vm1609 = vcmask 64512
        %v1611 = vsel %vm1609, %v1598, 0
        %v1614 = vsel %vm1609, %v1608, 0
        %1616 = vmatprep.subr.bf16.mxu0 0
        %1617 = vmatpush1.bf16.xpose.msra.mxu0 0
        %1618 = vmatprep.subr.bf16.mxu0 0
        %1619 = vmatpush1.bf16.xpose.msra.mxu0 0
        %1620 = vmatprep.subr.bf16.mxu0 0
        %1621 = vmatpush1.bf16.xpose.msra.mxu0 0
        %1622 = vmatprep.subr.bf16.mxu0 0
        %1623 = vmatpush1.bf16.xpose.msra.mxu0 0
        %1624 = vmatprep.subr.bf16.mxu0 0
        %1625 = vmatpush1.bf16.xpose.msra.mxu0 0
        %1626 = vmatprep.subr.bf16.mxu0 0
        %1627 = vmatpush1.bf16.xpose.msra.mxu0 0
        %1628 = vmatprep.subr.bf16.mxu0 0
        %1629 = vmatpush1.bf16.xpose.msra.mxu0 0
        %1630 = vmatprep.subr.bf16.mxu0 0
        %1631 = vmatpush1.bf16.xpose.msra.mxu0 %v1614
        %1632 = vmatprep.subr.bf16.mxu0 0
        %1633 = vmatpush2.bf16.xpose.msra.mxu0 0
        %1634 = vmatprep.subr.bf16.mxu0 0
        %1635 = vmatpush2.bf16.xpose.msra.mxu0 0
        %1636 = vmatprep.subr.bf16.mxu0 0
        %1637 = vmatpush2.bf16.xpose.msra.mxu0 0
        %1638 = vmatprep.subr.bf16.mxu0 0
        %1639 = vmatpush2.bf16.xpose.msra.mxu0 0
        %1640 = vmatprep.subr.bf16.mxu0 0
        %1641 = vmatpush2.bf16.xpose.msra.mxu0 0
        %1642 = vmatprep.subr.bf16.mxu0 0
        %1643 = vmatpush2.bf16.xpose.msra.mxu0 0
        %1644 = vmatprep.subr.bf16.mxu0 0
        %1645 = vmatpush2.bf16.xpose.msra.mxu0 0
        %1646 = vmatprep.subr.bf16.mxu0 0
        %1647 = vmatpush2.bf16.xpose.msra.mxu0 0
        %1648 = vmatprep.mubr.bf16.mxu0 0
        %1649 = vmatmul.mubr.bf16.gmra.mxu0 %v1611
        %v1650 = vpop.f32.mrf.mxu0
        %v1651 = vadd.f32 0.0, %v1650
        %v1652 = vpop.f32.mrf.mxu0
        %v1653 = vpop.f32.mrf.mxu0
        %v1654 = vpop.f32.mrf.mxu0
        %1655 = vdwg.mxu0
        %1657 = vrot.lane.b32.xlu0 %v1599, 96
        %v1658 = vpop.permute.xlu0 %1657
        %v1660 = vsel %vm1609, %v1599, 0
        %v1663 = vsel %vm1609, %v1658, 0
        %1665 = vmatprep.subr.bf16.mxu0 0
        %1666 = vmatpush1.bf16.xpose.msra.mxu0 0
        %1667 = vmatprep.subr.bf16.mxu0 0
        %1668 = vmatpush1.bf16.xpose.msra.mxu0 0
        %1669 = vmatprep.subr.bf16.mxu0 0
        %1670 = vmatpush1.bf16.xpose.msra.mxu0 0
        %1671 = vmatprep.subr.bf16.mxu0 0
        %1672 = vmatpush1.bf16.xpose.msra.mxu0 0
        %1673 = vmatprep.subr.bf16.mxu0 0
        %1674 = vmatpush1.bf16.xpose.msra.mxu0 0
        %1675 = vmatprep.subr.bf16.mxu0 0
        %1676 = vmatpush1.bf16.xpose.msra.mxu0 0
        %1677 = vmatprep.subr.bf16.mxu0 0
        %1678 = vmatpush1.bf16.xpose.msra.mxu0 0
        %1679 = vmatprep.subr.bf16.mxu0 0
        %1680 = vmatpush1.bf16.xpose.msra.mxu0 %v1663
        %1681 = vmatprep.subr.bf16.mxu0 0
        %1682 = vmatpush2.bf16.xpose.msra.mxu0 0
        %1683 = vmatprep.subr.bf16.mxu0 0
        %1684 = vmatpush2.bf16.xpose.msra.mxu0 0
        %1685 = vmatprep.subr.bf16.mxu0 0
        %1686 = vmatpush2.bf16.xpose.msra.mxu0 0
        %1687 = vmatprep.subr.bf16.mxu0 0
        %1688 = vmatpush2.bf16.xpose.msra.mxu0 0
        %1689 = vmatprep.subr.bf16.mxu0 0
        %1690 = vmatpush2.bf16.xpose.msra.mxu0 0
        %1691 = vmatprep.subr.bf16.mxu0 0
        %1692 = vmatpush2.bf16.xpose.msra.mxu0 0
        %1693 = vmatprep.subr.bf16.mxu0 0
        %1694 = vmatpush2.bf16.xpose.msra.mxu0 0
        %1695 = vmatprep.subr.bf16.mxu0 0
        %1696 = vmatpush2.bf16.xpose.msra.mxu0 0
        %1697 = vmatprep.mubr.bf16.mxu0 0
        %1698 = vmatmul.mubr.bf16.gmra.mxu0 %v1660
        %v1699 = vpop.f32.mrf.mxu0
        %v1700 = vadd.f32 0.0, %v1699
        %v1701 = vpop.f32.mrf.mxu0
        %v1702 = vpop.f32.mrf.mxu0
        %v1703 = vpop.f32.mrf.mxu0
        %1704 = vdwg.mxu0
        %1706 = vrot.lane.b32.xlu0 %v1600, 96
        %v1707 = vpop.permute.xlu0 %1706
        %v1709 = vsel %vm1609, %v1600, 0
        %v1712 = vsel %vm1609, %v1707, 0
        %1714 = vmatprep.subr.bf16.mxu0 0
        %1715 = vmatpush1.bf16.xpose.msra.mxu0 0
        %1716 = vmatprep.subr.bf16.mxu0 0
        %1717 = vmatpush1.bf16.xpose.msra.mxu0 0
        %1718 = vmatprep.subr.bf16.mxu0 0
        %1719 = vmatpush1.bf16.xpose.msra.mxu0 0
        %1720 = vmatprep.subr.bf16.mxu0 0
        %1721 = vmatpush1.bf16.xpose.msra.mxu0 0
        %1722 = vmatprep.subr.bf16.mxu0 0
        %1723 = vmatpush1.bf16.xpose.msra.mxu0 0
        %1724 = vmatprep.subr.bf16.mxu0 0
        %1725 = vmatpush1.bf16.xpose.msra.mxu0 0
        %1726 = vmatprep.subr.bf16.mxu0 0
        %1727 = vmatpush1.bf16.xpose.msra.mxu0 0
        %1728 = vmatprep.subr.bf16.mxu0 0
        %1729 = vmatpush1.bf16.xpose.msra.mxu0 %v1712
        %1730 = vmatprep.subr.bf16.mxu0 0
        %1731 = vmatpush2.bf16.xpose.msra.mxu0 0
        %1732 = vmatprep.subr.bf16.mxu0 0
        %1733 = vmatpush2.bf16.xpose.msra.mxu0 0
        %1734 = vmatprep.subr.bf16.mxu0 0
        %1735 = vmatpush2.bf16.xpose.msra.mxu0 0
        %1736 = vmatprep.subr.bf16.mxu0 0
        %1737 = vmatpush2.bf16.xpose.msra.mxu0 0
        %1738 = vmatprep.subr.bf16.mxu0 0
        %1739 = vmatpush2.bf16.xpose.msra.mxu0 0
        %1740 = vmatprep.subr.bf16.mxu0 0
        %1741 = vmatpush2.bf16.xpose.msra.mxu0 0
        %1742 = vmatprep.subr.bf16.mxu0 0
        %1743 = vmatpush2.bf16.xpose.msra.mxu0 0
        %1744 = vmatprep.subr.bf16.mxu0 0
        %1745 = vmatpush2.bf16.xpose.msra.mxu0 0
        %1746 = vmatprep.mubr.bf16.mxu0 0
        %1747 = vmatmul.mubr.bf16.gmra.mxu0 %v1709
        %v1748 = vpop.f32.mrf.mxu0
        %v1749 = vadd.f32 0.0, %v1748
        %v1750 = vpop.f32.mrf.mxu0
        %v1751 = vpop.f32.mrf.mxu0
        %v1752 = vpop.f32.mrf.mxu0
        %1753 = vdwg.mxu0
        %1755 = vrot.lane.b32.xlu0 %v1601, 96
        %v1756 = vpop.permute.xlu0 %1755
        %v1758 = vsel %vm1609, %v1601, 0
        %v1761 = vsel %vm1609, %v1756, 0
        %1763 = vmatprep.subr.bf16.mxu0 0
        %1764 = vmatpush1.bf16.xpose.msra.mxu0 0
        %1765 = vmatprep.subr.bf16.mxu0 0
        %1766 = vmatpush1.bf16.xpose.msra.mxu0 0
        %1767 = vmatprep.subr.bf16.mxu0 0
        %1768 = vmatpush1.bf16.xpose.msra.mxu0 0
        %1769 = vmatprep.subr.bf16.mxu0 0
        %1770 = vmatpush1.bf16.xpose.msra.mxu0 0
        %1771 = vmatprep.subr.bf16.mxu0 0
        %1772 = vmatpush1.bf16.xpose.msra.mxu0 0
        %1773 = vmatprep.subr.bf16.mxu0 0
        %1774 = vmatpush1.bf16.xpose.msra.mxu0 0
        %1775 = vmatprep.subr.bf16.mxu0 0
        %1776 = vmatpush1.bf16.xpose.msra.mxu0 0
        %1777 = vmatprep.subr.bf16.mxu0 0
        %1778 = vmatpush1.bf16.xpose.msra.mxu0 %v1761
        %1779 = vmatprep.subr.bf16.mxu0 0
        %1780 = vmatpush2.bf16.xpose.msra.mxu0 0
        %1781 = vmatprep.subr.bf16.mxu0 0
        %1782 = vmatpush2.bf16.xpose.msra.mxu0 0
        %1783 = vmatprep.subr.bf16.mxu0 0
        %1784 = vmatpush2.bf16.xpose.msra.mxu0 0
        %1785 = vmatprep.subr.bf16.mxu0 0
        %1786 = vmatpush2.bf16.xpose.msra.mxu0 0
        %1787 = vmatprep.subr.bf16.mxu0 0
        %1788 = vmatpush2.bf16.xpose.msra.mxu0 0
        %1789 = vmatprep.subr.bf16.mxu0 0
        %1790 = vmatpush2.bf16.xpose.msra.mxu0 0
        %1791 = vmatprep.subr.bf16.mxu0 0
        %1792 = vmatpush2.bf16.xpose.msra.mxu0 0
        %1793 = vmatprep.subr.bf16.mxu0 0
        %1794 = vmatpush2.bf16.xpose.msra.mxu0 0
        %1795 = vmatprep.mubr.bf16.mxu0 0
        %1796 = vmatmul.mubr.bf16.gmra.mxu0 %v1758
        %v1797 = vpop.f32.mrf.mxu0
        %v1798 = vadd.f32 0.0, %v1797
        %v1799 = vpop.f32.mrf.mxu0
        %v1800 = vpop.f32.mrf.mxu0
        %v1801 = vpop.f32.mrf.mxu0
        %1802 = vdwg.mxu0
        %1804 = vrot.lane.b32.xlu0 %v1602, 96
        %v1805 = vpop.permute.xlu0 %1804
        %v1807 = vsel %vm1609, %v1602, 0
        %v1810 = vsel %vm1609, %v1805, 0
        %1812 = vmatprep.subr.bf16.mxu0 0
        %1813 = vmatpush1.bf16.xpose.msra.mxu0 0
        %1814 = vmatprep.subr.bf16.mxu0 0
        %1815 = vmatpush1.bf16.xpose.msra.mxu0 0
        %1816 = vmatprep.subr.bf16.mxu0 0
        %1817 = vmatpush1.bf16.xpose.msra.mxu0 0
        %1818 = vmatprep.subr.bf16.mxu0 0
        %1819 = vmatpush1.bf16.xpose.msra.mxu0 0
        %1820 = vmatprep.subr.bf16.mxu0 0
        %1821 = vmatpush1.bf16.xpose.msra.mxu0 0
        %1822 = vmatprep.subr.bf16.mxu0 0
        %1823 = vmatpush1.bf16.xpose.msra.mxu0 0
        %1824 = vmatprep.subr.bf16.mxu0 0
        %1825 = vmatpush1.bf16.xpose.msra.mxu0 0
        %1826 = vmatprep.subr.bf16.mxu0 0
        %1827 = vmatpush1.bf16.xpose.msra.mxu0 %v1810
        %1828 = vmatprep.subr.bf16.mxu0 0
        %1829 = vmatpush2.bf16.xpose.msra.mxu0 0
        %1830 = vmatprep.subr.bf16.mxu0 0
        %1831 = vmatpush2.bf16.xpose.msra.mxu0 0
        %1832 = vmatprep.subr.bf16.mxu0 0
        %1833 = vmatpush2.bf16.xpose.msra.mxu0 0
        %1834 = vmatprep.subr.bf16.mxu0 0
        %1835 = vmatpush2.bf16.xpose.msra.mxu0 0
        %1836 = vmatprep.subr.bf16.mxu0 0
        %1837 = vmatpush2.bf16.xpose.msra.mxu0 0
        %1838 = vmatprep.subr.bf16.mxu0 0
        %1839 = vmatpush2.bf16.xpose.msra.mxu0 0
        %1840 = vmatprep.subr.bf16.mxu0 0
        %1841 = vmatpush2.bf16.xpose.msra.mxu0 0
        %1842 = vmatprep.subr.bf16.mxu0 0
        %1843 = vmatpush2.bf16.xpose.msra.mxu0 0
        %1844 = vmatprep.mubr.bf16.mxu0 0
        %1845 = vmatmul.mubr.bf16.gmra.mxu0 %v1807
        %v1846 = vpop.f32.mrf.mxu0
        %v1847 = vadd.f32 0.0, %v1846
        %v1848 = vpop.f32.mrf.mxu0
        %v1849 = vpop.f32.mrf.mxu0
        %v1850 = vpop.f32.mrf.mxu0
        %1851 = vdwg.mxu0
        %1853 = vrot.lane.b32.xlu0 %v1603, 96
        %v1854 = vpop.permute.xlu0 %1853
        %v1856 = vsel %vm1609, %v1603, 0
        %v1859 = vsel %vm1609, %v1854, 0
        %1861 = vmatprep.subr.bf16.mxu0 0
        %1862 = vmatpush1.bf16.xpose.msra.mxu0 0
        %1863 = vmatprep.subr.bf16.mxu0 0
        %1864 = vmatpush1.bf16.xpose.msra.mxu0 0
        %1865 = vmatprep.subr.bf16.mxu0 0
        %1866 = vmatpush1.bf16.xpose.msra.mxu0 0
        %1867 = vmatprep.subr.bf16.mxu0 0
        %1868 = vmatpush1.bf16.xpose.msra.mxu0 0
        %1869 = vmatprep.subr.bf16.mxu0 0
        %1870 = vmatpush1.bf16.xpose.msra.mxu0 0
        %1871 = vmatprep.subr.bf16.mxu0 0
        %1872 = vmatpush1.bf16.xpose.msra.mxu0 0
        %1873 = vmatprep.subr.bf16.mxu0 0
        %1874 = vmatpush1.bf16.xpose.msra.mxu0 0
        %1875 = vmatprep.subr.bf16.mxu0 0
        %1876 = vmatpush1.bf16.xpose.msra.mxu0 %v1859
        %1877 = vmatprep.subr.bf16.mxu0 0
        %1878 = vmatpush2.bf16.xpose.msra.mxu0 0
        %1879 = vmatprep.subr.bf16.mxu0 0
        %1880 = vmatpush2.bf16.xpose.msra.mxu0 0
        %1881 = vmatprep.subr.bf16.mxu0 0
        %1882 = vmatpush2.bf16.xpose.msra.mxu0 0
        %1883 = vmatprep.subr.bf16.mxu0 0
        %1884 = vmatpush2.bf16.xpose.msra.mxu0 0
        %1885 = vmatprep.subr.bf16.mxu0 0
        %1886 = vmatpush2.bf16.xpose.msra.mxu0 0
        %1887 = vmatprep.subr.bf16.mxu0 0
        %1888 = vmatpush2.bf16.xpose.msra.mxu0 0
        %1889 = vmatprep.subr.bf16.mxu0 0
        %1890 = vmatpush2.bf16.xpose.msra.mxu0 0
        %1891 = vmatprep.subr.bf16.mxu0 0
        %1892 = vmatpush2.bf16.xpose.msra.mxu0 0
        %1893 = vmatprep.mubr.bf16.mxu0 0
        %1894 = vmatmul.mubr.bf16.gmra.mxu0 %v1856
        %v1895 = vpop.f32.mrf.mxu0
        %v1896 = vadd.f32 0.0, %v1895
        %v1897 = vpop.f32.mrf.mxu0
        %v1898 = vpop.f32.mrf.mxu0
        %v1899 = vpop.f32.mrf.mxu0
        %1900 = vdwg.mxu0
        %1902 = vrot.lane.b32.xlu0 %v1604, 96
        %v1903 = vpop.permute.xlu0 %1902
        %v1905 = vsel %vm1609, %v1604, 0
        %v1908 = vsel %vm1609, %v1903, 0
        %1910 = vmatprep.subr.bf16.mxu0 0
        %1911 = vmatpush1.bf16.xpose.msra.mxu0 0
        %1912 = vmatprep.subr.bf16.mxu0 0
        %1913 = vmatpush1.bf16.xpose.msra.mxu0 0
        %1914 = vmatprep.subr.bf16.mxu0 0
        %1915 = vmatpush1.bf16.xpose.msra.mxu0 0
        %1916 = vmatprep.subr.bf16.mxu0 0
        %1917 = vmatpush1.bf16.xpose.msra.mxu0 0
        %1918 = vmatprep.subr.bf16.mxu0 0
        %1919 = vmatpush1.bf16.xpose.msra.mxu0 0
        %1920 = vmatprep.subr.bf16.mxu0 0
        %1921 = vmatpush1.bf16.xpose.msra.mxu0 0
        %1922 = vmatprep.subr.bf16.mxu0 0
        %1923 = vmatpush1.bf16.xpose.msra.mxu0 0
        %1924 = vmatprep.subr.bf16.mxu0 0
        %1925 = vmatpush1.bf16.xpose.msra.mxu0 %v1908
        %1926 = vmatprep.subr.bf16.mxu0 0
        %1927 = vmatpush2.bf16.xpose.msra.mxu0 0
        %1928 = vmatprep.subr.bf16.mxu0 0
        %1929 = vmatpush2.bf16.xpose.msra.mxu0 0
        %1930 = vmatprep.subr.bf16.mxu0 0
        %1931 = vmatpush2.bf16.xpose.msra.mxu0 0
        %1932 = vmatprep.subr.bf16.mxu0 0
        %1933 = vmatpush2.bf16.xpose.msra.mxu0 0
        %1934 = vmatprep.subr.bf16.mxu0 0
        %1935 = vmatpush2.bf16.xpose.msra.mxu0 0
        %1936 = vmatprep.subr.bf16.mxu0 0
        %1937 = vmatpush2.bf16.xpose.msra.mxu0 0
        %1938 = vmatprep.subr.bf16.mxu0 0
        %1939 = vmatpush2.bf16.xpose.msra.mxu0 0
        %1940 = vmatprep.subr.bf16.mxu0 0
        %1941 = vmatpush2.bf16.xpose.msra.mxu0 0
        %1942 = vmatprep.mubr.bf16.mxu0 0
        %1943 = vmatmul.mubr.bf16.gmra.mxu0 %v1905
        %v1944 = vpop.f32.mrf.mxu0
        %v1945 = vadd.f32 0.0, %v1944
        %v1946 = vpop.f32.mrf.mxu0
        %v1947 = vpop.f32.mrf.mxu0
        %v1948 = vpop.f32.mrf.mxu0
        %1949 = vdwg.mxu0
        %1951 = vrot.lane.b32.xlu0 %v1605, 96
        %v1952 = vpop.permute.xlu0 %1951
        %v1954 = vsel %vm1609, %v1605, 0
        %v1957 = vsel %vm1609, %v1952, 0
        %1959 = vmatprep.subr.bf16.mxu0 0
        %1960 = vmatpush1.bf16.xpose.msra.mxu0 0
        %1961 = vmatprep.subr.bf16.mxu0 0
        %1962 = vmatpush1.bf16.xpose.msra.mxu0 0
        %1963 = vmatprep.subr.bf16.mxu0 0
        %1964 = vmatpush1.bf16.xpose.msra.mxu0 0
        %1965 = vmatprep.subr.bf16.mxu0 0
        %1966 = vmatpush1.bf16.xpose.msra.mxu0 0
        %1967 = vmatprep.subr.bf16.mxu0 0
        %1968 = vmatpush1.bf16.xpose.msra.mxu0 0
        %1969 = vmatprep.subr.bf16.mxu0 0
        %1970 = vmatpush1.bf16.xpose.msra.mxu0 0
        %1971 = vmatprep.subr.bf16.mxu0 0
        %1972 = vmatpush1.bf16.xpose.msra.mxu0 0
        %1973 = vmatprep.subr.bf16.mxu0 0
        %1974 = vmatpush1.bf16.xpose.msra.mxu0 %v1957
        %1975 = vmatprep.subr.bf16.mxu0 0
        %1976 = vmatpush2.bf16.xpose.msra.mxu0 0
        %1977 = vmatprep.subr.bf16.mxu0 0
        %1978 = vmatpush2.bf16.xpose.msra.mxu0 0
        %1979 = vmatprep.subr.bf16.mxu0 0
        %1980 = vmatpush2.bf16.xpose.msra.mxu0 0
        %1981 = vmatprep.subr.bf16.mxu0 0
        %1982 = vmatpush2.bf16.xpose.msra.mxu0 0
        %1983 = vmatprep.subr.bf16.mxu0 0
        %1984 = vmatpush2.bf16.xpose.msra.mxu0 0
        %1985 = vmatprep.subr.bf16.mxu0 0
        %1986 = vmatpush2.bf16.xpose.msra.mxu0 0
        %1987 = vmatprep.subr.bf16.mxu0 0
        %1988 = vmatpush2.bf16.xpose.msra.mxu0 0
        %1989 = vmatprep.subr.bf16.mxu0 0
        %1990 = vmatpush2.bf16.xpose.msra.mxu0 0
        %1991 = vmatprep.mubr.bf16.mxu0 0
        %1992 = vmatmul.mubr.bf16.gmra.mxu0 %v1954
        %v1993 = vpop.f32.mrf.mxu0
        %v1994 = vadd.f32 0.0, %v1993
        %v1995 = vpop.f32.mrf.mxu0
        %v1996 = vpop.f32.mrf.mxu0
        %v1997 = vpop.f32.mrf.mxu0
        %1998 = vdwg.mxu0
        %v1999 = vmul.f32 %v1651, 0.35355338
        %v2000 = vmul.f32 %v1700, 0.35355338
        %v2001 = vmul.f32 %v1749, 0.35355338
        %v2002 = vmul.f32 %v1798, 0.35355338
        %v2003 = vmul.f32 %v1847, 0.35355338
        %v2004 = vmul.f32 %v1896, 0.35355338
        %v2005 = vmul.f32 %v1945, 0.35355338
        %v2006 = vmul.f32 %v1994, 0.35355338
        %vm2007 = vcmask 36864
        %v2008 = vsel %vm2007, %v1999, -inf
        %2009 = vmax.xlane.f32.xlu0 %v2008
        %v2010 = vpop.xlane.xlu0 %2009
        %v2011 = vsel %vm2007, %v2000, -inf
        %2012 = vmax.xlane.f32.xlu0 %v2011
        %v2013 = vpop.xlane.xlu0 %2012
        %v2014 = vsel %vm2007, %v2001, -inf
        %2015 = vmax.xlane.f32.xlu0 %v2014
        %v2016 = vpop.xlane.xlu0 %2015
        %v2017 = vsel %vm2007, %v2002, -inf
        %2018 = vmax.xlane.f32.xlu0 %v2017
        %v2019 = vpop.xlane.xlu0 %2018
        %v2020 = vsel %vm2007, %v2003, -inf
        %2021 = vmax.xlane.f32.xlu0 %v2020
        %v2022 = vpop.xlane.xlu0 %2021
        %v2023 = vsel %vm2007, %v2004, -inf
        %2024 = vmax.xlane.f32.xlu0 %v2023
        %v2025 = vpop.xlane.xlu0 %2024
        %v2026 = vsel %vm2007, %v2005, -inf
        %2027 = vmax.xlane.f32.xlu0 %v2026
        %v2028 = vpop.xlane.xlu0 %2027
        %v2029 = vsel %vm2007, %v2006, -inf
        %2030 = vmax.xlane.f32.xlu0 %v2029
        %v2031 = vpop.xlane.xlu0 %2030
        %v2032 = vsub.f32 %v1999, %v2010
        %v2033 = vsub.f32 %v2000, %v2013
        %v2034 = vsub.f32 %v2001, %v2016
        %v2035 = vsub.f32 %v2002, %v2019
        %v2036 = vsub.f32 %v2003, %v2022
        %v2037 = vsub.f32 %v2004, %v2025
        %v2038 = vsub.f32 %v2005, %v2028
        %v2039 = vsub.f32 %v2006, %v2031
        %v2040 = vmul.f32 %v2032, 1.442695
        %v2041 = vpow.pop %v2040
        %v2042 = vmul.f32 %v2033, 1.442695
        %v2043 = vpow.pop %v2042
        %v2044 = vmul.f32 %v2034, 1.442695
        %v2045 = vpow.pop %v2044
        %v2046 = vmul.f32 %v2035, 1.442695
        %v2047 = vpow.pop %v2046
        %v2048 = vmul.f32 %v2036, 1.442695
        %v2049 = vpow.pop %v2048
        %v2050 = vmul.f32 %v2037, 1.442695
        %v2051 = vpow.pop %v2050
        %v2052 = vmul.f32 %v2038, 1.442695
        %v2053 = vpow.pop %v2052
        %v2054 = vmul.f32 %v2039, 1.442695
        %v2055 = vpow.pop %v2054
        %v2056 = vsel %vm2007, %v2041, 0.0
        %2057 = vadd.xlane.f32.xlu0 %v2056
        %v2058 = vpop.xlane.xlu0 %2057
        %v2059 = vsel %vm2007, %v2043, 0.0
        %2060 = vadd.xlane.f32.xlu0 %v2059
        %v2061 = vpop.xlane.xlu0 %2060
        %v2062 = vsel %vm2007, %v2045, 0.0
        %2063 = vadd.xlane.f32.xlu0 %v2062
        %v2064 = vpop.xlane.xlu0 %2063
        %v2065 = vsel %vm2007, %v2047, 0.0
        %2066 = vadd.xlane.f32.xlu0 %v2065
        %v2067 = vpop.xlane.xlu0 %2066
        %v2068 = vsel %vm2007, %v2049, 0.0
        %2069 = vadd.xlane.f32.xlu0 %v2068
        %v2070 = vpop.xlane.xlu0 %2069
        %v2071 = vsel %vm2007, %v2051, 0.0
        %2072 = vadd.xlane.f32.xlu0 %v2071
        %v2073 = vpop.xlane.xlu0 %2072
        %v2074 = vsel %vm2007, %v2053, 0.0
        %2075 = vadd.xlane.f32.xlu0 %v2074
        %v2076 = vpop.xlane.xlu0 %2075
        %v2077 = vsel %vm2007, %v2055, 0.0
        %2078 = vadd.xlane.f32.xlu0 %v2077
        %v2079 = vpop.xlane.xlu0 %2078
        %v2080 = vrcp.pop %v2058
        %v2081 = vrcp.pop %v2061
        %v2082 = vrcp.pop %v2064
        %v2083 = vrcp.pop %v2067
        %v2084 = vrcp.pop %v2070
        %v2085 = vrcp.pop %v2073
        %v2086 = vrcp.pop %v2076
        %v2087 = vrcp.pop %v2079
        %v2088 = vmul.f32 %v2041, %v2080
        %v2089 = vmul.f32 %v2043, %v2081
        %v2090 = vmul.f32 %v2045, %v2082
        %v2091 = vmul.f32 %v2047, %v2083
        %v2092 = vmul.f32 %v2049, %v2084
        %v2093 = vmul.f32 %v2051, %v2085
        %v2094 = vmul.f32 %v2053, %v2086
        %v2095 = vmul.f32 %v2055, %v2087
        %v2096 = vpack.c.bf16 %v2088, %v2088
        %v2097 = vpack.c.bf16 %v2089, %v2089
        %v2098 = vpack.c.bf16 %v2090, %v2090
        %v2099 = vpack.c.bf16 %v2091, %v2091
        %v2100 = vpack.c.bf16 %v2092, %v2092
        %v2101 = vpack.c.bf16 %v2093, %v2093
        %v2102 = vpack.c.bf16 %v2094, %v2094
        %v2103 = vpack.c.bf16 %v2095, %v2095
        %2104 = vrot.lane.b32.xlu0 %v1598, 64
        %v2105 = vpop.permute.xlu0 %2104
        %vm2106 = vcmask 39936
        %v2108 = vsel %vm2106, %v2096, 0
        %vm2110 = vcmask 1041408
        %vm2111 = vcmask 1042432
        %v2112 = vsel %vm2110, 4294967295, 65535
        %v2113 = vsel %vm2111, %v2112, 0
        %v2115 = vand.u32 %v2105, %v2113
        %2117 = vmatprep.subr.bf16.mxu0 0
        %2118 = vmatpush1.bf16.msra.mxu0 0
        %2119 = vmatprep.subr.bf16.mxu0 0
        %2120 = vmatpush1.bf16.msra.mxu0 0
        %2121 = vmatprep.subr.bf16.mxu0 0
        %2122 = vmatpush1.bf16.msra.mxu0 0
        %2123 = vmatprep.subr.bf16.mxu0 0
        %2124 = vmatpush1.bf16.msra.mxu0 0
        %2125 = vmatprep.subr.bf16.mxu0 0
        %2126 = vmatpush1.bf16.msra.mxu0 0
        %2127 = vmatprep.subr.bf16.mxu0 0
        %2128 = vmatpush1.bf16.msra.mxu0 0
        %2129 = vmatprep.subr.bf16.mxu0 0
        %2130 = vmatpush1.bf16.msra.mxu0 0
        %2131 = vmatprep.subr.bf16.mxu0 0
        %2132 = vmatpush1.bf16.msra.mxu0 %v2115
        %2133 = vmatprep.subr.bf16.mxu0 0
        %2134 = vmatpush2.bf16.msra.mxu0 0
        %2135 = vmatprep.subr.bf16.mxu0 0
        %2136 = vmatpush2.bf16.msra.mxu0 0
        %2137 = vmatprep.subr.bf16.mxu0 0
        %2138 = vmatpush2.bf16.msra.mxu0 0
        %2139 = vmatprep.subr.bf16.mxu0 0
        %2140 = vmatpush2.bf16.msra.mxu0 0
        %2141 = vmatprep.subr.bf16.mxu0 0
        %2142 = vmatpush2.bf16.msra.mxu0 0
        %2143 = vmatprep.subr.bf16.mxu0 0
        %2144 = vmatpush2.bf16.msra.mxu0 0
        %2145 = vmatprep.subr.bf16.mxu0 0
        %2146 = vmatpush2.bf16.msra.mxu0 0
        %2147 = vmatprep.subr.bf16.mxu0 0
        %2148 = vmatpush2.bf16.msra.mxu0 0
        %2149 = vmatprep.mubr.bf16.mxu0 0
        %2150 = vmatmul.mubr.bf16.gmra.mxu0 %v2108
        %v2151 = vpop.f32.mrf.mxu0
        %v2152 = vadd.f32 0.0, %v2151
        %v2153 = vpop.f32.mrf.mxu0
        %v2154 = vpop.f32.mrf.mxu0
        %v2155 = vpop.f32.mrf.mxu0
        %2156 = vdwg.mxu0
        %2157 = vrot.lane.b32.xlu0 %v1599, 64
        %v2158 = vpop.permute.xlu0 %2157
        %v2160 = vsel %vm2106, %v2097, 0
        %v2163 = vand.u32 %v2158, %v2113
        %2165 = vmatprep.subr.bf16.mxu0 0
        %2166 = vmatpush1.bf16.msra.mxu0 0
        %2167 = vmatprep.subr.bf16.mxu0 0
        %2168 = vmatpush1.bf16.msra.mxu0 0
        %2169 = vmatprep.subr.bf16.mxu0 0
        %2170 = vmatpush1.bf16.msra.mxu0 0
        %2171 = vmatprep.subr.bf16.mxu0 0
        %2172 = vmatpush1.bf16.msra.mxu0 0
        %2173 = vmatprep.subr.bf16.mxu0 0
        %2174 = vmatpush1.bf16.msra.mxu0 0
        %2175 = vmatprep.subr.bf16.mxu0 0
        %2176 = vmatpush1.bf16.msra.mxu0 0
        %2177 = vmatprep.subr.bf16.mxu0 0
        %2178 = vmatpush1.bf16.msra.mxu0 0
        %2179 = vmatprep.subr.bf16.mxu0 0
        %2180 = vmatpush1.bf16.msra.mxu0 %v2163
        %2181 = vmatprep.subr.bf16.mxu0 0
        %2182 = vmatpush2.bf16.msra.mxu0 0
        %2183 = vmatprep.subr.bf16.mxu0 0
        %2184 = vmatpush2.bf16.msra.mxu0 0
        %2185 = vmatprep.subr.bf16.mxu0 0
        %2186 = vmatpush2.bf16.msra.mxu0 0
        %2187 = vmatprep.subr.bf16.mxu0 0
        %2188 = vmatpush2.bf16.msra.mxu0 0
        %2189 = vmatprep.subr.bf16.mxu0 0
        %2190 = vmatpush2.bf16.msra.mxu0 0
        %2191 = vmatprep.subr.bf16.mxu0 0
        %2192 = vmatpush2.bf16.msra.mxu0 0
        %2193 = vmatprep.subr.bf16.mxu0 0
        %2194 = vmatpush2.bf16.msra.mxu0 0
        %2195 = vmatprep.subr.bf16.mxu0 0
        %2196 = vmatpush2.bf16.msra.mxu0 0
        %2197 = vmatprep.mubr.bf16.mxu0 0
        %2198 = vmatmul.mubr.bf16.gmra.mxu0 %v2160
        %v2199 = vpop.f32.mrf.mxu0
        %v2200 = vadd.f32 0.0, %v2199
        %v2201 = vpop.f32.mrf.mxu0
        %v2202 = vpop.f32.mrf.mxu0
        %v2203 = vpop.f32.mrf.mxu0
        %2204 = vdwg.mxu0
        %2205 = vrot.lane.b32.xlu0 %v1600, 64
        %v2206 = vpop.permute.xlu0 %2205
        %v2208 = vsel %vm2106, %v2098, 0
        %v2211 = vand.u32 %v2206, %v2113
        %2213 = vmatprep.subr.bf16.mxu0 0
        %2214 = vmatpush1.bf16.msra.mxu0 0
        %2215 = vmatprep.subr.bf16.mxu0 0
        %2216 = vmatpush1.bf16.msra.mxu0 0
        %2217 = vmatprep.subr.bf16.mxu0 0
        %2218 = vmatpush1.bf16.msra.mxu0 0
        %2219 = vmatprep.subr.bf16.mxu0 0
        %2220 = vmatpush1.bf16.msra.mxu0 0
        %2221 = vmatprep.subr.bf16.mxu0 0
        %2222 = vmatpush1.bf16.msra.mxu0 0
        %2223 = vmatprep.subr.bf16.mxu0 0
        %2224 = vmatpush1.bf16.msra.mxu0 0
        %2225 = vmatprep.subr.bf16.mxu0 0
        %2226 = vmatpush1.bf16.msra.mxu0 0
        %2227 = vmatprep.subr.bf16.mxu0 0
        %2228 = vmatpush1.bf16.msra.mxu0 %v2211
        %2229 = vmatprep.subr.bf16.mxu0 0
        %2230 = vmatpush2.bf16.msra.mxu0 0
        %2231 = vmatprep.subr.bf16.mxu0 0
        %2232 = vmatpush2.bf16.msra.mxu0 0
        %2233 = vmatprep.subr.bf16.mxu0 0
        %2234 = vmatpush2.bf16.msra.mxu0 0
        %2235 = vmatprep.subr.bf16.mxu0 0
        %2236 = vmatpush2.bf16.msra.mxu0 0
        %2237 = vmatprep.subr.bf16.mxu0 0
        %2238 = vmatpush2.bf16.msra.mxu0 0
        %2239 = vmatprep.subr.bf16.mxu0 0
        %2240 = vmatpush2.bf16.msra.mxu0 0
        %2241 = vmatprep.subr.bf16.mxu0 0
        %2242 = vmatpush2.bf16.msra.mxu0 0
        %2243 = vmatprep.subr.bf16.mxu0 0
        %2244 = vmatpush2.bf16.msra.mxu0 0
        %2245 = vmatprep.mubr.bf16.mxu0 0
        %2246 = vmatmul.mubr.bf16.gmra.mxu0 %v2208
        %v2247 = vpop.f32.mrf.mxu0
        %v2248 = vadd.f32 0.0, %v2247
        %v2249 = vpop.f32.mrf.mxu0
        %v2250 = vpop.f32.mrf.mxu0
        %v2251 = vpop.f32.mrf.mxu0
        %2252 = vdwg.mxu0
        %2253 = vrot.lane.b32.xlu0 %v1601, 64
        %v2254 = vpop.permute.xlu0 %2253
        %v2256 = vsel %vm2106, %v2099, 0
        %v2259 = vand.u32 %v2254, %v2113
        %2261 = vmatprep.subr.bf16.mxu0 0
        %2262 = vmatpush1.bf16.msra.mxu0 0
        %2263 = vmatprep.subr.bf16.mxu0 0
        %2264 = vmatpush1.bf16.msra.mxu0 0
        %2265 = vmatprep.subr.bf16.mxu0 0
        %2266 = vmatpush1.bf16.msra.mxu0 0
        %2267 = vmatprep.subr.bf16.mxu0 0
        %2268 = vmatpush1.bf16.msra.mxu0 0
        %2269 = vmatprep.subr.bf16.mxu0 0
        %2270 = vmatpush1.bf16.msra.mxu0 0
        %2271 = vmatprep.subr.bf16.mxu0 0
        %2272 = vmatpush1.bf16.msra.mxu0 0
        %2273 = vmatprep.subr.bf16.mxu0 0
        %2274 = vmatpush1.bf16.msra.mxu0 0
        %2275 = vmatprep.subr.bf16.mxu0 0
        %2276 = vmatpush1.bf16.msra.mxu0 %v2259
        %2277 = vmatprep.subr.bf16.mxu0 0
        %2278 = vmatpush2.bf16.msra.mxu0 0
        %2279 = vmatprep.subr.bf16.mxu0 0
        %2280 = vmatpush2.bf16.msra.mxu0 0
        %2281 = vmatprep.subr.bf16.mxu0 0
        %2282 = vmatpush2.bf16.msra.mxu0 0
        %2283 = vmatprep.subr.bf16.mxu0 0
        %2284 = vmatpush2.bf16.msra.mxu0 0
        %2285 = vmatprep.subr.bf16.mxu0 0
        %2286 = vmatpush2.bf16.msra.mxu0 0
        %2287 = vmatprep.subr.bf16.mxu0 0
        %2288 = vmatpush2.bf16.msra.mxu0 0
        %2289 = vmatprep.subr.bf16.mxu0 0
        %2290 = vmatpush2.bf16.msra.mxu0 0
        %2291 = vmatprep.subr.bf16.mxu0 0
        %2292 = vmatpush2.bf16.msra.mxu0 0
        %2293 = vmatprep.mubr.bf16.mxu0 0
        %2294 = vmatmul.mubr.bf16.gmra.mxu0 %v2256
        %v2295 = vpop.f32.mrf.mxu0
        %v2296 = vadd.f32 0.0, %v2295
        %v2297 = vpop.f32.mrf.mxu0
        %v2298 = vpop.f32.mrf.mxu0
        %v2299 = vpop.f32.mrf.mxu0
        %2300 = vdwg.mxu0
        %2301 = vrot.lane.b32.xlu0 %v1602, 64
        %v2302 = vpop.permute.xlu0 %2301
        %v2304 = vsel %vm2106, %v2100, 0
        %v2307 = vand.u32 %v2302, %v2113
        %2309 = vmatprep.subr.bf16.mxu0 0
        %2310 = vmatpush1.bf16.msra.mxu0 0
        %2311 = vmatprep.subr.bf16.mxu0 0
        %2312 = vmatpush1.bf16.msra.mxu0 0
        %2313 = vmatprep.subr.bf16.mxu0 0
        %2314 = vmatpush1.bf16.msra.mxu0 0
        %2315 = vmatprep.subr.bf16.mxu0 0
        %2316 = vmatpush1.bf16.msra.mxu0 0
        %2317 = vmatprep.subr.bf16.mxu0 0
        %2318 = vmatpush1.bf16.msra.mxu0 0
        %2319 = vmatprep.subr.bf16.mxu0 0
        %2320 = vmatpush1.bf16.msra.mxu0 0
        %2321 = vmatprep.subr.bf16.mxu0 0
        %2322 = vmatpush1.bf16.msra.mxu0 0
        %2323 = vmatprep.subr.bf16.mxu0 0
        %2324 = vmatpush1.bf16.msra.mxu0 %v2307
        %2325 = vmatprep.subr.bf16.mxu0 0
        %2326 = vmatpush2.bf16.msra.mxu0 0
        %2327 = vmatprep.subr.bf16.mxu0 0
        %2328 = vmatpush2.bf16.msra.mxu0 0
        %2329 = vmatprep.subr.bf16.mxu0 0
        %2330 = vmatpush2.bf16.msra.mxu0 0
        %2331 = vmatprep.subr.bf16.mxu0 0
        %2332 = vmatpush2.bf16.msra.mxu0 0
        %2333 = vmatprep.subr.bf16.mxu0 0
        %2334 = vmatpush2.bf16.msra.mxu0 0
        %2335 = vmatprep.subr.bf16.mxu0 0
        %2336 = vmatpush2.bf16.msra.mxu0 0
        %2337 = vmatprep.subr.bf16.mxu0 0
        %2338 = vmatpush2.bf16.msra.mxu0 0
        %2339 = vmatprep.subr.bf16.mxu0 0
        %2340 = vmatpush2.bf16.msra.mxu0 0
        %2341 = vmatprep.mubr.bf16.mxu0 0
        %2342 = vmatmul.mubr.bf16.gmra.mxu0 %v2304
        %v2343 = vpop.f32.mrf.mxu0
        %v2344 = vadd.f32 0.0, %v2343
        %v2345 = vpop.f32.mrf.mxu0
        %v2346 = vpop.f32.mrf.mxu0
        %v2347 = vpop.f32.mrf.mxu0
        %2348 = vdwg.mxu0
        %2349 = vrot.lane.b32.xlu0 %v1603, 64
        %v2350 = vpop.permute.xlu0 %2349
        %v2352 = vsel %vm2106, %v2101, 0
        %v2355 = vand.u32 %v2350, %v2113
        %2357 = vmatprep.subr.bf16.mxu0 0
        %2358 = vmatpush1.bf16.msra.mxu0 0
        %2359 = vmatprep.subr.bf16.mxu0 0
        %2360 = vmatpush1.bf16.msra.mxu0 0
        %2361 = vmatprep.subr.bf16.mxu0 0
        %2362 = vmatpush1.bf16.msra.mxu0 0
        %2363 = vmatprep.subr.bf16.mxu0 0
        %2364 = vmatpush1.bf16.msra.mxu0 0
        %2365 = vmatprep.subr.bf16.mxu0 0
        %2366 = vmatpush1.bf16.msra.mxu0 0
        %2367 = vmatprep.subr.bf16.mxu0 0
        %2368 = vmatpush1.bf16.msra.mxu0 0
        %2369 = vmatprep.subr.bf16.mxu0 0
        %2370 = vmatpush1.bf16.msra.mxu0 0
        %2371 = vmatprep.subr.bf16.mxu0 0
        %2372 = vmatpush1.bf16.msra.mxu0 %v2355
        %2373 = vmatprep.subr.bf16.mxu0 0
        %2374 = vmatpush2.bf16.msra.mxu0 0
        %2375 = vmatprep.subr.bf16.mxu0 0
        %2376 = vmatpush2.bf16.msra.mxu0 0
        %2377 = vmatprep.subr.bf16.mxu0 0
        %2378 = vmatpush2.bf16.msra.mxu0 0
        %2379 = vmatprep.subr.bf16.mxu0 0
        %2380 = vmatpush2.bf16.msra.mxu0 0
        %2381 = vmatprep.subr.bf16.mxu0 0
        %2382 = vmatpush2.bf16.msra.mxu0 0
        %2383 = vmatprep.subr.bf16.mxu0 0
        %2384 = vmatpush2.bf16.msra.mxu0 0
        %2385 = vmatprep.subr.bf16.mxu0 0
        %2386 = vmatpush2.bf16.msra.mxu0 0
        %2387 = vmatprep.subr.bf16.mxu0 0
        %2388 = vmatpush2.bf16.msra.mxu0 0
        %2389 = vmatprep.mubr.bf16.mxu0 0
        %2390 = vmatmul.mubr.bf16.gmra.mxu0 %v2352
        %v2391 = vpop.f32.mrf.mxu0
        %v2392 = vadd.f32 0.0, %v2391
        %v2393 = vpop.f32.mrf.mxu0
        %v2394 = vpop.f32.mrf.mxu0
        %v2395 = vpop.f32.mrf.mxu0
        %2396 = vdwg.mxu0
        %2397 = vrot.lane.b32.xlu0 %v1604, 64
        %v2398 = vpop.permute.xlu0 %2397
        %v2400 = vsel %vm2106, %v2102, 0
        %v2403 = vand.u32 %v2398, %v2113
        %2405 = vmatprep.subr.bf16.mxu0 0
        %2406 = vmatpush1.bf16.msra.mxu0 0
        %2407 = vmatprep.subr.bf16.mxu0 0
        %2408 = vmatpush1.bf16.msra.mxu0 0
        %2409 = vmatprep.subr.bf16.mxu0 0
        %2410 = vmatpush1.bf16.msra.mxu0 0
        %2411 = vmatprep.subr.bf16.mxu0 0
        %2412 = vmatpush1.bf16.msra.mxu0 0
        %2413 = vmatprep.subr.bf16.mxu0 0
        %2414 = vmatpush1.bf16.msra.mxu0 0
        %2415 = vmatprep.subr.bf16.mxu0 0
        %2416 = vmatpush1.bf16.msra.mxu0 0
        %2417 = vmatprep.subr.bf16.mxu0 0
        %2418 = vmatpush1.bf16.msra.mxu0 0
        %2419 = vmatprep.subr.bf16.mxu0 0
        %2420 = vmatpush1.bf16.msra.mxu0 %v2403
        %2421 = vmatprep.subr.bf16.mxu0 0
        %2422 = vmatpush2.bf16.msra.mxu0 0
        %2423 = vmatprep.subr.bf16.mxu0 0
        %2424 = vmatpush2.bf16.msra.mxu0 0
        %2425 = vmatprep.subr.bf16.mxu0 0
        %2426 = vmatpush2.bf16.msra.mxu0 0
        %2427 = vmatprep.subr.bf16.mxu0 0
        %2428 = vmatpush2.bf16.msra.mxu0 0
        %2429 = vmatprep.subr.bf16.mxu0 0
        %2430 = vmatpush2.bf16.msra.mxu0 0
        %2431 = vmatprep.subr.bf16.mxu0 0
        %2432 = vmatpush2.bf16.msra.mxu0 0
        %2433 = vmatprep.subr.bf16.mxu0 0
        %2434 = vmatpush2.bf16.msra.mxu0 0
        %2435 = vmatprep.subr.bf16.mxu0 0
        %2436 = vmatpush2.bf16.msra.mxu0 0
        %2437 = vmatprep.mubr.bf16.mxu0 0
        %2438 = vmatmul.mubr.bf16.gmra.mxu0 %v2400
        %v2439 = vpop.f32.mrf.mxu0
        %v2440 = vadd.f32 0.0, %v2439
        %v2441 = vpop.f32.mrf.mxu0
        %v2442 = vpop.f32.mrf.mxu0
        %v2443 = vpop.f32.mrf.mxu0
        %2444 = vdwg.mxu0
        %2445 = vrot.lane.b32.xlu0 %v1605, 64
        %v2446 = vpop.permute.xlu0 %2445
        %v2448 = vsel %vm2106, %v2103, 0
        %v2451 = vand.u32 %v2446, %v2113
        %2453 = vmatprep.subr.bf16.mxu0 0
        %2454 = vmatpush1.bf16.msra.mxu0 0
        %2455 = vmatprep.subr.bf16.mxu0 0
        %2456 = vmatpush1.bf16.msra.mxu0 0
        %2457 = vmatprep.subr.bf16.mxu0 0
        %2458 = vmatpush1.bf16.msra.mxu0 0
        %2459 = vmatprep.subr.bf16.mxu0 0
        %2460 = vmatpush1.bf16.msra.mxu0 0
        %2461 = vmatprep.subr.bf16.mxu0 0
        %2462 = vmatpush1.bf16.msra.mxu0 0
        %2463 = vmatprep.subr.bf16.mxu0 0
        %2464 = vmatpush1.bf16.msra.mxu0 0
        %2465 = vmatprep.subr.bf16.mxu0 0
        %2466 = vmatpush1.bf16.msra.mxu0 0
        %2467 = vmatprep.subr.bf16.mxu0 0
        %2468 = vmatpush1.bf16.msra.mxu0 %v2451
        %2469 = vmatprep.subr.bf16.mxu0 0
        %2470 = vmatpush2.bf16.msra.mxu0 0
        %2471 = vmatprep.subr.bf16.mxu0 0
        %2472 = vmatpush2.bf16.msra.mxu0 0
        %2473 = vmatprep.subr.bf16.mxu0 0
        %2474 = vmatpush2.bf16.msra.mxu0 0
        %2475 = vmatprep.subr.bf16.mxu0 0
        %2476 = vmatpush2.bf16.msra.mxu0 0
        %2477 = vmatprep.subr.bf16.mxu0 0
        %2478 = vmatpush2.bf16.msra.mxu0 0
        %2479 = vmatprep.subr.bf16.mxu0 0
        %2480 = vmatpush2.bf16.msra.mxu0 0
        %2481 = vmatprep.subr.bf16.mxu0 0
        %2482 = vmatpush2.bf16.msra.mxu0 0
        %2483 = vmatprep.subr.bf16.mxu0 0
        %2484 = vmatpush2.bf16.msra.mxu0 0
        %2485 = vmatprep.mubr.bf16.mxu0 0
        %2486 = vmatmul.mubr.bf16.gmra.mxu0 %v2448
        %v2487 = vpop.f32.mrf.mxu0
        %v2488 = vadd.f32 0.0, %v2487
        %v2489 = vpop.f32.mrf.mxu0
        %v2490 = vpop.f32.mrf.mxu0
        %v2491 = vpop.f32.mrf.mxu0
        %2492 = vdwg.mxu0
        %v2501 = vcombine.high %v2152, %v2152
        %v2503 = vunpack.c.l.s4 1966171168
        %v2504 = vunpack.c.0.s8 %v2503
        %v2505 = vlaneseq
        %v2506 = vshrl.u32 %v2505, 7
        %v2507 = vsub.s32 %v2504, %v2506
        %v2508 = vrot.slane %v2152, %v2507
        %v2510 = vunpack.c.l.s4 1966171168
        %v2511 = vunpack.c.0.s8 %v2510
        %v2512 = vlaneseq
        %v2513 = vshrl.u32 %v2512, 7
        %v2514 = vsub.s32 %v2511, %v2513
        %v2515 = vrot.slane %v2501, %v2514
        %v2516 = vcombine.high %v2508, %v2508
        %v2518 = vunpack.c.l.s4 1966171168
        %v2519 = vunpack.c.0.s8 %v2518
        %v2520 = vlaneseq
        %v2521 = vshrl.u32 %v2520, 7
        %v2522 = vsub.s32 %v2519, %v2521
        %v2523 = vrot.slane %v2508, %v2522
        %v2525 = vunpack.c.l.s4 1966171168
        %v2526 = vunpack.c.0.s8 %v2525
        %v2527 = vlaneseq
        %v2528 = vshrl.u32 %v2527, 7
        %v2529 = vsub.s32 %v2526, %v2528
        %v2530 = vrot.slane %v2515, %v2529
        %v2532 = vunpack.c.l.s4 1966171168
        %v2533 = vunpack.c.0.s8 %v2532
        %v2534 = vlaneseq
        %v2535 = vshrl.u32 %v2534, 7
        %v2536 = vsub.s32 %v2533, %v2535
        %v2537 = vrot.slane %v2516, %v2536
        %v2538 = vcombine.high %v2523, %v2523
        %v2539 = vcombine.high %v2537, %v2537
        %v2540 = vcombine.high %v2200, %v2200
        %v2542 = vunpack.c.l.s4 1966171168
        %v2543 = vunpack.c.0.s8 %v2542
        %v2544 = vlaneseq
        %v2545 = vshrl.u32 %v2544, 7
        %v2546 = vsub.s32 %v2543, %v2545
        %v2547 = vrot.slane %v2200, %v2546
        %v2549 = vunpack.c.l.s4 1966171168
        %v2550 = vunpack.c.0.s8 %v2549
        %v2551 = vlaneseq
        %v2552 = vshrl.u32 %v2551, 7
        %v2553 = vsub.s32 %v2550, %v2552
        %v2554 = vrot.slane %v2540, %v2553
        %v2555 = vcombine.high %v2547, %v2547
        %v2557 = vunpack.c.l.s4 1966171168
        %v2558 = vunpack.c.0.s8 %v2557
        %v2559 = vlaneseq
        %v2560 = vshrl.u32 %v2559, 7
        %v2561 = vsub.s32 %v2558, %v2560
        %v2562 = vrot.slane %v2547, %v2561
        %v2564 = vunpack.c.l.s4 1966171168
        %v2565 = vunpack.c.0.s8 %v2564
        %v2566 = vlaneseq
        %v2567 = vshrl.u32 %v2566, 7
        %v2568 = vsub.s32 %v2565, %v2567
        %v2569 = vrot.slane %v2554, %v2568
        %v2571 = vunpack.c.l.s4 1966171168
        %v2572 = vunpack.c.0.s8 %v2571
        %v2573 = vlaneseq
        %v2574 = vshrl.u32 %v2573, 7
        %v2575 = vsub.s32 %v2572, %v2574
        %v2576 = vrot.slane %v2555, %v2575
        %v2577 = vcombine.high %v2562, %v2562
        %v2578 = vcombine.high %v2576, %v2576
        %v2579 = vcombine.high %v2248, %v2248
        %v2581 = vunpack.c.l.s4 1966171168
        %v2582 = vunpack.c.0.s8 %v2581
        %v2583 = vlaneseq
        %v2584 = vshrl.u32 %v2583, 7
        %v2585 = vsub.s32 %v2582, %v2584
        %v2586 = vrot.slane %v2248, %v2585
        %v2588 = vunpack.c.l.s4 1966171168
        %v2589 = vunpack.c.0.s8 %v2588
        %v2590 = vlaneseq
        %v2591 = vshrl.u32 %v2590, 7
        %v2592 = vsub.s32 %v2589, %v2591
        %v2593 = vrot.slane %v2579, %v2592
        %v2594 = vcombine.high %v2586, %v2586
        %v2596 = vunpack.c.l.s4 1966171168
        %v2597 = vunpack.c.0.s8 %v2596
        %v2598 = vlaneseq
        %v2599 = vshrl.u32 %v2598, 7
        %v2600 = vsub.s32 %v2597, %v2599
        %v2601 = vrot.slane %v2586, %v2600
        %v2603 = vunpack.c.l.s4 1966171168
        %v2604 = vunpack.c.0.s8 %v2603
        %v2605 = vlaneseq
        %v2606 = vshrl.u32 %v2605, 7
        %v2607 = vsub.s32 %v2604, %v2606
        %v2608 = vrot.slane %v2593, %v2607
        %v2610 = vunpack.c.l.s4 1966171168
        %v2611 = vunpack.c.0.s8 %v2610
        %v2612 = vlaneseq
        %v2613 = vshrl.u32 %v2612, 7
        %v2614 = vsub.s32 %v2611, %v2613
        %v2615 = vrot.slane %v2594, %v2614
        %v2616 = vcombine.high %v2601, %v2601
        %v2617 = vcombine.high %v2615, %v2615
        %v2618 = vcombine.high %v2296, %v2296
        %v2620 = vunpack.c.l.s4 1966171168
        %v2621 = vunpack.c.0.s8 %v2620
        %v2622 = vlaneseq
        %v2623 = vshrl.u32 %v2622, 7
        %v2624 = vsub.s32 %v2621, %v2623
        %v2625 = vrot.slane %v2296, %v2624
        %v2627 = vunpack.c.l.s4 1966171168
        %v2628 = vunpack.c.0.s8 %v2627
        %v2629 = vlaneseq
        %v2630 = vshrl.u32 %v2629, 7
        %v2631 = vsub.s32 %v2628, %v2630
        %v2632 = vrot.slane %v2618, %v2631
        %v2633 = vcombine.high %v2625, %v2625
        %v2635 = vunpack.c.l.s4 1966171168
        %v2636 = vunpack.c.0.s8 %v2635
        %v2637 = vlaneseq
        %v2638 = vshrl.u32 %v2637, 7
        %v2639 = vsub.s32 %v2636, %v2638
        %v2640 = vrot.slane %v2625, %v2639
        %v2642 = vunpack.c.l.s4 1966171168
        %v2643 = vunpack.c.0.s8 %v2642
        %v2644 = vlaneseq
        %v2645 = vshrl.u32 %v2644, 7
        %v2646 = vsub.s32 %v2643, %v2645
        %v2647 = vrot.slane %v2632, %v2646
        %v2649 = vunpack.c.l.s4 1966171168
        %v2650 = vunpack.c.0.s8 %v2649
        %v2651 = vlaneseq
        %v2652 = vshrl.u32 %v2651, 7
        %v2653 = vsub.s32 %v2650, %v2652
        %v2654 = vrot.slane %v2633, %v2653
        %v2655 = vcombine.high %v2640, %v2640
        %v2656 = vcombine.high %v2654, %v2654
        %v2657 = vcombine.high %v2344, %v2344
        %v2659 = vunpack.c.l.s4 1966171168
        %v2660 = vunpack.c.0.s8 %v2659
        %v2661 = vlaneseq
        %v2662 = vshrl.u32 %v2661, 7
        %v2663 = vsub.s32 %v2660, %v2662
        %v2664 = vrot.slane %v2344, %v2663
        %v2666 = vunpack.c.l.s4 1966171168
        %v2667 = vunpack.c.0.s8 %v2666
        %v2668 = vlaneseq
        %v2669 = vshrl.u32 %v2668, 7
        %v2670 = vsub.s32 %v2667, %v2669
        %v2671 = vrot.slane %v2657, %v2670
        %v2672 = vcombine.high %v2664, %v2664
        %v2674 = vunpack.c.l.s4 1966171168
        %v2675 = vunpack.c.0.s8 %v2674
        %v2676 = vlaneseq
        %v2677 = vshrl.u32 %v2676, 7
        %v2678 = vsub.s32 %v2675, %v2677
        %v2679 = vrot.slane %v2664, %v2678
        %v2681 = vunpack.c.l.s4 1966171168
        %v2682 = vunpack.c.0.s8 %v2681
        %v2683 = vlaneseq
        %v2684 = vshrl.u32 %v2683, 7
        %v2685 = vsub.s32 %v2682, %v2684
        %v2686 = vrot.slane %v2671, %v2685
        %v2688 = vunpack.c.l.s4 1966171168
        %v2689 = vunpack.c.0.s8 %v2688
        %v2690 = vlaneseq
        %v2691 = vshrl.u32 %v2690, 7
        %v2692 = vsub.s32 %v2689, %v2691
        %v2693 = vrot.slane %v2672, %v2692
        %v2694 = vcombine.high %v2679, %v2679
        %v2695 = vcombine.high %v2693, %v2693
        %v2696 = vcombine.high %v2392, %v2392
        %v2698 = vunpack.c.l.s4 1966171168
        %v2699 = vunpack.c.0.s8 %v2698
        %v2700 = vlaneseq
        %v2701 = vshrl.u32 %v2700, 7
        %v2702 = vsub.s32 %v2699, %v2701
        %v2703 = vrot.slane %v2392, %v2702
        %v2705 = vunpack.c.l.s4 1966171168
        %v2706 = vunpack.c.0.s8 %v2705
        %v2707 = vlaneseq
        %v2708 = vshrl.u32 %v2707, 7
        %v2709 = vsub.s32 %v2706, %v2708
        %v2710 = vrot.slane %v2696, %v2709
        %v2711 = vcombine.high %v2703, %v2703
        %v2713 = vunpack.c.l.s4 1966171168
        %v2714 = vunpack.c.0.s8 %v2713
        %v2715 = vlaneseq
        %v2716 = vshrl.u32 %v2715, 7
        %v2717 = vsub.s32 %v2714, %v2716
        %v2718 = vrot.slane %v2703, %v2717
        %v2720 = vunpack.c.l.s4 1966171168
        %v2721 = vunpack.c.0.s8 %v2720
        %v2722 = vlaneseq
        %v2723 = vshrl.u32 %v2722, 7
        %v2724 = vsub.s32 %v2721, %v2723
        %v2725 = vrot.slane %v2710, %v2724
        %v2727 = vunpack.c.l.s4 1966171168
        %v2728 = vunpack.c.0.s8 %v2727
        %v2729 = vlaneseq
        %v2730 = vshrl.u32 %v2729, 7
        %v2731 = vsub.s32 %v2728, %v2730
        %v2732 = vrot.slane %v2711, %v2731
        %v2733 = vcombine.high %v2718, %v2718
        %v2734 = vcombine.high %v2732, %v2732
        %v2735 = vcombine.high %v2440, %v2440
        %v2737 = vunpack.c.l.s4 1966171168
        %v2738 = vunpack.c.0.s8 %v2737
        %v2739 = vlaneseq
        %v2740 = vshrl.u32 %v2739, 7
        %v2741 = vsub.s32 %v2738, %v2740
        %v2742 = vrot.slane %v2440, %v2741
        %v2744 = vunpack.c.l.s4 1966171168
        %v2745 = vunpack.c.0.s8 %v2744
        %v2746 = vlaneseq
        %v2747 = vshrl.u32 %v2746, 7
        %v2748 = vsub.s32 %v2745, %v2747
        %v2749 = vrot.slane %v2735, %v2748
        %v2750 = vcombine.high %v2742, %v2742
        %v2752 = vunpack.c.l.s4 1966171168
        %v2753 = vunpack.c.0.s8 %v2752
        %v2754 = vlaneseq
        %v2755 = vshrl.u32 %v2754, 7
        %v2756 = vsub.s32 %v2753, %v2755
        %v2757 = vrot.slane %v2742, %v2756
        %v2759 = vunpack.c.l.s4 1966171168
        %v2760 = vunpack.c.0.s8 %v2759
        %v2761 = vlaneseq
        %v2762 = vshrl.u32 %v2761, 7
        %v2763 = vsub.s32 %v2760, %v2762
        %v2764 = vrot.slane %v2749, %v2763
        %v2766 = vunpack.c.l.s4 1966171168
        %v2767 = vunpack.c.0.s8 %v2766
        %v2768 = vlaneseq
        %v2769 = vshrl.u32 %v2768, 7
        %v2770 = vsub.s32 %v2767, %v2769
        %v2771 = vrot.slane %v2750, %v2770
        %v2772 = vcombine.high %v2757, %v2757
        %v2773 = vcombine.high %v2771, %v2771
        %v2774 = vcombine.high %v2488, %v2488
        %v2776 = vunpack.c.l.s4 1966171168
        %v2777 = vunpack.c.0.s8 %v2776
        %v2778 = vlaneseq
        %v2779 = vshrl.u32 %v2778, 7
        %v2780 = vsub.s32 %v2777, %v2779
        %v2781 = vrot.slane %v2488, %v2780
        %v2783 = vunpack.c.l.s4 1966171168
        %v2784 = vunpack.c.0.s8 %v2783
        %v2785 = vlaneseq
        %v2786 = vshrl.u32 %v2785, 7
        %v2787 = vsub.s32 %v2784, %v2786
        %v2788 = vrot.slane %v2774, %v2787
        %v2789 = vcombine.high %v2781, %v2781
        %v2791 = vunpack.c.l.s4 1966171168
        %v2792 = vunpack.c.0.s8 %v2791
        %v2793 = vlaneseq
        %v2794 = vshrl.u32 %v2793, 7
        %v2795 = vsub.s32 %v2792, %v2794
        %v2796 = vrot.slane %v2781, %v2795
        %v2798 = vunpack.c.l.s4 1966171168
        %v2799 = vunpack.c.0.s8 %v2798
        %v2800 = vlaneseq
        %v2801 = vshrl.u32 %v2800, 7
        %v2802 = vsub.s32 %v2799, %v2801
        %v2803 = vrot.slane %v2788, %v2802
        %v2805 = vunpack.c.l.s4 1966171168
        %v2806 = vunpack.c.0.s8 %v2805
        %v2807 = vlaneseq
        %v2808 = vshrl.u32 %v2807, 7
        %v2809 = vsub.s32 %v2806, %v2808
        %v2810 = vrot.slane %v2789, %v2809
        %v2811 = vcombine.high %v2796, %v2796
        %v2812 = vcombine.high %v2810, %v2810
        %v2813 = vcombine.low %v2523, %v2537
        %v2814 = vcombine.low %v2538, %v2539
        %v2815 = vcombine.low %v2530, %v2562
        %v2816 = vcombine.low %v2576, %v2577
        %v2818 = vunpack.c.l.s4 1966171168
        %v2819 = vunpack.c.0.s8 %v2818
        %v2820 = vlaneseq
        %v2821 = vshrl.u32 %v2820, 7
        %v2822 = vsub.s32 %v2819, %v2821
        %v2823 = vrot.slane %v2813, %v2822
        %v2825 = vunpack.c.l.s4 1966171168
        %v2826 = vunpack.c.0.s8 %v2825
        %v2827 = vlaneseq
        %v2828 = vshrl.u32 %v2827, 7
        %v2829 = vsub.s32 %v2826, %v2828
        %v2830 = vrot.slane %v2814, %v2829
        %v2832 = vunpack.c.l.s4 1966171168
        %v2833 = vunpack.c.0.s8 %v2832
        %v2834 = vlaneseq
        %v2835 = vshrl.u32 %v2834, 7
        %v2836 = vsub.s32 %v2833, %v2835
        %v2837 = vrot.slane %v2815, %v2836
        %v2839 = vunpack.c.l.s4 1966171168
        %v2840 = vunpack.c.0.s8 %v2839
        %v2841 = vlaneseq
        %v2842 = vshrl.u32 %v2841, 7
        %v2843 = vsub.s32 %v2840, %v2842
        %v2844 = vrot.slane %v2816, %v2843
        %v2845 = vcombine.low %v2823, %v2830
        %v2846 = vcombine.low %v2837, %v2844
        %v2848 = vunpack.c.l.s4 1966171168
        %v2849 = vunpack.c.0.s8 %v2848
        %v2850 = vlaneseq
        %v2851 = vshrl.u32 %v2850, 7
        %v2852 = vsub.s32 %v2849, %v2851
        %v2853 = vrot.slane %v2845, %v2852
        %v2855 = vunpack.c.l.s4 1966171168
        %v2856 = vunpack.c.0.s8 %v2855
        %v2857 = vlaneseq
        %v2858 = vshrl.u32 %v2857, 7
        %v2859 = vsub.s32 %v2856, %v2858
        %v2860 = vrot.slane %v2846, %v2859
        %v2861 = vcombine.low %v2853, %v2860
        %v2862 = vcombine.low %v2578, %v2569
        %v2864 = vunpack.c.l.s4 1966171168
        %v2865 = vunpack.c.0.s8 %v2864
        %v2866 = vlaneseq
        %v2867 = vshrl.u32 %v2866, 7
        %v2868 = vsub.s32 %v2865, %v2867
        %v2869 = vrot.slane %v2862, %v2868
        %v2871 = vunpack.c.l.s4 1966171168
        %v2872 = vunpack.c.0.s8 %v2871
        %v2873 = vlaneseq
        %v2874 = vshrl.u32 %v2873, 7
        %v2875 = vsub.s32 %v2872, %v2874
        %v2876 = vrot.slane %v2869, %v2875
        %v2877 = vcombine.low %v2601, %v2615
        %v2878 = vcombine.low %v2616, %v2617
        %v2879 = vcombine.low %v2608, %v2640
        %v2880 = vcombine.low %v2654, %v2655
        %v2882 = vunpack.c.l.s4 1966171168
        %v2883 = vunpack.c.0.s8 %v2882
        %v2884 = vlaneseq
        %v2885 = vshrl.u32 %v2884, 7
        %v2886 = vsub.s32 %v2883, %v2885
        %v2887 = vrot.slane %v2877, %v2886
        %v2889 = vunpack.c.l.s4 1966171168
        %v2890 = vunpack.c.0.s8 %v2889
        %v2891 = vlaneseq
        %v2892 = vshrl.u32 %v2891, 7
        %v2893 = vsub.s32 %v2890, %v2892
        %v2894 = vrot.slane %v2878, %v2893
        %v2896 = vunpack.c.l.s4 1966171168
        %v2897 = vunpack.c.0.s8 %v2896
        %v2898 = vlaneseq
        %v2899 = vshrl.u32 %v2898, 7
        %v2900 = vsub.s32 %v2897, %v2899
        %v2901 = vrot.slane %v2879, %v2900
        %v2903 = vunpack.c.l.s4 1966171168
        %v2904 = vunpack.c.0.s8 %v2903
        %v2905 = vlaneseq
        %v2906 = vshrl.u32 %v2905, 7
        %v2907 = vsub.s32 %v2904, %v2906
        %v2908 = vrot.slane %v2880, %v2907
        %v2909 = vcombine.low %v2887, %v2894
        %v2910 = vcombine.low %v2901, %v2908
        %v2912 = vunpack.c.l.s4 1966171168
        %v2913 = vunpack.c.0.s8 %v2912
        %v2914 = vlaneseq
        %v2915 = vshrl.u32 %v2914, 7
        %v2916 = vsub.s32 %v2913, %v2915
        %v2917 = vrot.slane %v2909, %v2916
        %v2919 = vunpack.c.l.s4 1966171168
        %v2920 = vunpack.c.0.s8 %v2919
        %v2921 = vlaneseq
        %v2922 = vshrl.u32 %v2921, 7
        %v2923 = vsub.s32 %v2920, %v2922
        %v2924 = vrot.slane %v2910, %v2923
        %v2925 = vcombine.low %v2917, %v2924
        %v2926 = vcombine.low %v2656, %v2647
        %v2928 = vunpack.c.l.s4 1966171168
        %v2929 = vunpack.c.0.s8 %v2928
        %v2930 = vlaneseq
        %v2931 = vshrl.u32 %v2930, 7
        %v2932 = vsub.s32 %v2929, %v2931
        %v2933 = vrot.slane %v2926, %v2932
        %v2935 = vunpack.c.l.s4 1966171168
        %v2936 = vunpack.c.0.s8 %v2935
        %v2937 = vlaneseq
        %v2938 = vshrl.u32 %v2937, 7
        %v2939 = vsub.s32 %v2936, %v2938
        %v2940 = vrot.slane %v2933, %v2939
        %v2941 = vcombine.low %v2679, %v2693
        %v2942 = vcombine.low %v2694, %v2695
        %v2943 = vcombine.low %v2686, %v2718
        %v2944 = vcombine.low %v2732, %v2733
        %v2946 = vunpack.c.l.s4 1966171168
        %v2947 = vunpack.c.0.s8 %v2946
        %v2948 = vlaneseq
        %v2949 = vshrl.u32 %v2948, 7
        %v2950 = vsub.s32 %v2947, %v2949
        %v2951 = vrot.slane %v2941, %v2950
        %v2953 = vunpack.c.l.s4 1966171168
        %v2954 = vunpack.c.0.s8 %v2953
        %v2955 = vlaneseq
        %v2956 = vshrl.u32 %v2955, 7
        %v2957 = vsub.s32 %v2954, %v2956
        %v2958 = vrot.slane %v2942, %v2957
        %v2960 = vunpack.c.l.s4 1966171168
        %v2961 = vunpack.c.0.s8 %v2960
        %v2962 = vlaneseq
        %v2963 = vshrl.u32 %v2962, 7
        %v2964 = vsub.s32 %v2961, %v2963
        %v2965 = vrot.slane %v2943, %v2964
        %v2967 = vunpack.c.l.s4 1966171168
        %v2968 = vunpack.c.0.s8 %v2967
        %v2969 = vlaneseq
        %v2970 = vshrl.u32 %v2969, 7
        %v2971 = vsub.s32 %v2968, %v2970
        %v2972 = vrot.slane %v2944, %v2971
        %v2973 = vcombine.low %v2951, %v2958
        %v2974 = vcombine.low %v2965, %v2972
        %v2976 = vunpack.c.l.s4 1966171168
        %v2977 = vunpack.c.0.s8 %v2976
        %v2978 = vlaneseq
        %v2979 = vshrl.u32 %v2978, 7
        %v2980 = vsub.s32 %v2977, %v2979
        %v2981 = vrot.slane %v2973, %v2980
        %v2983 = vunpack.c.l.s4 1966171168
        %v2984 = vunpack.c.0.s8 %v2983
        %v2985 = vlaneseq
        %v2986 = vshrl.u32 %v2985, 7
        %v2987 = vsub.s32 %v2984, %v2986
        %v2988 = vrot.slane %v2974, %v2987
        %v2989 = vcombine.low %v2981, %v2988
        %v2990 = vcombine.low %v2734, %v2725
        %v2992 = vunpack.c.l.s4 1966171168
        %v2993 = vunpack.c.0.s8 %v2992
        %v2994 = vlaneseq
        %v2995 = vshrl.u32 %v2994, 7
        %v2996 = vsub.s32 %v2993, %v2995
        %v2997 = vrot.slane %v2990, %v2996
        %v2999 = vunpack.c.l.s4 1966171168
        %v3000 = vunpack.c.0.s8 %v2999
        %v3001 = vlaneseq
        %v3002 = vshrl.u32 %v3001, 7
        %v3003 = vsub.s32 %v3000, %v3002
        %v3004 = vrot.slane %v2997, %v3003
        %v3005 = vcombine.low %v2757, %v2771
        %v3006 = vcombine.low %v2772, %v2773
        %v3007 = vcombine.low %v2764, %v2796
        %v3008 = vcombine.low %v2810, %v2811
        %v3010 = vunpack.c.l.s4 1966171168
        %v3011 = vunpack.c.0.s8 %v3010
        %v3012 = vlaneseq
        %v3013 = vshrl.u32 %v3012, 7
        %v3014 = vsub.s32 %v3011, %v3013
        %v3015 = vrot.slane %v3005, %v3014
        %v3017 = vunpack.c.l.s4 1966171168
        %v3018 = vunpack.c.0.s8 %v3017
        %v3019 = vlaneseq
        %v3020 = vshrl.u32 %v3019, 7
        %v3021 = vsub.s32 %v3018, %v3020
        %v3022 = vrot.slane %v3006, %v3021
        %v3024 = vunpack.c.l.s4 1966171168
        %v3025 = vunpack.c.0.s8 %v3024
        %v3026 = vlaneseq
        %v3027 = vshrl.u32 %v3026, 7
        %v3028 = vsub.s32 %v3025, %v3027
        %v3029 = vrot.slane %v3007, %v3028
        %v3031 = vunpack.c.l.s4 1966171168
        %v3032 = vunpack.c.0.s8 %v3031
        %v3033 = vlaneseq
        %v3034 = vshrl.u32 %v3033, 7
        %v3035 = vsub.s32 %v3032, %v3034
        %v3036 = vrot.slane %v3008, %v3035
        %v3037 = vcombine.low %v3015, %v3022
        %v3038 = vcombine.low %v3029, %v3036
        %v3040 = vunpack.c.l.s4 1966171168
        %v3041 = vunpack.c.0.s8 %v3040
        %v3042 = vlaneseq
        %v3043 = vshrl.u32 %v3042, 7
        %v3044 = vsub.s32 %v3041, %v3043
        %v3045 = vrot.slane %v3037, %v3044
        %v3047 = vunpack.c.l.s4 1966171168
        %v3048 = vunpack.c.0.s8 %v3047
        %v3049 = vlaneseq
        %v3050 = vshrl.u32 %v3049, 7
        %v3051 = vsub.s32 %v3048, %v3050
        %v3052 = vrot.slane %v3038, %v3051
        %v3053 = vcombine.low %v3045, %v3052
        %v3054 = vcombine.low %v2812, %v2803
        %v3056 = vunpack.c.l.s4 1966171168
        %v3057 = vunpack.c.0.s8 %v3056
        %v3058 = vlaneseq
        %v3059 = vshrl.u32 %v3058, 7
        %v3060 = vsub.s32 %v3057, %v3059
        %v3061 = vrot.slane %v3054, %v3060
        %v3063 = vunpack.c.l.s4 1966171168
        %v3064 = vunpack.c.0.s8 %v3063
        %v3065 = vlaneseq
        %v3066 = vshrl.u32 %v3065, 7
        %v3067 = vsub.s32 %v3064, %v3066
        %v3068 = vrot.slane %v3061, %v3067
        %v3077 = vpack.c.bf16 %v2876, %v2861
        %v3078 = vpack.c.bf16 %v2940, %v2925
        %v3079 = vpack.c.bf16 %v3004, %v2989
        %v3080 = vpack.c.bf16 %v3068, %v3053
        %v3082 = vsel %vm1609, %v3077, 0
        %vm3084 = vcmask 1043456
        %v3086 = vsel %vm3084, %v1003, 0
        %3088 = vmatprep.subr.bf16.mxu0 0
        %3089 = vmatpush1.bf16.msra.mxu0 0
        %3090 = vmatprep.subr.bf16.mxu0 0
        %3091 = vmatpush1.bf16.msra.mxu0 0
        %3092 = vmatprep.subr.bf16.mxu0 0
        %3093 = vmatpush1.bf16.msra.mxu0 0
        %3094 = vmatprep.subr.bf16.mxu0 0
        %3095 = vmatpush1.bf16.msra.mxu0 0
        %3096 = vmatprep.subr.bf16.mxu0 0
        %3097 = vmatpush1.bf16.msra.mxu0 0
        %3098 = vmatprep.subr.bf16.mxu0 0
        %3099 = vmatpush1.bf16.msra.mxu0 0
        %3100 = vmatprep.subr.bf16.mxu0 0
        %3101 = vmatpush1.bf16.msra.mxu0 0
        %3102 = vmatprep.subr.bf16.mxu0 0
        %3103 = vmatpush1.bf16.msra.mxu0 %v3086
        %3104 = vmatprep.subr.bf16.mxu0 0
        %3105 = vmatpush2.bf16.msra.mxu0 0
        %3106 = vmatprep.subr.bf16.mxu0 0
        %3107 = vmatpush2.bf16.msra.mxu0 0
        %3108 = vmatprep.subr.bf16.mxu0 0
        %3109 = vmatpush2.bf16.msra.mxu0 0
        %3110 = vmatprep.subr.bf16.mxu0 0
        %3111 = vmatpush2.bf16.msra.mxu0 0
        %3112 = vmatprep.subr.bf16.mxu0 0
        %3113 = vmatpush2.bf16.msra.mxu0 0
        %3114 = vmatprep.subr.bf16.mxu0 0
        %3115 = vmatpush2.bf16.msra.mxu0 0
        %3116 = vmatprep.subr.bf16.mxu0 0
        %3117 = vmatpush2.bf16.msra.mxu0 0
        %3118 = vmatprep.subr.bf16.mxu0 0
        %3119 = vmatpush2.bf16.msra.mxu0 0
        %3120 = vmatprep.mubr.bf16.mxu0 0
        %3121 = vmatmul.mubr.bf16.gmra.mxu0 %v3082
        %v3122 = vpop.f32.mrf.mxu0
        %v3123 = vadd.f32 0.0, %v3122
        %v3124 = vpop.f32.mrf.mxu0
        %v3125 = vpop.f32.mrf.mxu0
        %v3126 = vadd.f32 0.0, %v3125
        %v3127 = vpop.f32.mrf.mxu0
        %3128 = vdwg.mxu0
        %v3130 = vsel %vm1609, %v3078, 0
        %v3133 = vsel %vm3084, %v1004, 0
        %3135 = vmatprep.subr.bf16.mxu0 0
        %3136 = vmatpush1.bf16.msra.mxu0 0
        %3137 = vmatprep.subr.bf16.mxu0 0
        %3138 = vmatpush1.bf16.msra.mxu0 0
        %3139 = vmatprep.subr.bf16.mxu0 0
        %3140 = vmatpush1.bf16.msra.mxu0 0
        %3141 = vmatprep.subr.bf16.mxu0 0
        %3142 = vmatpush1.bf16.msra.mxu0 0
        %3143 = vmatprep.subr.bf16.mxu0 0
        %3144 = vmatpush1.bf16.msra.mxu0 0
        %3145 = vmatprep.subr.bf16.mxu0 0
        %3146 = vmatpush1.bf16.msra.mxu0 0
        %3147 = vmatprep.subr.bf16.mxu0 0
        %3148 = vmatpush1.bf16.msra.mxu0 0
        %3149 = vmatprep.subr.bf16.mxu0 0
        %3150 = vmatpush1.bf16.msra.mxu0 %v3133
        %3151 = vmatprep.subr.bf16.mxu0 0
        %3152 = vmatpush2.bf16.msra.mxu0 0
        %3153 = vmatprep.subr.bf16.mxu0 0
        %3154 = vmatpush2.bf16.msra.mxu0 0
        %3155 = vmatprep.subr.bf16.mxu0 0
        %3156 = vmatpush2.bf16.msra.mxu0 0
        %3157 = vmatprep.subr.bf16.mxu0 0
        %3158 = vmatpush2.bf16.msra.mxu0 0
        %3159 = vmatprep.subr.bf16.mxu0 0
        %3160 = vmatpush2.bf16.msra.mxu0 0
        %3161 = vmatprep.subr.bf16.mxu0 0
        %3162 = vmatpush2.bf16.msra.mxu0 0
        %3163 = vmatprep.subr.bf16.mxu0 0
        %3164 = vmatpush2.bf16.msra.mxu0 0
        %3165 = vmatprep.subr.bf16.mxu0 0
        %3166 = vmatpush2.bf16.msra.mxu0 0
        %3167 = vmatprep.mubr.bf16.mxu0 0
        %3168 = vmatmul.mubr.bf16.gmra.mxu0 %v3130
        %v3169 = vpop.f32.mrf.mxu0
        %v3170 = vadd.f32 0.0, %v3169
        %v3171 = vpop.f32.mrf.mxu0
        %v3172 = vpop.f32.mrf.mxu0
        %v3173 = vadd.f32 0.0, %v3172
        %v3174 = vpop.f32.mrf.mxu0
        %3175 = vdwg.mxu0
        %v3177 = vsel %vm1609, %v3079, 0
        %v3180 = vsel %vm3084, %v1005, 0
        %3182 = vmatprep.subr.bf16.mxu0 0
        %3183 = vmatpush1.bf16.msra.mxu0 0
        %3184 = vmatprep.subr.bf16.mxu0 0
        %3185 = vmatpush1.bf16.msra.mxu0 0
        %3186 = vmatprep.subr.bf16.mxu0 0
        %3187 = vmatpush1.bf16.msra.mxu0 0
        %3188 = vmatprep.subr.bf16.mxu0 0
        %3189 = vmatpush1.bf16.msra.mxu0 0
        %3190 = vmatprep.subr.bf16.mxu0 0
        %3191 = vmatpush1.bf16.msra.mxu0 0
        %3192 = vmatprep.subr.bf16.mxu0 0
        %3193 = vmatpush1.bf16.msra.mxu0 0
        %3194 = vmatprep.subr.bf16.mxu0 0
        %3195 = vmatpush1.bf16.msra.mxu0 0
        %3196 = vmatprep.subr.bf16.mxu0 0
        %3197 = vmatpush1.bf16.msra.mxu0 %v3180
        %3198 = vmatprep.subr.bf16.mxu0 0
        %3199 = vmatpush2.bf16.msra.mxu0 0
        %3200 = vmatprep.subr.bf16.mxu0 0
        %3201 = vmatpush2.bf16.msra.mxu0 0
        %3202 = vmatprep.subr.bf16.mxu0 0
        %3203 = vmatpush2.bf16.msra.mxu0 0
        %3204 = vmatprep.subr.bf16.mxu0 0
        %3205 = vmatpush2.bf16.msra.mxu0 0
        %3206 = vmatprep.subr.bf16.mxu0 0
        %3207 = vmatpush2.bf16.msra.mxu0 0
        %3208 = vmatprep.subr.bf16.mxu0 0
        %3209 = vmatpush2.bf16.msra.mxu0 0
        %3210 = vmatprep.subr.bf16.mxu0 0
        %3211 = vmatpush2.bf16.msra.mxu0 0
        %3212 = vmatprep.subr.bf16.mxu0 0
        %3213 = vmatpush2.bf16.msra.mxu0 0
        %3214 = vmatprep.mubr.bf16.mxu0 0
        %3215 = vmatmul.mubr.bf16.gmra.mxu0 %v3177
        %v3216 = vpop.f32.mrf.mxu0
        %v3217 = vadd.f32 0.0, %v3216
        %v3218 = vpop.f32.mrf.mxu0
        %v3219 = vpop.f32.mrf.mxu0
        %v3220 = vadd.f32 0.0, %v3219
        %v3221 = vpop.f32.mrf.mxu0
        %3222 = vdwg.mxu0
        %v3224 = vsel %vm1609, %v3080, 0
        %v3227 = vsel %vm3084, %v1006, 0
        %3229 = vmatprep.subr.bf16.mxu0 0
        %3230 = vmatpush1.bf16.msra.mxu0 0
        %3231 = vmatprep.subr.bf16.mxu0 0
        %3232 = vmatpush1.bf16.msra.mxu0 0
        %3233 = vmatprep.subr.bf16.mxu0 0
        %3234 = vmatpush1.bf16.msra.mxu0 0
        %3235 = vmatprep.subr.bf16.mxu0 0
        %3236 = vmatpush1.bf16.msra.mxu0 0
        %3237 = vmatprep.subr.bf16.mxu0 0
        %3238 = vmatpush1.bf16.msra.mxu0 0
        %3239 = vmatprep.subr.bf16.mxu0 0
        %3240 = vmatpush1.bf16.msra.mxu0 0
        %3241 = vmatprep.subr.bf16.mxu0 0
        %3242 = vmatpush1.bf16.msra.mxu0 0
        %3243 = vmatprep.subr.bf16.mxu0 0
        %3244 = vmatpush1.bf16.msra.mxu0 %v3227
        %3245 = vmatprep.subr.bf16.mxu0 0
        %3246 = vmatpush2.bf16.msra.mxu0 0
        %3247 = vmatprep.subr.bf16.mxu0 0
        %3248 = vmatpush2.bf16.msra.mxu0 0
        %3249 = vmatprep.subr.bf16.mxu0 0
        %3250 = vmatpush2.bf16.msra.mxu0 0
        %3251 = vmatprep.subr.bf16.mxu0 0
        %3252 = vmatpush2.bf16.msra.mxu0 0
        %3253 = vmatprep.subr.bf16.mxu0 0
        %3254 = vmatpush2.bf16.msra.mxu0 0
        %3255 = vmatprep.subr.bf16.mxu0 0
        %3256 = vmatpush2.bf16.msra.mxu0 0
        %3257 = vmatprep.subr.bf16.mxu0 0
        %3258 = vmatpush2.bf16.msra.mxu0 0
        %3259 = vmatprep.subr.bf16.mxu0 0
        %3260 = vmatpush2.bf16.msra.mxu0 0
        %3261 = vmatprep.mubr.bf16.mxu0 0
        %3262 = vmatmul.mubr.bf16.gmra.mxu0 %v3224
        %v3263 = vpop.f32.mrf.mxu0
        %v3264 = vadd.f32 0.0, %v3263
        %v3265 = vpop.f32.mrf.mxu0
        %v3266 = vpop.f32.mrf.mxu0
        %v3267 = vadd.f32 0.0, %v3266
        %v3268 = vpop.f32.mrf.mxu0
        %3269 = vdwg.mxu0
        %v3270 = vadd.f32 %v3123, %v3170
        %v3271 = vadd.f32 %v3126, %v3173
        %v3272 = vadd.f32 %v3270, %v3217
        %v3273 = vadd.f32 %v3271, %v3220
        %v3274 = vadd.f32 %v3272, %v3264
        %v3275 = vadd.f32 %v3273, %v3267
        %v3276 = vadd.f32 %v993, %v3274
        %v3277 = vadd.f32 %v994, %v3275
        %v3278 = vsel %vm1043, %v3276, 0.0
        %3279 = vadd.xlane.f32.xlu0 %v3278
        %v3280 = vpop.xlane.xlu0 %3279
        %v3281 = vsel %vm1047, %v3277, 0.0
        %3282 = vadd.xlane.f32.xlu0 %v3281
        %v3283 = vpop.xlane.xlu0 %3282
        %v3284 = vmul.f32 %v3280, %v1051
        %v3285 = vmul.f32 %v3283, %v1051
        %v3286 = vsub.f32 %v3276, %v3284
        %v3287 = vsub.f32 %v3277, %v3285
        %v3288 = vmul.f32 %v3286, %v3286
        %v3289 = vmul.f32 %v3287, %v3287
        %v3290 = vsel %vm1043, %v3288, 0.0
        %3291 = vadd.xlane.f32.xlu0 %v3290
        %v3292 = vpop.xlane.xlu0 %3291
        %v3293 = vsel %vm1047, %v3289, 0.0
        %3294 = vadd.xlane.f32.xlu0 %v3293
        %v3295 = vpop.xlane.xlu0 %3294
        %v3296 = vmul.f32 %v3292, %v1051
        %v3297 = vmul.f32 %v3295, %v1051
        %v3298 = vadd.f32 %v3296, 1e-06
        %v3299 = vadd.f32 %v3297, 1e-06
        %v3300 = vrsqrt.pop %v3298
        %v3301 = vrsqrt.pop %v3299
        %v3302 = vmul.f32 %v3286, %v3300
        %v3303 = vmul.f32 %v3287, %v3301
        %v3305 = vlaneseq
        %v3306 = vshrl.u32 %v3305, 7
        %v3307 = vsub.s32 0, %v3306
        %v3308 = vrot.slane %v997, %v3307
        %v3310 = vmul.f32 %v3302, %v3308
        %v3311 = vmul.f32 %v3303, %v3308
        %v3313 = vlaneseq
        %v3314 = vshrl.u32 %v3313, 7
        %v3315 = vsub.s32 0, %v3314
        %v3316 = vrot.slane %v998, %v3315
        %v3318 = vadd.f32 %v3310, %v3316
        %v3319 = vadd.f32 %v3311, %v3316
        %v3320 = vpack.c.bf16 %v3319, %v3318
        %v3325 = vunpack.c.l.b16 %v1007
        %v3326 = vunpack.c.l.b16 %v1008
        %v3327 = vunpack.c.l.b16 %v1009
        %v3328 = vunpack.c.l.b16 %v1010
        %v3329 = vpack.c.b16 %v3326, %v3325
        %v3330 = vpack.c.b16 %v3328, %v3327
        %v3334 = vsel %vm1043, %v3320, 0
        %3336 = vmatprep.subr.bf16.mxu0 0
        %3337 = vmatpush1.bf16.msra.mxu0 0
        %3338 = vmatprep.subr.bf16.mxu0 0
        %3339 = vmatpush1.bf16.msra.mxu0 0
        %3340 = vmatprep.subr.bf16.mxu0 0
        %3341 = vmatpush1.bf16.msra.mxu0 0
        %3342 = vmatprep.subr.bf16.mxu0 0
        %3343 = vmatpush1.bf16.msra.mxu0 0
        %3344 = vmatprep.subr.bf16.mxu0 0
        %3345 = vmatpush1.bf16.msra.mxu0 0
        %3346 = vmatprep.subr.bf16.mxu0 0
        %3347 = vmatpush1.bf16.msra.mxu0 0
        %3348 = vmatprep.subr.bf16.mxu0 0
        %3349 = vmatpush1.bf16.msra.mxu0 %v3330
        %3350 = vmatprep.subr.bf16.mxu0 0
        %3351 = vmatpush1.bf16.msra.mxu0 %v3329
        %3352 = vmatprep.subr.bf16.mxu0 0
        %3353 = vmatpush2.bf16.msra.mxu0 0
        %3354 = vmatprep.subr.bf16.mxu0 0
        %3355 = vmatpush2.bf16.msra.mxu0 0
        %3356 = vmatprep.subr.bf16.mxu0 0
        %3357 = vmatpush2.bf16.msra.mxu0 0
        %3358 = vmatprep.subr.bf16.mxu0 0
        %3359 = vmatpush2.bf16.msra.mxu0 0
        %3360 = vmatprep.subr.bf16.mxu0 0
        %3361 = vmatpush2.bf16.msra.mxu0 0
        %3362 = vmatprep.subr.bf16.mxu0 0
        %3363 = vmatpush2.bf16.msra.mxu0 0
        %3364 = vmatprep.subr.bf16.mxu0 0
        %3365 = vmatpush2.bf16.msra.mxu0 0
        %3366 = vmatprep.subr.bf16.mxu0 0
        %3367 = vmatpush2.bf16.msra.mxu0 0
        %3368 = vmatprep.mubr.bf16.mxu0 0
        %3369 = vmatmul.mubr.bf16.gmra.mxu0 %v3334
        %v3370 = vpop.f32.mrf.mxu0
        %v3371 = vadd.f32 0.0, %v3370
        %v3372 = vpop.f32.mrf.mxu0
        %v3373 = vpop.f32.mrf.mxu0
        %v3374 = vadd.f32 0.0, %v3373
        %v3375 = vpop.f32.mrf.mxu0
        %3376 = vdwg.mxu0
        %v3377 = vmul.f32 %v3371, 0.1
        %v3378 = vmul.f32 %v3374, 0.1
        %v3379 = vsub.f32 %v3377, 0.01
        %v3380 = vsub.f32 %v3378, 0.01
        %v3381 = vmax.f32 %v3379, 0.0
        %v3382 = vmax.f32 %v3380, 0.0
        %v3383 = vpack.c.bf16 %v3382, %v3381
        %v3400 = vunpack.c.l.b16 %v1011
        %v3401 = vunpack.c.l.b16 %v1012
        %v3402 = vunpack.c.l.b16 %v1013
        %v3403 = vunpack.c.l.b16 %v1014
        %v3404 = vunpack.c.l.b16 %v1015
        %v3405 = vunpack.c.l.b16 %v1016
        %v3406 = vunpack.c.l.b16 %v1017
        %v3407 = vunpack.c.l.b16 %v1018
        %v3408 = vunpack.c.l.b16 %v1019
        %v3409 = vunpack.c.l.b16 %v1020
        %v3410 = vunpack.c.l.b16 %v1021
        %v3411 = vunpack.c.l.b16 %v1022
        %v3412 = vunpack.c.l.b16 %v1023
        %v3413 = vunpack.c.l.b16 %v1024
        %v3414 = vunpack.c.l.b16 %v1025
        %v3415 = vunpack.c.l.b16 %v1026
        %v3416 = vpack.c.b16 %v3401, %v3400
        %v3417 = vpack.c.b16 %v3403, %v3402
        %v3418 = vpack.c.b16 %v3405, %v3404
        %v3419 = vpack.c.b16 %v3407, %v3406
        %v3420 = vpack.c.b16 %v3409, %v3408
        %v3421 = vpack.c.b16 %v3411, %v3410
        %v3422 = vpack.c.b16 %v3413, %v3412
        %v3423 = vpack.c.b16 %v3415, %v3414
        %3432 = vmatprep.subr.bf16.mxu0 0
        %3433 = vmatpush1.bf16.msra.mxu0 %v3423
        %3434 = vmatprep.subr.bf16.mxu0 0
        %3435 = vmatpush1.bf16.msra.mxu0 %v3422
        %3436 = vmatprep.subr.bf16.mxu0 0
        %3437 = vmatpush1.bf16.msra.mxu0 %v3421
        %3438 = vmatprep.subr.bf16.mxu0 0
        %3439 = vmatpush1.bf16.msra.mxu0 %v3420
        %3440 = vmatprep.subr.bf16.mxu0 0
        %3441 = vmatpush1.bf16.msra.mxu0 %v3419
        %3442 = vmatprep.subr.bf16.mxu0 0
        %3443 = vmatpush1.bf16.msra.mxu0 %v3418
        %3444 = vmatprep.subr.bf16.mxu0 0
        %3445 = vmatpush1.bf16.msra.mxu0 %v3417
        %3446 = vmatprep.subr.bf16.mxu0 0
        %3447 = vmatpush1.bf16.msra.mxu0 %v3416
        %3448 = vmatprep.subr.bf16.mxu0 0
        %3449 = vmatpush2.bf16.msra.mxu0 0
        %3450 = vmatprep.subr.bf16.mxu0 0
        %3451 = vmatpush2.bf16.msra.mxu0 0
        %3452 = vmatprep.subr.bf16.mxu0 0
        %3453 = vmatpush2.bf16.msra.mxu0 0
        %3454 = vmatprep.subr.bf16.mxu0 0
        %3455 = vmatpush2.bf16.msra.mxu0 0
        %3456 = vmatprep.subr.bf16.mxu0 0
        %3457 = vmatpush2.bf16.msra.mxu0 0
        %3458 = vmatprep.subr.bf16.mxu0 0
        %3459 = vmatpush2.bf16.msra.mxu0 0
        %3460 = vmatprep.subr.bf16.mxu0 0
        %3461 = vmatpush2.bf16.msra.mxu0 0
        %3462 = vmatprep.subr.bf16.mxu0 0
        %3463 = vmatpush2.bf16.msra.mxu0 0
        %3464 = vmatprep.mubr.bf16.mxu0 0
        %3465 = vmatmul.mubr.bf16.gmra.mxu0 %v3383
        %v3466 = vpop.f32.mrf.mxu0
        %v3467 = vadd.f32 0.0, %v3466
        %v3468 = vpop.f32.mrf.mxu0
        %v3469 = vpop.f32.mrf.mxu0
        %v3470 = vadd.f32 0.0, %v3469
        %v3471 = vpop.f32.mrf.mxu0
        %3472 = vdwg.mxu0
        %v3473 = vsub.f32 %v3467, %v3318
        %v3474 = vsub.f32 %v3470, %v3319
        %v3475 = vpack.c.bf16 %v3474, %v3473
        %v3477 = vsel %vm1043, %v3475, 0
        %3479 = vmatprep.subr.bf16.mxu0 0
        %3480 = vmatpush1.bf16.msra.mxu0 0
        %3481 = vmatprep.subr.bf16.mxu0 0
        %3482 = vmatpush1.bf16.msra.mxu0 0
        %3483 = vmatprep.subr.bf16.mxu0 0
        %3484 = vmatpush1.bf16.msra.mxu0 0
        %3485 = vmatprep.subr.bf16.mxu0 0
        %3486 = vmatpush1.bf16.msra.mxu0 0
        %3487 = vmatprep.subr.bf16.mxu0 0
        %3488 = vmatpush1.bf16.msra.mxu0 0
        %3489 = vmatprep.subr.bf16.mxu0 0
        %3490 = vmatpush1.bf16.msra.mxu0 0
        %3491 = vmatprep.subr.bf16.mxu0 0
        %3492 = vmatpush1.bf16.msra.mxu0 %v3330
        %3493 = vmatprep.subr.bf16.mxu0 0
        %3494 = vmatpush1.bf16.msra.mxu0 %v3329
        %3495 = vmatprep.subr.bf16.mxu0 0
        %3496 = vmatpush2.bf16.msra.mxu0 0
        %3497 = vmatprep.subr.bf16.mxu0 0
        %3498 = vmatpush2.bf16.msra.mxu0 0
        %3499 = vmatprep.subr.bf16.mxu0 0
        %3500 = vmatpush2.bf16.msra.mxu0 0
        %3501 = vmatprep.subr.bf16.mxu0 0
        %3502 = vmatpush2.bf16.msra.mxu0 0
        %3503 = vmatprep.subr.bf16.mxu0 0
        %3504 = vmatpush2.bf16.msra.mxu0 0
        %3505 = vmatprep.subr.bf16.mxu0 0
        %3506 = vmatpush2.bf16.msra.mxu0 0
        %3507 = vmatprep.subr.bf16.mxu0 0
        %3508 = vmatpush2.bf16.msra.mxu0 0
        %3509 = vmatprep.subr.bf16.mxu0 0
        %3510 = vmatpush2.bf16.msra.mxu0 0
        %3511 = vmatprep.mubr.bf16.mxu0 0
        %3512 = vmatmul.mubr.bf16.gmra.mxu0 %v3477
        %v3513 = vpop.f32.mrf.mxu0
        %v3514 = vadd.f32 0.0, %v3513
        %v3515 = vpop.f32.mrf.mxu0
        %v3516 = vpop.f32.mrf.mxu0
        %v3517 = vadd.f32 0.0, %v3516
        %v3518 = vpop.f32.mrf.mxu0
        %3519 = vdwg.mxu0
        %v3520 = vmul.f32 %v3514, 0.1
        %v3521 = vmul.f32 %v3517, 0.1
        %v3522 = vsub.f32 %v3381, %v3520
        %v3523 = vsub.f32 %v3382, %v3521
        %v3524 = vsub.f32 %v3522, 0.01
        %v3525 = vsub.f32 %v3523, 0.01
        %v3526 = vmax.f32 %v3524, 0.0
        %v3527 = vmax.f32 %v3525, 0.0
        %v3528 = vpack.c.bf16 %v3527, %v3526
        %v3545 = vunpack.c.l.b16 %v1027
        %v3546 = vunpack.c.l.b16 %v1028
        %v3547 = vunpack.c.l.b16 %v1029
        %v3548 = vunpack.c.l.b16 %v1030
        %v3549 = vunpack.c.l.b16 %v1031
        %v3550 = vunpack.c.l.b16 %v1032
        %v3551 = vunpack.c.l.b16 %v1033
        %v3552 = vunpack.c.l.b16 %v1034
        %v3553 = vunpack.c.l.b16 %v1035
        %v3554 = vunpack.c.l.b16 %v1036
        %v3555 = vunpack.c.l.b16 %v1037
        %v3556 = vunpack.c.l.b16 %v1038
        %v3557 = vunpack.c.l.b16 %v1039
        %v3558 = vunpack.c.l.b16 %v1040
        %v3559 = vunpack.c.l.b16 %v1041
        %v3560 = vunpack.c.l.b16 %v1042
        %v3561 = vpack.c.b16 %v3546, %v3545
        %v3562 = vpack.c.b16 %v3548, %v3547
        %v3563 = vpack.c.b16 %v3550, %v3549
        %v3564 = vpack.c.b16 %v3552, %v3551
        %v3565 = vpack.c.b16 %v3554, %v3553
        %v3566 = vpack.c.b16 %v3556, %v3555
        %v3567 = vpack.c.b16 %v3558, %v3557
        %v3568 = vpack.c.b16 %v3560, %v3559
        %3577 = vmatprep.subr.bf16.mxu0 0
        %3578 = vmatpush1.bf16.msra.mxu0 %v3568
        %3579 = vmatprep.subr.bf16.mxu0 0
        %3580 = vmatpush1.bf16.msra.mxu0 %v3567
        %3581 = vmatprep.subr.bf16.mxu0 0
        %3582 = vmatpush1.bf16.msra.mxu0 %v3566
        %3583 = vmatprep.subr.bf16.mxu0 0
        %3584 = vmatpush1.bf16.msra.mxu0 %v3565
        %3585 = vmatprep.subr.bf16.mxu0 0
        %3586 = vmatpush1.bf16.msra.mxu0 %v3564
        %3587 = vmatprep.subr.bf16.mxu0 0
        %3588 = vmatpush1.bf16.msra.mxu0 %v3563
        %3589 = vmatprep.subr.bf16.mxu0 0
        %3590 = vmatpush1.bf16.msra.mxu0 %v3562
        %3591 = vmatprep.subr.bf16.mxu0 0
        %3592 = vmatpush1.bf16.msra.mxu0 %v3561
        %3593 = vmatprep.subr.bf16.mxu0 0
        %3594 = vmatpush2.bf16.msra.mxu0 0
        %3595 = vmatprep.subr.bf16.mxu0 0
        %3596 = vmatpush2.bf16.msra.mxu0 0
        %3597 = vmatprep.subr.bf16.mxu0 0
        %3598 = vmatpush2.bf16.msra.mxu0 0
        %3599 = vmatprep.subr.bf16.mxu0 0
        %3600 = vmatpush2.bf16.msra.mxu0 0
        %3601 = vmatprep.subr.bf16.mxu0 0
        %3602 = vmatpush2.bf16.msra.mxu0 0
        %3603 = vmatprep.subr.bf16.mxu0 0
        %3604 = vmatpush2.bf16.msra.mxu0 0
        %3605 = vmatprep.subr.bf16.mxu0 0
        %3606 = vmatpush2.bf16.msra.mxu0 0
        %3607 = vmatprep.subr.bf16.mxu0 0
        %3608 = vmatpush2.bf16.msra.mxu0 0
        %3609 = vmatprep.mubr.bf16.mxu0 0
        %3610 = vmatmul.mubr.bf16.gmra.mxu0 %v3528
        %v3611 = vpop.f32.mrf.mxu0
        %v3612 = vadd.f32 0.0, %v3611
        %v3613 = vpop.f32.mrf.mxu0
        %v3614 = vpop.f32.mrf.mxu0
        %v3615 = vadd.f32 0.0, %v3614
        %v3616 = vpop.f32.mrf.mxu0
        %3617 = vdwg.mxu0
        %v3618 = vadd.f32 %v3276, %v3612
        %v3619 = vadd.f32 %v3277, %v3615
        %3620 = vst.msk [vmem:[#allocation2] sm:$0xff] %vm1043, %v3618
        %3621 = vst.msk [vmem:[#allocation2 + $0x8] sm:$0x3] %vm1047, %v3619
        %p3622 = scmp.eq.s32.totalorder %s27, 1
        // Predicated region
        $region85: #{vision_transformer_forward.1} parent=79 // pred_check
          %p3623 = pneg %p3622
        $region86: #{vision_transformer_forward.1} parent=79 // pred_check_branch
          %3625 = sbr.rel (%p3623) target = $region88
        $region87: #{vision_transformer_forward.1} parent=79 // pred_region
          %v3627 = vcombine.high %v3618, %v3618
          %v3629 = vunpack.c.l.s4 1966171168
          %v3630 = vunpack.c.0.s8 %v3629
          %v3631 = vlaneseq
          %v3632 = vshrl.u32 %v3631, 7
          %v3633 = vsub.s32 %v3630, %v3632
          %v3634 = vrot.slane %v3618, %v3633
          %v3636 = vunpack.c.l.s4 1966171168
          %v3637 = vunpack.c.0.s8 %v3636
          %v3638 = vlaneseq
          %v3639 = vshrl.u32 %v3638, 7
          %v3640 = vsub.s32 %v3637, %v3639
          %v3641 = vrot.slane %v3627, %v3640
          %v3642 = vcombine.high %v3641, %v3641
          %v3644 = vunpack.c.l.s4 1966171168
          %v3645 = vunpack.c.0.s8 %v3644
          %v3646 = vlaneseq
          %v3647 = vshrl.u32 %v3646, 7
          %v3648 = vsub.s32 %v3645, %v3647
          %v3649 = vrot.slane %v3634, %v3648
          %v3651 = vunpack.c.l.s4 1966171168
          %v3652 = vunpack.c.0.s8 %v3651
          %v3653 = vlaneseq
          %v3654 = vshrl.u32 %v3653, 7
          %v3655 = vsub.s32 %v3652, %v3654
          %v3656 = vrot.slane %v3642, %v3655
          %v3659 = vld [vmem:[%s12] sm:$0x1]
          %v3660 = vld [vmem:[%s13] sm:$0x1]
          %v3661 = vcombine.low %v3649, %v3656
          %v3663 = vunpack.c.l.s4 1966171168
          %v3664 = vunpack.c.0.s8 %v3663
          %v3665 = vlaneseq
          %v3666 = vshrl.u32 %v3665, 7
          %v3667 = vsub.s32 %v3664, %v3666
          %v3668 = vrot.slane %v3661, %v3667
          %v3670 = vunpack.c.l.s4 1966171168
          %v3671 = vunpack.c.0.s8 %v3670
          %v3672 = vlaneseq
          %v3673 = vshrl.u32 %v3672, 7
          %v3674 = vsub.s32 %v3671, %v3673
          %v3675 = vrot.slane %v3668, %v3674
          %v3677 = vsel %vm1047, %v3675, 0.0
          %3678 = vadd.xlane.f32.xlu0 %v3677
          %v3679 = vpop.xlane.xlu0 %3678
          %v3680 = vmul.f32 %v3679, %v1051
          %v3682 = vlaneseq
          %v3683 = vshrl.u32 %v3682, 7
          %v3684 = vsub.s32 0, %v3683
          %v3685 = vrot.slane %v3680, %v3684
          %v3686 = vlaneseq
          %v3687 = vshrl.u32 %v3686, 7
          %v3688 = vsub.s32 1, %v3687
          %v3689 = vrot.slane %v3680, %v3688
          %v3692 = vsub.f32 %v3649, %v3685
          %v3693 = vsub.f32 %v3656, %v3689
          %v3694 = vmul.f32 %v3692, %v3692
          %v3695 = vmul.f32 %v3693, %v3693
          %v3698 = vcombine.low %v3694, %v3695
          %v3700 = vunpack.c.l.s4 1966171168
          %v3701 = vunpack.c.0.s8 %v3700
          %v3702 = vlaneseq
          %v3703 = vshrl.u32 %v3702, 7
          %v3704 = vsub.s32 %v3701, %v3703
          %v3705 = vrot.slane %v3698, %v3704
          %v3707 = vunpack.c.l.s4 1966171168
          %v3708 = vunpack.c.0.s8 %v3707
          %v3709 = vlaneseq
          %v3710 = vshrl.u32 %v3709, 7
          %v3711 = vsub.s32 %v3708, %v3710
          %v3712 = vrot.slane %v3705, %v3711
          %v3714 = vsel %vm1047, %v3712, 0.0
          %3715 = vadd.xlane.f32.xlu0 %v3714
          %v3716 = vpop.xlane.xlu0 %3715
          %v3717 = vmul.f32 %v3716, %v1051
          %v3718 = vadd.f32 %v3717, 1e-06
          %v3719 = vrsqrt.pop %v3718
          %v3721 = vlaneseq
          %v3722 = vshrl.u32 %v3721, 7
          %v3723 = vsub.s32 0, %v3722
          %v3724 = vrot.slane %v3719, %v3723
          %v3725 = vlaneseq
          %v3726 = vshrl.u32 %v3725, 7
          %v3727 = vsub.s32 1, %v3726
          %v3728 = vrot.slane %v3719, %v3727
          %v3731 = vmul.f32 %v3692, %v3724
          %v3732 = vmul.f32 %v3693, %v3728
          %v3734 = vlaneseq
          %v3735 = vshrl.u32 %v3734, 7
          %v3736 = vsub.s32 0, %v3735
          %v3737 = vrot.slane %v3659, %v3736
          %v3739 = vunpack.c.l.s4 1966171168
          %v3740 = vunpack.c.0.s8 %v3739
          %v3741 = vlaneseq
          %v3742 = vshrl.u32 %v3741, 7
          %v3743 = vsub.s32 %v3740, %v3742
          %v3744 = vrot.slane %v3737, %v3743
          %v3745 = vcombine.high %v3744, %v3744
          %v3747 = vunpack.c.l.s4 1966171168
          %v3748 = vunpack.c.0.s8 %v3747
          %v3749 = vlaneseq
          %v3750 = vshrl.u32 %v3749, 7
          %v3751 = vsub.s32 %v3748, %v3750
          %v3752 = vrot.slane %v3744, %v3751
          %v3754 = vunpack.c.l.s4 1966171168
          %v3755 = vunpack.c.0.s8 %v3754
          %v3756 = vlaneseq
          %v3757 = vshrl.u32 %v3756, 7
          %v3758 = vsub.s32 %v3755, %v3757
          %v3759 = vrot.slane %v3745, %v3758
          %v3762 = vmul.f32 %v3731, %v3752
          %v3763 = vmul.f32 %v3732, %v3759
          %v3765 = vlaneseq
          %v3766 = vshrl.u32 %v3765, 7
          %v3767 = vsub.s32 0, %v3766
          %v3768 = vrot.slane %v3660, %v3767
          %v3770 = vunpack.c.l.s4 1966171168
          %v3771 = vunpack.c.0.s8 %v3770
          %v3772 = vlaneseq
          %v3773 = vshrl.u32 %v3772, 7
          %v3774 = vsub.s32 %v3771, %v3773
          %v3775 = vrot.slane %v3768, %v3774
          %v3776 = vcombine.high %v3775, %v3775
          %v3778 = vunpack.c.l.s4 1966171168
          %v3779 = vunpack.c.0.s8 %v3778
          %v3780 = vlaneseq
          %v3781 = vshrl.u32 %v3780, 7
          %v3782 = vsub.s32 %v3779, %v3781
          %v3783 = vrot.slane %v3775, %v3782
          %v3785 = vunpack.c.l.s4 1966171168
          %v3786 = vunpack.c.0.s8 %v3785
          %v3787 = vlaneseq
          %v3788 = vshrl.u32 %v3787, 7
          %v3789 = vsub.s32 %v3786, %v3788
          %v3790 = vrot.slane %v3776, %v3789
          %v3793 = vadd.f32 %v3762, %v3783
          %v3794 = vadd.f32 %v3763, %v3790
          %v3795 = vpack.c.bf16 %v3793, %v3793
          %v3796 = vpack.c.bf16 %v3794, %v3794
          %v3797 = vld [vmem:[%s14] sm:$0xf]
          %v3798 = vld [vmem:[%s14 + $0x4] sm:$0xf]
          %v3799 = vld [vmem:[%s14 + $0x8] sm:$0xf]
          %v3800 = vld [vmem:[%s14 + $0xc] sm:$0xf]
          %v3803 = vunpack.c.l.b16 %v3795
          %v3804 = vunpack.c.l.b16 %v3796
          %v3805 = vrot.slane %v3804, 7
          %vm3806 = vcmask 1041409
          %v3807 = vsel %vm3806, %v3805, %v3803
          %v3808 = vpack.c.b16 %v3807, %v3807
          %v3813 = vunpack.c.l.b16 %v3797
          %v3814 = vunpack.c.l.b16 %v3798
          %v3815 = vunpack.c.l.b16 %v3799
          %v3816 = vunpack.c.l.b16 %v3800
          %v3817 = vpack.c.b16 %v3814, %v3813
          %v3818 = vpack.c.b16 %v3816, %v3815
          %v3822 = vsel %vm1043, %v3808, 0
          %3824 = vmatprep.subr.bf16.mxu0 0
          %3825 = vmatpush1.bf16.msra.mxu0 0
          %3826 = vmatprep.subr.bf16.mxu0 0
          %3827 = vmatpush1.bf16.msra.mxu0 0
          %3828 = vmatprep.subr.bf16.mxu0 0
          %3829 = vmatpush1.bf16.msra.mxu0 0
          %3830 = vmatprep.subr.bf16.mxu0 0
          %3831 = vmatpush1.bf16.msra.mxu0 0
          %3832 = vmatprep.subr.bf16.mxu0 0
          %3833 = vmatpush1.bf16.msra.mxu0 0
          %3834 = vmatprep.subr.bf16.mxu0 0
          %3835 = vmatpush1.bf16.msra.mxu0 0
          %3836 = vmatprep.subr.bf16.mxu0 0
          %3837 = vmatpush1.bf16.msra.mxu0 %v3818
          %3838 = vmatprep.subr.bf16.mxu0 0
          %3839 = vmatpush1.bf16.msra.mxu0 %v3817
          %3840 = vmatprep.subr.bf16.mxu0 0
          %3841 = vmatpush2.bf16.msra.mxu0 0
          %3842 = vmatprep.subr.bf16.mxu0 0
          %3843 = vmatpush2.bf16.msra.mxu0 0
          %3844 = vmatprep.subr.bf16.mxu0 0
          %3845 = vmatpush2.bf16.msra.mxu0 0
          %3846 = vmatprep.subr.bf16.mxu0 0
          %3847 = vmatpush2.bf16.msra.mxu0 0
          %3848 = vmatprep.subr.bf16.mxu0 0
          %3849 = vmatpush2.bf16.msra.mxu0 0
          %3850 = vmatprep.subr.bf16.mxu0 0
          %3851 = vmatpush2.bf16.msra.mxu0 0
          %3852 = vmatprep.subr.bf16.mxu0 0
          %3853 = vmatpush2.bf16.msra.mxu0 0
          %3854 = vmatprep.subr.bf16.mxu0 0
          %3855 = vmatpush2.bf16.msra.mxu0 0
          %3856 = vmatprep.mubr.bf16.mxu0 0
          %3857 = vmatmul.mubr.bf16.gmra.mxu0 %v3822
          %v3858 = vpop.f32.mrf.mxu0
          %v3859 = vadd.f32 0.0, %v3858
          %v3860 = vpop.f32.mrf.mxu0
          %v3861 = vpop.f32.mrf.mxu0
          %v3862 = vpop.f32.mrf.mxu0
          %3863 = vdwg.mxu0
          %3864 = vst [vmem:[#allocation3] sm:$0x3] %v3859
        $region88: #{vision_transformer_forward.1} parent=79 // pred_fallthru
          _
        // Predicated region
        $region89: #{vision_transformer_forward.1} parent=79 // pred_check
          %p3865 = pneg %p400
        $region90: #{vision_transformer_forward.1} parent=79 // pred_check_branch
          %3867 = sbr.rel (%p3865) target = $region92
        $region91: #{vision_transformer_forward.1} parent=79 // pred_region
          %s3869 = ssub.s32 32, 32
          %3870 = vsyncadd [#allocation4], %s3869
          %s3872 = sshll.u32 [#allocation3], 4
          %s3873 = int_to_ptr.vmem [resolvable:$true] %s3872
          %3875 = dma.vmem_to_hbm [thread:$0]  %s3873, 32, %s15, [#allocation4]
        $region92: #{vision_transformer_forward.1} parent=79 // pred_fallthru
          _
        // Predicated region
        $region93: #{vision_transformer_forward.1} parent=79 // pred_check
          %p3876 = pneg %p400
        $region94: #{vision_transformer_forward.1} parent=79 // pred_check_branch
          %3878 = sbr.rel (%p3876) target = $region96
        $region95: #{vision_transformer_forward.1} parent=79 // pred_region
          %3879 = dma.done [#allocation4], 32
        $region96: #{vision_transformer_forward.1} parent=79 // pred_fallthru
          _
      $region80: #{vision_transformer_forward.1} parent=5 // pred_fallthru
        _
      %p3880 = scmp.le.s32.totalorder 2, %s22
      // Predicated region
      $region97: #{vision_transformer_forward.1} parent=5 // pred_check
        %p3881 = pneg %p3880
      $region98: #{vision_transformer_forward.1} parent=5 // pred_check_branch
        %3883 = sbr.rel (%p3881) target = $region100
      $region99: #{vision_transformer_forward.1} parent=5 // pred_region
        %s3884 = ssub.s32 %s22, 2
      $region100: #{vision_transformer_forward.1} parent=5 // pred_fallthru
        _
    $region6: #{vision_transformer_forward.1} parent=1 // loop_footer
      %s26 = sadd.s32 1, %s22
    $region7: #{vision_transformer_forward.1} parent=1 // loop_footer_branch
      %21 = sbr.rel target = $region3
    $region8: #{vision_transformer_forward.1} parent=1 // loop_exit
      _
    %3885 = vsyncpa [#allocation4], 1
    %s3886 = scalar_lea.sflag [#allocation4], 1
    %3887 = vsyncpa %s3886, 1

</llo_original>
